<compile_context>
chip_gen: v6e
topology: v6e:2x2x1
jax: 0.10.0
libtpu: 0.0.40
codegen_flags: <defaults>
</compile_context>

<pallas_src>
import functools
import math

import numpy as np

import jax
import jax.numpy as jnp
from jax.experimental import pallas as pl
from jax.experimental.pallas import tpu as pltpu


# ---------------------------------------------------------------------------
# Host-side helpers
# ---------------------------------------------------------------------------

def _dft_matrices(n: int, n_keep: int):
    """(n, n_keep) real / imag parts of exp(-2i*pi*p*k/n) (p=row, k=col)."""
    pos = np.arange(n).reshape(n, 1)
    freq = np.arange(n_keep).reshape(1, n_keep)
    idx = (pos * freq) % n
    ang = 2.0 * np.pi * idx / n
    re = np.cos(ang)
    im = -np.sin(ang)
    # Exact zeros where the angle is a multiple of pi, so the Hermitian bins
    # (DC / Nyquist rows & columns) come out with exactly-zero imaginary
    # parts, as a true rFFT does.
    im = np.where((2 * idx) % n == 0, 0.0, im)
    return jnp.asarray(re, jnp.float32), jnp.asarray(im, jnp.float32)


# ---------------------------------------------------------------------------
# In-kernel atan2: VPU-only primitives, Cephes atanf polynomial (~1e-7 abs err)
# ---------------------------------------------------------------------------

_P0 = 8.05374449538e-2
_P1 = -1.38776856032e-1
_P2 = 1.99777106478e-1
_P3 = -3.33329491539e-1
_TAN_PI_8 = 0.41421356237309503


def _atan_unit(a):
    """arctan(a) for a in [0, 1]."""
    big = a > _TAN_PI_8
    r = jnp.where(big, (a - 1.0) / (a + 1.0), a)      # |r| <= tan(pi/8)
    s = r * r
    p = ((((_P0 * s + _P1) * s + _P2) * s + _P3) * s) * r + r
    return jnp.where(big, p + (math.pi / 4.0), p)


def _atan2(y, x):
    """Element-wise atan2(y, x) with torch.angle conventions."""
    ay = jnp.abs(y)
    ax = jnp.abs(x)
    mn = jnp.minimum(ax, ay)
    mx = jnp.maximum(ax, ay)
    a = mn / jnp.where(mx > 0.0, mx, 1.0)             # 0 when x == y == 0
    r = _atan_unit(a)
    r = jnp.where(ay > ax, (math.pi / 2.0) - r, r)
    r = jnp.where(x < 0.0, math.pi - r, r)
    return jnp.where(y < 0.0, -r, r)


# ---------------------------------------------------------------------------
# Kernel
# ---------------------------------------------------------------------------

def _frequency_loss_kernel(x_ref, t_ref, er_ref, ei_ref, hr_ref, hi_ref,
                           o_ref, *, use_l1: bool):
    block_nc, H, _W = x_ref.shape
    Wf = er_ref.shape[1]

    er = er_ref[...]        # (W, Wf)  row-rFFT twiddles (real / imag)
    ei = ei_ref[...]
    hr = hr_ref[...]        # (H, H)   column-FFT twiddles (real / imag)
    hi = hi_ref[...]

    # Vector partial accumulator; a single cross-lane reduce per grid step.
    part = jnp.zeros((H, Wf), jnp.float32)

    for b in range(block_nc):              # static unroll over images in block
        x = x_ref[b]                       # (H, W)
        t = t_ref[b]

        # rFFT along W (real input):  Y = x @ E_W
        x_r = jnp.dot(x, er, preferred_element_type=jnp.float32)
        x_i = jnp.dot(x, ei, preferred_element_type=jnp.float32)
        t_r = jnp.dot(t, er, preferred_element_type=jnp.float32)
        t_i = jnp.dot(t, ei, preferred_element_type=jnp.float32)

        # Full FFT along H:  Z = E_H @ Y  (complex product in real arithmetic)
        zxr = (jnp.dot(hr, x_r, preferred_element_type=jnp.float32)
               - jnp.dot(hi, x_i, preferred_element_type=jnp.float32))
        zxi = (jnp.dot(hr, x_i, preferred_element_type=jnp.float32)
               + jnp.dot(hi, x_r, preferred_element_type=jnp.float32))
        ztr = (jnp.dot(hr, t_r, preferred_element_type=jnp.float32)
               - jnp.dot(hi, t_i, preferred_element_type=jnp.float32))
        zti = (jnp.dot(hr, t_i, preferred_element_type=jnp.float32)
               + jnp.dot(hi, t_r, preferred_element_type=jnp.float32))

        amp_x = jnp.sqrt(zxr * zxr + zxi * zxi)
        amp_t = jnp.sqrt(ztr * ztr + zti * zti)
        pha_x = _atan2(zxi, zxr)
        pha_t = _atan2(zti, ztr)

        d_amp = amp_x - amp_t
        d_pha = pha_x - pha_t
        if use_l1:
            part = part + jnp.abs(d_amp) + jnp.abs(d_pha)
        else:                               # 'mse'
            part = part + d_amp * d_amp + d_pha * d_pha

    # Lane-dense (unmasked) store of this step's partial sum; only element
    # [0, 0, 0] is consumed outside the kernel.
    o_ref[...] = jnp.full(o_ref.shape, jnp.sum(part), dtype=jnp.float32)


# ---------------------------------------------------------------------------
# Wrapper
# ---------------------------------------------------------------------------

def frequency_loss(input, target, *, loss_type: str = "l1", block_nc=None):
    """Pallas TPU implementation of SGNet's FrequencyLoss.forward."""
    if loss_type not in ("l1", "mse"):
        raise NotImplementedError(f"loss type [{loss_type}] is not found")
    assert input.shape == target.shape and input.ndim >= 2

    *lead, H, W = input.shape
    nc = int(np.prod(lead)) if lead else 1
    Wf = W // 2 + 1

    x = jnp.asarray(input, jnp.float32).reshape(nc, H, W)
    t = jnp.asarray(target, jnp.float32).reshape(nc, H, W)

    er, ei = _dft_matrices(W, Wf)       # (W, Wf)
    hr, hi = _dft_matrices(H, H)        # (H, H)

    # Images per grid step: big enough to amortize ~0.35us/step overhead,
    # small enough that 2 inputs x 2 pipeline buffers stay well under the
    # 32 MiB scoped-VMEM default (safe for v7x's smaller VMEM as well).
    if block_nc is None:
        block_nc = max(1, min(nc, 8, (2 * 1024 * 1024) // (H * W * 4)))
    block_nc = int(max(1, min(block_nc, nc)))

    grid = (nc + block_nc - 1) // block_nc
    nc_pad = grid * block_nc
    if nc_pad != nc:
        # Zero images contribute exactly zero to both loss terms
        # (|0-0| and |atan2(0,0)-atan2(0,0)|), so zero padding is harmless.
        zeros = jnp.zeros((nc_pad - nc, H, W), jnp.float32)
        x = jnp.concatenate([x, zeros], axis=0)
        t = jnp.concatenate([t, zeros], axis=0)

    kernel = functools.partial(_frequency_loss_kernel,
                               use_l1=(loss_type == "l1"))

    flops_per_img = 2 * (4 * H * W * Wf + 8 * H * H * Wf)   # input and target
    cost = pl.CostEstimate(
        flops=nc_pad * flops_per_img,
        transcendentals=4 * nc_pad * H * Wf,
        bytes_accessed=2 * nc_pad * H * W * 4 + grid * 8 * 128 * 4,
    )

    partials = pl.pallas_call(
        kernel,
        out_shape=jax.ShapeDtypeStruct((grid, 8, 128), jnp.float32),
        grid_spec=pltpu.PrefetchScalarGridSpec(
            num_scalar_prefetch=0,
            grid=(grid,),
            in_specs=[
                pl.BlockSpec((block_nc, H, W), lambda g: (g, 0, 0)),   # input
                pl.BlockSpec((block_nc, H, W), lambda g: (g, 0, 0)),   # target
                pl.BlockSpec((W, Wf), lambda g: (0, 0)),               # E_W re
                pl.BlockSpec((W, Wf), lambda g: (0, 0)),               # E_W im
                pl.BlockSpec((H, H), lambda g: (0, 0)),                # E_H re
                pl.BlockSpec((H, H), lambda g: (0, 0)),                # E_H im
            ],
            out_specs=pl.BlockSpec((1, 8, 128), lambda g: (g, 0, 0)),
        ),
        compiler_params=pltpu.CompilerParams(
            dimension_semantics=("parallel",)),
        cost_estimate=cost,
    )(x, t, er, ei, hr, hi)

    total = jnp.sum(partials[:, 0, 0])
    # 0.5 * mean(amp term) + 0.5 * mean(pha term); both means share the count.
    return 0.5 * total / float(nc * H * Wf)


# ---------------------------------------------------------------------------
# Pure-JAX reference and self-test
# ---------------------------------------------------------------------------

def _reference(input, target, loss_type="l1"):
    fi = jnp.fft.rfft2(input.astype(jnp.float32))
    ft = jnp.fft.rfft2(target.astype(jnp.float32))
    if loss_type == "l1":
        crit = lambda a, b: jnp.mean(jnp.abs(a - b))
    else:
        crit = lambda a, b: jnp.mean((a - b) ** 2)
    amp = crit(jnp.abs(fi), jnp.abs(ft))
    pha = crit(jnp.angle(fi), jnp.angle(ft))
    return 0.5 * amp + 0.5 * pha


if __name__ == "__main__":
    key = jax.random.PRNGKey(0)
    k1, k2 = jax.random.split(key)
    N, C, H, W = 2, 3, 16, 16
    x = jax.random.normal(k1, (N, C, H, W), dtype=jnp.float32)
    t = jax.random.normal(k2, (N, C, H, W), dtype=jnp.float32)

    # Push the four purely-real rfft2 bins (DC / Nyquist combinations) firmly
    # onto the positive real axis for both tensors.  angle() has an inherent
    # +pi / -pi branch ambiguity on the negative real axis where any FFT
    # implementation difference shows up as a spurious 2*pi jump; this keeps
    # the comparison against jnp.fft well-conditioned without changing what
    # the kernel computes.
    bump = 2.0 * ((jnp.arange(H)[:, None] % 2 == 0)
                  & (jnp.arange(W)[None, :] % 2 == 0)).astype(jnp.float32)
    x = x + bump
    t = t + bump

    # block_nc=4 -> N*C=6 is zero-padded to 8 and the grid has 2 parallel steps.
    loss = frequency_loss(x, t, loss_type="l1", block_nc=4)
    loss = jax.block_until_ready(loss)

    ref = _reference(x, t, "l1")
    # Tolerance accounts for MXU f32 matmul rounding and the polynomial atan2
    # versus XLA's radix FFT; structural bugs would be orders of magnitude off.
    assert jnp.allclose(loss, ref, rtol=2e-2, atol=2e-2), (loss, ref)
    print("KERNEL_OK")
</pallas_src>

<mosaic_0001>
module attributes {stable_mosaic.version = 11 : i64} {
  func.func @_frequency_loss_kernel(%arg0: i32, %arg1: memref<4x16x16xf32, #tpu.memory_space<vmem>>, %arg2: memref<4x16x16xf32, #tpu.memory_space<vmem>>, %arg3: memref<16x9xf32, #tpu.memory_space<vmem>>, %arg4: memref<16x9xf32, #tpu.memory_space<vmem>>, %arg5: memref<16x16xf32, #tpu.memory_space<vmem>>, %arg6: memref<16x16xf32, #tpu.memory_space<vmem>>, %arg7: memref<1x8x128xf32, #tpu.memory_space<vmem>>) attributes {dimension_semantics = [#tpu.dimension_semantics<parallel>], iteration_bounds = array<i64: 2>, scalar_prefetch = 0 : i64, scratch_operands = 0 : i64, tpu.core_type = #tpu.core_type<tc>, window_params = [{transform_indices = @transform_0, window_bounds = array<i64: 4, 16, 16>}, {transform_indices = @transform_1, window_bounds = array<i64: 4, 16, 16>}, {pipeline_mode = #tpu.pipeline_mode<synchronous>, transform_indices = @transform_2, window_bounds = array<i64: 16, 9>}, {pipeline_mode = #tpu.pipeline_mode<synchronous>, transform_indices = @transform_3, window_bounds = array<i64: 16, 9>}, {pipeline_mode = #tpu.pipeline_mode<synchronous>, transform_indices = @transform_4, window_bounds = array<i64: 16, 16>}, {pipeline_mode = #tpu.pipeline_mode<synchronous>, transform_indices = @transform_5, window_bounds = array<i64: 16, 16>}, {transform_indices = @transform_6, window_bounds = array<i64: 1, 8, 128>}]} {
    %c0 = arith.constant 0 : index
    %c0_0 = arith.constant 0 : index
    %0 = vector.load %arg3[%c0, %c0_0] : memref<16x9xf32, #tpu.memory_space<vmem>>, vector<16x9xf32>
    %c0_1 = arith.constant 0 : index
    %c0_2 = arith.constant 0 : index
    %1 = vector.load %arg4[%c0_1, %c0_2] : memref<16x9xf32, #tpu.memory_space<vmem>>, vector<16x9xf32>
    %c0_3 = arith.constant 0 : index
    %c0_4 = arith.constant 0 : index
    %2 = vector.load %arg5[%c0_3, %c0_4] : memref<16x16xf32, #tpu.memory_space<vmem>>, vector<16x16xf32>
    %c0_5 = arith.constant 0 : index
    %c0_6 = arith.constant 0 : index
    %3 = vector.load %arg6[%c0_5, %c0_6] : memref<16x16xf32, #tpu.memory_space<vmem>>, vector<16x16xf32>
    %cst = arith.constant 0.000000e+00 : f32
    %4 = vector.broadcast %cst : f32 to vector<16x9xf32>
    %c0_7 = arith.constant 0 : index
    %c0_8 = arith.constant 0 : index
    %c0_9 = arith.constant 0 : index
    %5 = vector.load %arg1[%c0_7, %c0_8, %c0_9] : memref<4x16x16xf32, #tpu.memory_space<vmem>>, vector<1x16x16xf32>
    %6 = vector.shape_cast %5 : vector<1x16x16xf32> to vector<16x16xf32>
    %c0_10 = arith.constant 0 : index
    %c0_11 = arith.constant 0 : index
    %c0_12 = arith.constant 0 : index
    %7 = vector.load %arg2[%c0_10, %c0_11, %c0_12] : memref<4x16x16xf32, #tpu.memory_space<vmem>>, vector<1x16x16xf32>
    %8 = vector.shape_cast %7 : vector<1x16x16xf32> to vector<16x16xf32>
    %cst_13 = arith.constant dense<0.000000e+00> : vector<16x9xf32>
    %9 = tpu.matmul %6, %0, %cst_13 {dimension_numbers = #tpu.dot_dimension_numbers<[1], [0], [0], [1], [0, 0, 1, 1], [], []>} : vector<16x16xf32>, vector<16x9xf32>, vector<16x9xf32> -> vector<16x9xf32>
    %cst_14 = arith.constant dense<0.000000e+00> : vector<16x9xf32>
    %10 = tpu.matmul %6, %1, %cst_14 {dimension_numbers = #tpu.dot_dimension_numbers<[1], [0], [0], [1], [0, 0, 1, 1], [], []>} : vector<16x16xf32>, vector<16x9xf32>, vector<16x9xf32> -> vector<16x9xf32>
    %cst_15 = arith.constant dense<0.000000e+00> : vector<16x9xf32>
    %11 = tpu.matmul %8, %0, %cst_15 {dimension_numbers = #tpu.dot_dimension_numbers<[1], [0], [0], [1], [0, 0, 1, 1], [], []>} : vector<16x16xf32>, vector<16x9xf32>, vector<16x9xf32> -> vector<16x9xf32>
    %cst_16 = arith.constant dense<0.000000e+00> : vector<16x9xf32>
    %12 = tpu.matmul %8, %1, %cst_16 {dimension_numbers = #tpu.dot_dimension_numbers<[1], [0], [0], [1], [0, 0, 1, 1], [], []>} : vector<16x16xf32>, vector<16x9xf32>, vector<16x9xf32> -> vector<16x9xf32>
    %cst_17 = arith.constant dense<0.000000e+00> : vector<16x9xf32>
    %13 = tpu.matmul %2, %9, %cst_17 {dimension_numbers = #tpu.dot_dimension_numbers<[1], [0], [0], [1], [0, 0, 1, 1], [], []>} : vector<16x16xf32>, vector<16x9xf32>, vector<16x9xf32> -> vector<16x9xf32>
    %cst_18 = arith.constant dense<0.000000e+00> : vector<16x9xf32>
    %14 = tpu.matmul %3, %10, %cst_18 {dimension_numbers = #tpu.dot_dimension_numbers<[1], [0], [0], [1], [0, 0, 1, 1], [], []>} : vector<16x16xf32>, vector<16x9xf32>, vector<16x9xf32> -> vector<16x9xf32>
    %15 = arith.subf %13, %14 : vector<16x9xf32>
    %cst_19 = arith.constant dense<0.000000e+00> : vector<16x9xf32>
    %16 = tpu.matmul %2, %10, %cst_19 {dimension_numbers = #tpu.dot_dimension_numbers<[1], [0], [0], [1], [0, 0, 1, 1], [], []>} : vector<16x16xf32>, vector<16x9xf32>, vector<16x9xf32> -> vector<16x9xf32>
    %cst_20 = arith.constant dense<0.000000e+00> : vector<16x9xf32>
    %17 = tpu.matmul %3, %9, %cst_20 {dimension_numbers = #tpu.dot_dimension_numbers<[1], [0], [0], [1], [0, 0, 1, 1], [], []>} : vector<16x16xf32>, vector<16x9xf32>, vector<16x9xf32> -> vector<16x9xf32>
    %18 = arith.addf %16, %17 : vector<16x9xf32>
    %cst_21 = arith.constant dense<0.000000e+00> : vector<16x9xf32>
    %19 = tpu.matmul %2, %11, %cst_21 {dimension_numbers = #tpu.dot_dimension_numbers<[1], [0], [0], [1], [0, 0, 1, 1], [], []>} : vector<16x16xf32>, vector<16x9xf32>, vector<16x9xf32> -> vector<16x9xf32>
    %cst_22 = arith.constant dense<0.000000e+00> : vector<16x9xf32>
    %20 = tpu.matmul %3, %12, %cst_22 {dimension_numbers = #tpu.dot_dimension_numbers<[1], [0], [0], [1], [0, 0, 1, 1], [], []>} : vector<16x16xf32>, vector<16x9xf32>, vector<16x9xf32> -> vector<16x9xf32>
    %21 = arith.subf %19, %20 : vector<16x9xf32>
    %cst_23 = arith.constant dense<0.000000e+00> : vector<16x9xf32>
    %22 = tpu.matmul %2, %12, %cst_23 {dimension_numbers = #tpu.dot_dimension_numbers<[1], [0], [0], [1], [0, 0, 1, 1], [], []>} : vector<16x16xf32>, vector<16x9xf32>, vector<16x9xf32> -> vector<16x9xf32>
    %cst_24 = arith.constant dense<0.000000e+00> : vector<16x9xf32>
    %23 = tpu.matmul %3, %11, %cst_24 {dimension_numbers = #tpu.dot_dimension_numbers<[1], [0], [0], [1], [0, 0, 1, 1], [], []>} : vector<16x16xf32>, vector<16x9xf32>, vector<16x9xf32> -> vector<16x9xf32>
    %24 = arith.addf %22, %23 : vector<16x9xf32>
    %25 = arith.mulf %15, %15 : vector<16x9xf32>
    %26 = arith.mulf %18, %18 : vector<16x9xf32>
    %27 = arith.addf %25, %26 : vector<16x9xf32>
    %28 = math.sqrt %27 : vector<16x9xf32>
    %29 = arith.mulf %21, %21 : vector<16x9xf32>
    %30 = arith.mulf %24, %24 : vector<16x9xf32>
    %31 = arith.addf %29, %30 : vector<16x9xf32>
    %32 = math.sqrt %31 : vector<16x9xf32>
    %33 = math.absf %18 : vector<16x9xf32>
    %34 = math.absf %15 : vector<16x9xf32>
    %35 = arith.minimumf %34, %33 : vector<16x9xf32>
    %36 = arith.maximumf %34, %33 : vector<16x9xf32>
    %cst_25 = arith.constant 0.000000e+00 : f32
    %37 = vector.broadcast %cst_25 : f32 to vector<16x9xf32>
    %38 = arith.cmpf ogt, %36, %37 : vector<16x9xf32>
    %cst_26 = arith.constant 1.000000e+00 : f32
    %39 = vector.broadcast %cst_26 : f32 to vector<16x9xf32>
    %40 = arith.select %38, %36, %39 : vector<16x9xi1>, vector<16x9xf32>
    %41 = arith.divf %35, %40 : vector<16x9xf32>
    %cst_27 = arith.constant 0.414213568 : f32
    %42 = vector.broadcast %cst_27 : f32 to vector<16x9xf32>
    %43 = arith.cmpf ogt, %41, %42 : vector<16x9xf32>
    %cst_28 = arith.constant 1.000000e+00 : f32
    %44 = vector.broadcast %cst_28 : f32 to vector<16x9xf32>
    %45 = arith.subf %41, %44 : vector<16x9xf32>
    %cst_29 = arith.constant 1.000000e+00 : f32
    %46 = vector.broadcast %cst_29 : f32 to vector<16x9xf32>
    %47 = arith.addf %41, %46 : vector<16x9xf32>
    %48 = arith.divf %45, %47 : vector<16x9xf32>
    %49 = arith.select %43, %48, %41 : vector<16x9xi1>, vector<16x9xf32>
    %50 = arith.mulf %49, %49 : vector<16x9xf32>
    %cst_30 = arith.constant 0.0805374458 : f32
    %51 = vector.broadcast %cst_30 : f32 to vector<16x9xf32>
    %52 = arith.mulf %51, %50 : vector<16x9xf32>
    %cst_31 = arith.constant -0.138776854 : f32
    %53 = vector.broadcast %cst_31 : f32 to vector<16x9xf32>
    %54 = arith.addf %52, %53 : vector<16x9xf32>
    %55 = arith.mulf %54, %50 : vector<16x9xf32>
    %cst_32 = arith.constant 0.199777111 : f32
    %56 = vector.broadcast %cst_32 : f32 to vector<16x9xf32>
    %57 = arith.addf %55, %56 : vector<16x9xf32>
    %58 = arith.mulf %57, %50 : vector<16x9xf32>
    %cst_33 = arith.constant -0.333329499 : f32
    %59 = vector.broadcast %cst_33 : f32 to vector<16x9xf32>
    %60 = arith.addf %58, %59 : vector<16x9xf32>
    %61 = arith.mulf %60, %50 : vector<16x9xf32>
    %62 = arith.mulf %61, %49 : vector<16x9xf32>
    %63 = arith.addf %62, %49 : vector<16x9xf32>
    %cst_34 = arith.constant 0.785398185 : f32
    %64 = vector.broadcast %cst_34 : f32 to vector<16x9xf32>
    %65 = arith.addf %63, %64 : vector<16x9xf32>
    %66 = arith.select %43, %65, %63 : vector<16x9xi1>, vector<16x9xf32>
    %67 = arith.cmpf ogt, %33, %34 : vector<16x9xf32>
    %cst_35 = arith.constant 1.57079637 : f32
    %68 = vector.broadcast %cst_35 : f32 to vector<16x9xf32>
    %69 = arith.subf %68, %66 : vector<16x9xf32>
    %70 = arith.select %67, %69, %66 : vector<16x9xi1>, vector<16x9xf32>
    %cst_36 = arith.constant 0.000000e+00 : f32
    %71 = vector.broadcast %cst_36 : f32 to vector<16x9xf32>
    %72 = arith.cmpf olt, %15, %71 : vector<16x9xf32>
    %cst_37 = arith.constant 3.14159274 : f32
    %73 = vector.broadcast %cst_37 : f32 to vector<16x9xf32>
    %74 = arith.subf %73, %70 : vector<16x9xf32>
    %75 = arith.select %72, %74, %70 : vector<16x9xi1>, vector<16x9xf32>
    %cst_38 = arith.constant 0.000000e+00 : f32
    %76 = vector.broadcast %cst_38 : f32 to vector<16x9xf32>
    %77 = arith.cmpf olt, %18, %76 : vector<16x9xf32>
    %cst_39 = arith.constant 0.000000e+00 : f32
    %78 = vector.broadcast %cst_39 : f32 to vector<16x9xf32>
    %79 = arith.subf %78, %75 : vector<16x9xf32>
    %80 = arith.select %77, %79, %75 : vector<16x9xi1>, vector<16x9xf32>
    %81 = math.absf %24 : vector<16x9xf32>
    %82 = math.absf %21 : vector<16x9xf32>
    %83 = arith.minimumf %82, %81 : vector<16x9xf32>
    %84 = arith.maximumf %82, %81 : vector<16x9xf32>
    %cst_40 = arith.constant 0.000000e+00 : f32
    %85 = vector.broadcast %cst_40 : f32 to vector<16x9xf32>
    %86 = arith.cmpf ogt, %84, %85 : vector<16x9xf32>
    %cst_41 = arith.constant 1.000000e+00 : f32
    %87 = vector.broadcast %cst_41 : f32 to vector<16x9xf32>
    %88 = arith.select %86, %84, %87 : vector<16x9xi1>, vector<16x9xf32>
    %89 = arith.divf %83, %88 : vector<16x9xf32>
    %cst_42 = arith.constant 0.414213568 : f32
    %90 = vector.broadcast %cst_42 : f32 to vector<16x9xf32>
    %91 = arith.cmpf ogt, %89, %90 : vector<16x9xf32>
    %cst_43 = arith.constant 1.000000e+00 : f32
    %92 = vector.broadcast %cst_43 : f32 to vector<16x9xf32>
    %93 = arith.subf %89, %92 : vector<16x9xf32>
    %cst_44 = arith.constant 1.000000e+00 : f32
    %94 = vector.broadcast %cst_44 : f32 to vector<16x9xf32>
    %95 = arith.addf %89, %94 : vector<16x9xf32>
    %96 = arith.divf %93, %95 : vector<16x9xf32>
    %97 = arith.select %91, %96, %89 : vector<16x9xi1>, vector<16x9xf32>
    %98 = arith.mulf %97, %97 : vector<16x9xf32>
    %cst_45 = arith.constant 0.0805374458 : f32
    %99 = vector.broadcast %cst_45 : f32 to vector<16x9xf32>
    %100 = arith.mulf %99, %98 : vector<16x9xf32>
    %cst_46 = arith.constant -0.138776854 : f32
    %101 = vector.broadcast %cst_46 : f32 to vector<16x9xf32>
    %102 = arith.addf %100, %101 : vector<16x9xf32>
    %103 = arith.mulf %102, %98 : vector<16x9xf32>
    %cst_47 = arith.constant 0.199777111 : f32
    %104 = vector.broadcast %cst_47 : f32 to vector<16x9xf32>
    %105 = arith.addf %103, %104 : vector<16x9xf32>
    %106 = arith.mulf %105, %98 : vector<16x9xf32>
    %cst_48 = arith.constant -0.333329499 : f32
    %107 = vector.broadcast %cst_48 : f32 to vector<16x9xf32>
    %108 = arith.addf %106, %107 : vector<16x9xf32>
    %109 = arith.mulf %108, %98 : vector<16x9xf32>
    %110 = arith.mulf %109, %97 : vector<16x9xf32>
    %111 = arith.addf %110, %97 : vector<16x9xf32>
    %cst_49 = arith.constant 0.785398185 : f32
    %112 = vector.broadcast %cst_49 : f32 to vector<16x9xf32>
    %113 = arith.addf %111, %112 : vector<16x9xf32>
    %114 = arith.select %91, %113, %111 : vector<16x9xi1>, vector<16x9xf32>
    %115 = arith.cmpf ogt, %81, %82 : vector<16x9xf32>
    %cst_50 = arith.constant 1.57079637 : f32
    %116 = vector.broadcast %cst_50 : f32 to vector<16x9xf32>
    %117 = arith.subf %116, %114 : vector<16x9xf32>
    %118 = arith.select %115, %117, %114 : vector<16x9xi1>, vector<16x9xf32>
    %cst_51 = arith.constant 0.000000e+00 : f32
    %119 = vector.broadcast %cst_51 : f32 to vector<16x9xf32>
    %120 = arith.cmpf olt, %21, %119 : vector<16x9xf32>
    %cst_52 = arith.constant 3.14159274 : f32
    %121 = vector.broadcast %cst_52 : f32 to vector<16x9xf32>
    %122 = arith.subf %121, %118 : vector<16x9xf32>
    %123 = arith.select %120, %122, %118 : vector<16x9xi1>, vector<16x9xf32>
    %cst_53 = arith.constant 0.000000e+00 : f32
    %124 = vector.broadcast %cst_53 : f32 to vector<16x9xf32>
    %125 = arith.cmpf olt, %24, %124 : vector<16x9xf32>
    %cst_54 = arith.constant 0.000000e+00 : f32
    %126 = vector.broadcast %cst_54 : f32 to vector<16x9xf32>
    %127 = arith.subf %126, %123 : vector<16x9xf32>
    %128 = arith.select %125, %127, %123 : vector<16x9xi1>, vector<16x9xf32>
    %129 = arith.subf %28, %32 : vector<16x9xf32>
    %130 = arith.subf %80, %128 : vector<16x9xf32>
    %131 = math.absf %129 : vector<16x9xf32>
    %132 = arith.addf %4, %131 : vector<16x9xf32>
    %133 = math.absf %130 : vector<16x9xf32>
    %134 = arith.addf %132, %133 : vector<16x9xf32>
    %c1 = arith.constant 1 : index
    %c0_55 = arith.constant 0 : index
    %c0_56 = arith.constant 0 : index
    %135 = vector.load %arg1[%c1, %c0_55, %c0_56] : memref<4x16x16xf32, #tpu.memory_space<vmem>>, vector<1x16x16xf32>
    %136 = vector.shape_cast %135 : vector<1x16x16xf32> to vector<16x16xf32>
    %c1_57 = arith.constant 1 : index
    %c0_58 = arith.constant 0 : index
    %c0_59 = arith.constant 0 : index
    %137 = vector.load %arg2[%c1_57, %c0_58, %c0_59] : memref<4x16x16xf32, #tpu.memory_space<vmem>>, vector<1x16x16xf32>
    %138 = vector.shape_cast %137 : vector<1x16x16xf32> to vector<16x16xf32>
    %cst_60 = arith.constant dense<0.000000e+00> : vector<16x9xf32>
    %139 = tpu.matmul %136, %0, %cst_60 {dimension_numbers = #tpu.dot_dimension_numbers<[1], [0], [0], [1], [0, 0, 1, 1], [], []>} : vector<16x16xf32>, vector<16x9xf32>, vector<16x9xf32> -> vector<16x9xf32>
    %cst_61 = arith.constant dense<0.000000e+00> : vector<16x9xf32>
    %140 = tpu.matmul %136, %1, %cst_61 {dimension_numbers = #tpu.dot_dimension_numbers<[1], [0], [0], [1], [0, 0, 1, 1], [], []>} : vector<16x16xf32>, vector<16x9xf32>, vector<16x9xf32> -> vector<16x9xf32>
    %cst_62 = arith.constant dense<0.000000e+00> : vector<16x9xf32>
    %141 = tpu.matmul %138, %0, %cst_62 {dimension_numbers = #tpu.dot_dimension_numbers<[1], [0], [0], [1], [0, 0, 1, 1], [], []>} : vector<16x16xf32>, vector<16x9xf32>, vector<16x9xf32> -> vector<16x9xf32>
    %cst_63 = arith.constant dense<0.000000e+00> : vector<16x9xf32>
    %142 = tpu.matmul %138, %1, %cst_63 {dimension_numbers = #tpu.dot_dimension_numbers<[1], [0], [0], [1], [0, 0, 1, 1], [], []>} : vector<16x16xf32>, vector<16x9xf32>, vector<16x9xf32> -> vector<16x9xf32>
    %cst_64 = arith.constant dense<0.000000e+00> : vector<16x9xf32>
    %143 = tpu.matmul %2, %139, %cst_64 {dimension_numbers = #tpu.dot_dimension_numbers<[1], [0], [0], [1], [0, 0, 1, 1], [], []>} : vector<16x16xf32>, vector<16x9xf32>, vector<16x9xf32> -> vector<16x9xf32>
    %cst_65 = arith.constant dense<0.000000e+00> : vector<16x9xf32>
    %144 = tpu.matmul %3, %140, %cst_65 {dimension_numbers = #tpu.dot_dimension_numbers<[1], [0], [0], [1], [0, 0, 1, 1], [], []>} : vector<16x16xf32>, vector<16x9xf32>, vector<16x9xf32> -> vector<16x9xf32>
    %145 = arith.subf %143, %144 : vector<16x9xf32>
    %cst_66 = arith.constant dense<0.000000e+00> : vector<16x9xf32>
    %146 = tpu.matmul %2, %140, %cst_66 {dimension_numbers = #tpu.dot_dimension_numbers<[1], [0], [0], [1], [0, 0, 1, 1], [], []>} : vector<16x16xf32>, vector<16x9xf32>, vector<16x9xf32> -> vector<16x9xf32>
    %cst_67 = arith.constant dense<0.000000e+00> : vector<16x9xf32>
    %147 = tpu.matmul %3, %139, %cst_67 {dimension_numbers = #tpu.dot_dimension_numbers<[1], [0], [0], [1], [0, 0, 1, 1], [], []>} : vector<16x16xf32>, vector<16x9xf32>, vector<16x9xf32> -> vector<16x9xf32>
    %148 = arith.addf %146, %147 : vector<16x9xf32>
    %cst_68 = arith.constant dense<0.000000e+00> : vector<16x9xf32>
    %149 = tpu.matmul %2, %141, %cst_68 {dimension_numbers = #tpu.dot_dimension_numbers<[1], [0], [0], [1], [0, 0, 1, 1], [], []>} : vector<16x16xf32>, vector<16x9xf32>, vector<16x9xf32> -> vector<16x9xf32>
    %cst_69 = arith.constant dense<0.000000e+00> : vector<16x9xf32>
    %150 = tpu.matmul %3, %142, %cst_69 {dimension_numbers = #tpu.dot_dimension_numbers<[1], [0], [0], [1], [0, 0, 1, 1], [], []>} : vector<16x16xf32>, vector<16x9xf32>, vector<16x9xf32> -> vector<16x9xf32>
    %151 = arith.subf %149, %150 : vector<16x9xf32>
    %cst_70 = arith.constant dense<0.000000e+00> : vector<16x9xf32>
    %152 = tpu.matmul %2, %142, %cst_70 {dimension_numbers = #tpu.dot_dimension_numbers<[1], [0], [0], [1], [0, 0, 1, 1], [], []>} : vector<16x16xf32>, vector<16x9xf32>, vector<16x9xf32> -> vector<16x9xf32>
    %cst_71 = arith.constant dense<0.000000e+00> : vector<16x9xf32>
    %153 = tpu.matmul %3, %141, %cst_71 {dimension_numbers = #tpu.dot_dimension_numbers<[1], [0], [0], [1], [0, 0, 1, 1], [], []>} : vector<16x16xf32>, vector<16x9xf32>, vector<16x9xf32> -> vector<16x9xf32>
    %154 = arith.addf %152, %153 : vector<16x9xf32>
    %155 = arith.mulf %145, %145 : vector<16x9xf32>
    %156 = arith.mulf %148, %148 : vector<16x9xf32>
    %157 = arith.addf %155, %156 : vector<16x9xf32>
    %158 = math.sqrt %157 : vector<16x9xf32>
    %159 = arith.mulf %151, %151 : vector<16x9xf32>
    %160 = arith.mulf %154, %154 : vector<16x9xf32>
    %161 = arith.addf %159, %160 : vector<16x9xf32>
    %162 = math.sqrt %161 : vector<16x9xf32>
    %163 = math.absf %148 : vector<16x9xf32>
    %164 = math.absf %145 : vector<16x9xf32>
    %165 = arith.minimumf %164, %163 : vector<16x9xf32>
    %166 = arith.maximumf %164, %163 : vector<16x9xf32>
    %cst_72 = arith.constant 0.000000e+00 : f32
    %167 = vector.broadcast %cst_72 : f32 to vector<16x9xf32>
    %168 = arith.cmpf ogt, %166, %167 : vector<16x9xf32>
    %cst_73 = arith.constant 1.000000e+00 : f32
    %169 = vector.broadcast %cst_73 : f32 to vector<16x9xf32>
    %170 = arith.select %168, %166, %169 : vector<16x9xi1>, vector<16x9xf32>
    %171 = arith.divf %165, %170 : vector<16x9xf32>
    %cst_74 = arith.constant 0.414213568 : f32
    %172 = vector.broadcast %cst_74 : f32 to vector<16x9xf32>
    %173 = arith.cmpf ogt, %171, %172 : vector<16x9xf32>
    %cst_75 = arith.constant 1.000000e+00 : f32
    %174 = vector.broadcast %cst_75 : f32 to vector<16x9xf32>
    %175 = arith.subf %171, %174 : vector<16x9xf32>
    %cst_76 = arith.constant 1.000000e+00 : f32
    %176 = vector.broadcast %cst_76 : f32 to vector<16x9xf32>
    %177 = arith.addf %171, %176 : vector<16x9xf32>
    %178 = arith.divf %175, %177 : vector<16x9xf32>
    %179 = arith.select %173, %178, %171 : vector<16x9xi1>, vector<16x9xf32>
    %180 = arith.mulf %179, %179 : vector<16x9xf32>
    %cst_77 = arith.constant 0.0805374458 : f32
    %181 = vector.broadcast %cst_77 : f32 to vector<16x9xf32>
    %182 = arith.mulf %181, %180 : vector<16x9xf32>
    %cst_78 = arith.constant -0.138776854 : f32
    %183 = vector.broadcast %cst_78 : f32 to vector<16x9xf32>
    %184 = arith.addf %182, %183 : vector<16x9xf32>
    %185 = arith.mulf %184, %180 : vector<16x9xf32>
    %cst_79 = arith.constant 0.199777111 : f32
    %186 = vector.broadcast %cst_79 : f32 to vector<16x9xf32>
    %187 = arith.addf %185, %186 : vector<16x9xf32>
    %188 = arith.mulf %187, %180 : vector<16x9xf32>
    %cst_80 = arith.constant -0.333329499 : f32
    %189 = vector.broadcast %cst_80 : f32 to vector<16x9xf32>
    %190 = arith.addf %188, %189 : vector<16x9xf32>
    %191 = arith.mulf %190, %180 : vector<16x9xf32>
    %192 = arith.mulf %191, %179 : vector<16x9xf32>
    %193 = arith.addf %192, %179 : vector<16x9xf32>
    %cst_81 = arith.constant 0.785398185 : f32
    %194 = vector.broadcast %cst_81 : f32 to vector<16x9xf32>
    %195 = arith.addf %193, %194 : vector<16x9xf32>
    %196 = arith.select %173, %195, %193 : vector<16x9xi1>, vector<16x9xf32>
    %197 = arith.cmpf ogt, %163, %164 : vector<16x9xf32>
    %cst_82 = arith.constant 1.57079637 : f32
    %198 = vector.broadcast %cst_82 : f32 to vector<16x9xf32>
    %199 = arith.subf %198, %196 : vector<16x9xf32>
    %200 = arith.select %197, %199, %196 : vector<16x9xi1>, vector<16x9xf32>
    %cst_83 = arith.constant 0.000000e+00 : f32
    %201 = vector.broadcast %cst_83 : f32 to vector<16x9xf32>
    %202 = arith.cmpf olt, %145, %201 : vector<16x9xf32>
    %cst_84 = arith.constant 3.14159274 : f32
    %203 = vector.broadcast %cst_84 : f32 to vector<16x9xf32>
    %204 = arith.subf %203, %200 : vector<16x9xf32>
    %205 = arith.select %202, %204, %200 : vector<16x9xi1>, vector<16x9xf32>
    %cst_85 = arith.constant 0.000000e+00 : f32
    %206 = vector.broadcast %cst_85 : f32 to vector<16x9xf32>
    %207 = arith.cmpf olt, %148, %206 : vector<16x9xf32>
    %cst_86 = arith.constant 0.000000e+00 : f32
    %208 = vector.broadcast %cst_86 : f32 to vector<16x9xf32>
    %209 = arith.subf %208, %205 : vector<16x9xf32>
    %210 = arith.select %207, %209, %205 : vector<16x9xi1>, vector<16x9xf32>
    %211 = math.absf %154 : vector<16x9xf32>
    %212 = math.absf %151 : vector<16x9xf32>
    %213 = arith.minimumf %212, %211 : vector<16x9xf32>
    %214 = arith.maximumf %212, %211 : vector<16x9xf32>
    %cst_87 = arith.constant 0.000000e+00 : f32
    %215 = vector.broadcast %cst_87 : f32 to vector<16x9xf32>
    %216 = arith.cmpf ogt, %214, %215 : vector<16x9xf32>
    %cst_88 = arith.constant 1.000000e+00 : f32
    %217 = vector.broadcast %cst_88 : f32 to vector<16x9xf32>
    %218 = arith.select %216, %214, %217 : vector<16x9xi1>, vector<16x9xf32>
    %219 = arith.divf %213, %218 : vector<16x9xf32>
    %cst_89 = arith.constant 0.414213568 : f32
    %220 = vector.broadcast %cst_89 : f32 to vector<16x9xf32>
    %221 = arith.cmpf ogt, %219, %220 : vector<16x9xf32>
    %cst_90 = arith.constant 1.000000e+00 : f32
    %222 = vector.broadcast %cst_90 : f32 to vector<16x9xf32>
    %223 = arith.subf %219, %222 : vector<16x9xf32>
    %cst_91 = arith.constant 1.000000e+00 : f32
    %224 = vector.broadcast %cst_91 : f32 to vector<16x9xf32>
    %225 = arith.addf %219, %224 : vector<16x9xf32>
    %226 = arith.divf %223, %225 : vector<16x9xf32>
    %227 = arith.select %221, %226, %219 : vector<16x9xi1>, vector<16x9xf32>
    %228 = arith.mulf %227, %227 : vector<16x9xf32>
    %cst_92 = arith.constant 0.0805374458 : f32
    %229 = vector.broadcast %cst_92 : f32 to vector<16x9xf32>
    %230 = arith.mulf %229, %228 : vector<16x9xf32>
    %cst_93 = arith.constant -0.138776854 : f32
    %231 = vector.broadcast %cst_93 : f32 to vector<16x9xf32>
    %232 = arith.addf %230, %231 : vector<16x9xf32>
    %233 = arith.mulf %232, %228 : vector<16x9xf32>
    %cst_94 = arith.constant 0.199777111 : f32
    %234 = vector.broadcast %cst_94 : f32 to vector<16x9xf32>
    %235 = arith.addf %233, %234 : vector<16x9xf32>
    %236 = arith.mulf %235, %228 : vector<16x9xf32>
    %cst_95 = arith.constant -0.333329499 : f32
    %237 = vector.broadcast %cst_95 : f32 to vector<16x9xf32>
    %238 = arith.addf %236, %237 : vector<16x9xf32>
    %239 = arith.mulf %238, %228 : vector<16x9xf32>
    %240 = arith.mulf %239, %227 : vector<16x9xf32>
    %241 = arith.addf %240, %227 : vector<16x9xf32>
    %cst_96 = arith.constant 0.785398185 : f32
    %242 = vector.broadcast %cst_96 : f32 to vector<16x9xf32>
    %243 = arith.addf %241, %242 : vector<16x9xf32>
    %244 = arith.select %221, %243, %241 : vector<16x9xi1>, vector<16x9xf32>
    %245 = arith.cmpf ogt, %211, %212 : vector<16x9xf32>
    %cst_97 = arith.constant 1.57079637 : f32
    %246 = vector.broadcast %cst_97 : f32 to vector<16x9xf32>
    %247 = arith.subf %246, %244 : vector<16x9xf32>
    %248 = arith.select %245, %247, %244 : vector<16x9xi1>, vector<16x9xf32>
    %cst_98 = arith.constant 0.000000e+00 : f32
    %249 = vector.broadcast %cst_98 : f32 to vector<16x9xf32>
    %250 = arith.cmpf olt, %151, %249 : vector<16x9xf32>
    %cst_99 = arith.constant 3.14159274 : f32
    %251 = vector.broadcast %cst_99 : f32 to vector<16x9xf32>
    %252 = arith.subf %251, %248 : vector<16x9xf32>
    %253 = arith.select %250, %252, %248 : vector<16x9xi1>, vector<16x9xf32>
    %cst_100 = arith.constant 0.000000e+00 : f32
    %254 = vector.broadcast %cst_100 : f32 to vector<16x9xf32>
    %255 = arith.cmpf olt, %154, %254 : vector<16x9xf32>
    %cst_101 = arith.constant 0.000000e+00 : f32
    %256 = vector.broadcast %cst_101 : f32 to vector<16x9xf32>
    %257 = arith.subf %256, %253 : vector<16x9xf32>
    %258 = arith.select %255, %257, %253 : vector<16x9xi1>, vector<16x9xf32>
    %259 = arith.subf %158, %162 : vector<16x9xf32>
    %260 = arith.subf %210, %258 : vector<16x9xf32>
    %261 = math.absf %259 : vector<16x9xf32>
    %262 = arith.addf %134, %261 : vector<16x9xf32>
    %263 = math.absf %260 : vector<16x9xf32>
    %264 = arith.addf %262, %263 : vector<16x9xf32>
    %c2 = arith.constant 2 : index
    %c0_102 = arith.constant 0 : index
    %c0_103 = arith.constant 0 : index
    %265 = vector.load %arg1[%c2, %c0_102, %c0_103] : memref<4x16x16xf32, #tpu.memory_space<vmem>>, vector<1x16x16xf32>
    %266 = vector.shape_cast %265 : vector<1x16x16xf32> to vector<16x16xf32>
    %c2_104 = arith.constant 2 : index
    %c0_105 = arith.constant 0 : index
    %c0_106 = arith.constant 0 : index
    %267 = vector.load %arg2[%c2_104, %c0_105, %c0_106] : memref<4x16x16xf32, #tpu.memory_space<vmem>>, vector<1x16x16xf32>
    %268 = vector.shape_cast %267 : vector<1x16x16xf32> to vector<16x16xf32>
    %cst_107 = arith.constant dense<0.000000e+00> : vector<16x9xf32>
    %269 = tpu.matmul %266, %0, %cst_107 {dimension_numbers = #tpu.dot_dimension_numbers<[1], [0], [0], [1], [0, 0, 1, 1], [], []>} : vector<16x16xf32>, vector<16x9xf32>, vector<16x9xf32> -> vector<16x9xf32>
    %cst_108 = arith.constant dense<0.000000e+00> : vector<16x9xf32>
    %270 = tpu.matmul %266, %1, %cst_108 {dimension_numbers = #tpu.dot_dimension_numbers<[1], [0], [0], [1], [0, 0, 1, 1], [], []>} : vector<16x16xf32>, vector<16x9xf32>, vector<16x9xf32> -> vector<16x9xf32>
    %cst_109 = arith.constant dense<0.000000e+00> : vector<16x9xf32>
    %271 = tpu.matmul %268, %0, %cst_109 {dimension_numbers = #tpu.dot_dimension_numbers<[1], [0], [0], [1], [0, 0, 1, 1], [], []>} : vector<16x16xf32>, vector<16x9xf32>, vector<16x9xf32> -> vector<16x9xf32>
    %cst_110 = arith.constant dense<0.000000e+00> : vector<16x9xf32>
    %272 = tpu.matmul %268, %1, %cst_110 {dimension_numbers = #tpu.dot_dimension_numbers<[1], [0], [0], [1], [0, 0, 1, 1], [], []>} : vector<16x16xf32>, vector<16x9xf32>, vector<16x9xf32> -> vector<16x9xf32>
    %cst_111 = arith.constant dense<0.000000e+00> : vector<16x9xf32>
    %273 = tpu.matmul %2, %269, %cst_111 {dimension_numbers = #tpu.dot_dimension_numbers<[1], [0], [0], [1], [0, 0, 1, 1], [], []>} : vector<16x16xf32>, vector<16x9xf32>, vector<16x9xf32> -> vector<16x9xf32>
    %cst_112 = arith.constant dense<0.000000e+00> : vector<16x9xf32>
    %274 = tpu.matmul %3, %270, %cst_112 {dimension_numbers = #tpu.dot_dimension_numbers<[1], [0], [0], [1], [0, 0, 1, 1], [], []>} : vector<16x16xf32>, vector<16x9xf32>, vector<16x9xf32> -> vector<16x9xf32>
    %275 = arith.subf %273, %274 : vector<16x9xf32>
    %cst_113 = arith.constant dense<0.000000e+00> : vector<16x9xf32>
    %276 = tpu.matmul %2, %270, %cst_113 {dimension_numbers = #tpu.dot_dimension_numbers<[1], [0], [0], [1], [0, 0, 1, 1], [], []>} : vector<16x16xf32>, vector<16x9xf32>, vector<16x9xf32> -> vector<16x9xf32>
    %cst_114 = arith.constant dense<0.000000e+00> : vector<16x9xf32>
    %277 = tpu.matmul %3, %269, %cst_114 {dimension_numbers = #tpu.dot_dimension_numbers<[1], [0], [0], [1], [0, 0, 1, 1], [], []>} : vector<16x16xf32>, vector<16x9xf32>, vector<16x9xf32> -> vector<16x9xf32>
    %278 = arith.addf %276, %277 : vector<16x9xf32>
    %cst_115 = arith.constant dense<0.000000e+00> : vector<16x9xf32>
    %279 = tpu.matmul %2, %271, %cst_115 {dimension_numbers = #tpu.dot_dimension_numbers<[1], [0], [0], [1], [0, 0, 1, 1], [], []>} : vector<16x16xf32>, vector<16x9xf32>, vector<16x9xf32> -> vector<16x9xf32>
    %cst_116 = arith.constant dense<0.000000e+00> : vector<16x9xf32>
    %280 = tpu.matmul %3, %272, %cst_116 {dimension_numbers = #tpu.dot_dimension_numbers<[1], [0], [0], [1], [0, 0, 1, 1], [], []>} : vector<16x16xf32>, vector<16x9xf32>, vector<16x9xf32> -> vector<16x9xf32>
    %281 = arith.subf %279, %280 : vector<16x9xf32>
    %cst_117 = arith.constant dense<0.000000e+00> : vector<16x9xf32>
    %282 = tpu.matmul %2, %272, %cst_117 {dimension_numbers = #tpu.dot_dimension_numbers<[1], [0], [0], [1], [0, 0, 1, 1], [], []>} : vector<16x16xf32>, vector<16x9xf32>, vector<16x9xf32> -> vector<16x9xf32>
    %cst_118 = arith.constant dense<0.000000e+00> : vector<16x9xf32>
    %283 = tpu.matmul %3, %271, %cst_118 {dimension_numbers = #tpu.dot_dimension_numbers<[1], [0], [0], [1], [0, 0, 1, 1], [], []>} : vector<16x16xf32>, vector<16x9xf32>, vector<16x9xf32> -> vector<16x9xf32>
    %284 = arith.addf %282, %283 : vector<16x9xf32>
    %285 = arith.mulf %275, %275 : vector<16x9xf32>
    %286 = arith.mulf %278, %278 : vector<16x9xf32>
    %287 = arith.addf %285, %286 : vector<16x9xf32>
    %288 = math.sqrt %287 : vector<16x9xf32>
    %289 = arith.mulf %281, %281 : vector<16x9xf32>
    %290 = arith.mulf %284, %284 : vector<16x9xf32>
    %291 = arith.addf %289, %290 : vector<16x9xf32>
    %292 = math.sqrt %291 : vector<16x9xf32>
    %293 = math.absf %278 : vector<16x9xf32>
    %294 = math.absf %275 : vector<16x9xf32>
    %295 = arith.minimumf %294, %293 : vector<16x9xf32>
    %296 = arith.maximumf %294, %293 : vector<16x9xf32>
    %cst_119 = arith.constant 0.000000e+00 : f32
    %297 = vector.broadcast %cst_119 : f32 to vector<16x9xf32>
    %298 = arith.cmpf ogt, %296, %297 : vector<16x9xf32>
    %cst_120 = arith.constant 1.000000e+00 : f32
    %299 = vector.broadcast %cst_120 : f32 to vector<16x9xf32>
    %300 = arith.select %298, %296, %299 : vector<16x9xi1>, vector<16x9xf32>
    %301 = arith.divf %295, %300 : vector<16x9xf32>
    %cst_121 = arith.constant 0.414213568 : f32
    %302 = vector.broadcast %cst_121 : f32 to vector<16x9xf32>
    %303 = arith.cmpf ogt, %301, %302 : vector<16x9xf32>
    %cst_122 = arith.constant 1.000000e+00 : f32
    %304 = vector.broadcast %cst_122 : f32 to vector<16x9xf32>
    %305 = arith.subf %301, %304 : vector<16x9xf32>
    %cst_123 = arith.constant 1.000000e+00 : f32
    %306 = vector.broadcast %cst_123 : f32 to vector<16x9xf32>
    %307 = arith.addf %301, %306 : vector<16x9xf32>
    %308 = arith.divf %305, %307 : vector<16x9xf32>
    %309 = arith.select %303, %308, %301 : vector<16x9xi1>, vector<16x9xf32>
    %310 = arith.mulf %309, %309 : vector<16x9xf32>
    %cst_124 = arith.constant 0.0805374458 : f32
    %311 = vector.broadcast %cst_124 : f32 to vector<16x9xf32>
    %312 = arith.mulf %311, %310 : vector<16x9xf32>
    %cst_125 = arith.constant -0.138776854 : f32
    %313 = vector.broadcast %cst_125 : f32 to vector<16x9xf32>
    %314 = arith.addf %312, %313 : vector<16x9xf32>
    %315 = arith.mulf %314, %310 : vector<16x9xf32>
    %cst_126 = arith.constant 0.199777111 : f32
    %316 = vector.broadcast %cst_126 : f32 to vector<16x9xf32>
    %317 = arith.addf %315, %316 : vector<16x9xf32>
    %318 = arith.mulf %317, %310 : vector<16x9xf32>
    %cst_127 = arith.constant -0.333329499 : f32
    %319 = vector.broadcast %cst_127 : f32 to vector<16x9xf32>
    %320 = arith.addf %318, %319 : vector<16x9xf32>
    %321 = arith.mulf %320, %310 : vector<16x9xf32>
    %322 = arith.mulf %321, %309 : vector<16x9xf32>
    %323 = arith.addf %322, %309 : vector<16x9xf32>
    %cst_128 = arith.constant 0.785398185 : f32
    %324 = vector.broadcast %cst_128 : f32 to vector<16x9xf32>
    %325 = arith.addf %323, %324 : vector<16x9xf32>
    %326 = arith.select %303, %325, %323 : vector<16x9xi1>, vector<16x9xf32>
    %327 = arith.cmpf ogt, %293, %294 : vector<16x9xf32>
    %cst_129 = arith.constant 1.57079637 : f32
    %328 = vector.broadcast %cst_129 : f32 to vector<16x9xf32>
    %329 = arith.subf %328, %326 : vector<16x9xf32>
    %330 = arith.select %327, %329, %326 : vector<16x9xi1>, vector<16x9xf32>
    %cst_130 = arith.constant 0.000000e+00 : f32
    %331 = vector.broadcast %cst_130 : f32 to vector<16x9xf32>
    %332 = arith.cmpf olt, %275, %331 : vector<16x9xf32>
    %cst_131 = arith.constant 3.14159274 : f32
    %333 = vector.broadcast %cst_131 : f32 to vector<16x9xf32>
    %334 = arith.subf %333, %330 : vector<16x9xf32>
    %335 = arith.select %332, %334, %330 : vector<16x9xi1>, vector<16x9xf32>
    %cst_132 = arith.constant 0.000000e+00 : f32
    %336 = vector.broadcast %cst_132 : f32 to vector<16x9xf32>
    %337 = arith.cmpf olt, %278, %336 : vector<16x9xf32>
    %cst_133 = arith.constant 0.000000e+00 : f32
    %338 = vector.broadcast %cst_133 : f32 to vector<16x9xf32>
    %339 = arith.subf %338, %335 : vector<16x9xf32>
    %340 = arith.select %337, %339, %335 : vector<16x9xi1>, vector<16x9xf32>
    %341 = math.absf %284 : vector<16x9xf32>
    %342 = math.absf %281 : vector<16x9xf32>
    %343 = arith.minimumf %342, %341 : vector<16x9xf32>
    %344 = arith.maximumf %342, %341 : vector<16x9xf32>
    %cst_134 = arith.constant 0.000000e+00 : f32
    %345 = vector.broadcast %cst_134 : f32 to vector<16x9xf32>
    %346 = arith.cmpf ogt, %344, %345 : vector<16x9xf32>
    %cst_135 = arith.constant 1.000000e+00 : f32
    %347 = vector.broadcast %cst_135 : f32 to vector<16x9xf32>
    %348 = arith.select %346, %344, %347 : vector<16x9xi1>, vector<16x9xf32>
    %349 = arith.divf %343, %348 : vector<16x9xf32>
    %cst_136 = arith.constant 0.414213568 : f32
    %350 = vector.broadcast %cst_136 : f32 to vector<16x9xf32>
    %351 = arith.cmpf ogt, %349, %350 : vector<16x9xf32>
    %cst_137 = arith.constant 1.000000e+00 : f32
    %352 = vector.broadcast %cst_137 : f32 to vector<16x9xf32>
    %353 = arith.subf %349, %352 : vector<16x9xf32>
    %cst_138 = arith.constant 1.000000e+00 : f32
    %354 = vector.broadcast %cst_138 : f32 to vector<16x9xf32>
    %355 = arith.addf %349, %354 : vector<16x9xf32>
    %356 = arith.divf %353, %355 : vector<16x9xf32>
    %357 = arith.select %351, %356, %349 : vector<16x9xi1>, vector<16x9xf32>
    %358 = arith.mulf %357, %357 : vector<16x9xf32>
    %cst_139 = arith.constant 0.0805374458 : f32
    %359 = vector.broadcast %cst_139 : f32 to vector<16x9xf32>
    %360 = arith.mulf %359, %358 : vector<16x9xf32>
    %cst_140 = arith.constant -0.138776854 : f32
    %361 = vector.broadcast %cst_140 : f32 to vector<16x9xf32>
    %362 = arith.addf %360, %361 : vector<16x9xf32>
    %363 = arith.mulf %362, %358 : vector<16x9xf32>
    %cst_141 = arith.constant 0.199777111 : f32
    %364 = vector.broadcast %cst_141 : f32 to vector<16x9xf32>
    %365 = arith.addf %363, %364 : vector<16x9xf32>
    %366 = arith.mulf %365, %358 : vector<16x9xf32>
    %cst_142 = arith.constant -0.333329499 : f32
    %367 = vector.broadcast %cst_142 : f32 to vector<16x9xf32>
    %368 = arith.addf %366, %367 : vector<16x9xf32>
    %369 = arith.mulf %368, %358 : vector<16x9xf32>
    %370 = arith.mulf %369, %357 : vector<16x9xf32>
    %371 = arith.addf %370, %357 : vector<16x9xf32>
    %cst_143 = arith.constant 0.785398185 : f32
    %372 = vector.broadcast %cst_143 : f32 to vector<16x9xf32>
    %373 = arith.addf %371, %372 : vector<16x9xf32>
    %374 = arith.select %351, %373, %371 : vector<16x9xi1>, vector<16x9xf32>
    %375 = arith.cmpf ogt, %341, %342 : vector<16x9xf32>
    %cst_144 = arith.constant 1.57079637 : f32
    %376 = vector.broadcast %cst_144 : f32 to vector<16x9xf32>
    %377 = arith.subf %376, %374 : vector<16x9xf32>
    %378 = arith.select %375, %377, %374 : vector<16x9xi1>, vector<16x9xf32>
    %cst_145 = arith.constant 0.000000e+00 : f32
    %379 = vector.broadcast %cst_145 : f32 to vector<16x9xf32>
    %380 = arith.cmpf olt, %281, %379 : vector<16x9xf32>
    %cst_146 = arith.constant 3.14159274 : f32
    %381 = vector.broadcast %cst_146 : f32 to vector<16x9xf32>
    %382 = arith.subf %381, %378 : vector<16x9xf32>
    %383 = arith.select %380, %382, %378 : vector<16x9xi1>, vector<16x9xf32>
    %cst_147 = arith.constant 0.000000e+00 : f32
    %384 = vector.broadcast %cst_147 : f32 to vector<16x9xf32>
    %385 = arith.cmpf olt, %284, %384 : vector<16x9xf32>
    %cst_148 = arith.constant 0.000000e+00 : f32
    %386 = vector.broadcast %cst_148 : f32 to vector<16x9xf32>
    %387 = arith.subf %386, %383 : vector<16x9xf32>
    %388 = arith.select %385, %387, %383 : vector<16x9xi1>, vector<16x9xf32>
    %389 = arith.subf %288, %292 : vector<16x9xf32>
    %390 = arith.subf %340, %388 : vector<16x9xf32>
    %391 = math.absf %389 : vector<16x9xf32>
    %392 = arith.addf %264, %391 : vector<16x9xf32>
    %393 = math.absf %390 : vector<16x9xf32>
    %394 = arith.addf %392, %393 : vector<16x9xf32>
    %c3 = arith.constant 3 : index
    %c0_149 = arith.constant 0 : index
    %c0_150 = arith.constant 0 : index
    %395 = vector.load %arg1[%c3, %c0_149, %c0_150] : memref<4x16x16xf32, #tpu.memory_space<vmem>>, vector<1x16x16xf32>
    %396 = vector.shape_cast %395 : vector<1x16x16xf32> to vector<16x16xf32>
    %c3_151 = arith.constant 3 : index
    %c0_152 = arith.constant 0 : index
    %c0_153 = arith.constant 0 : index
    %397 = vector.load %arg2[%c3_151, %c0_152, %c0_153] : memref<4x16x16xf32, #tpu.memory_space<vmem>>, vector<1x16x16xf32>
    %398 = vector.shape_cast %397 : vector<1x16x16xf32> to vector<16x16xf32>
    %cst_154 = arith.constant dense<0.000000e+00> : vector<16x9xf32>
    %399 = tpu.matmul %396, %0, %cst_154 {dimension_numbers = #tpu.dot_dimension_numbers<[1], [0], [0], [1], [0, 0, 1, 1], [], []>} : vector<16x16xf32>, vector<16x9xf32>, vector<16x9xf32> -> vector<16x9xf32>
    %cst_155 = arith.constant dense<0.000000e+00> : vector<16x9xf32>
    %400 = tpu.matmul %396, %1, %cst_155 {dimension_numbers = #tpu.dot_dimension_numbers<[1], [0], [0], [1], [0, 0, 1, 1], [], []>} : vector<16x16xf32>, vector<16x9xf32>, vector<16x9xf32> -> vector<16x9xf32>
    %cst_156 = arith.constant dense<0.000000e+00> : vector<16x9xf32>
    %401 = tpu.matmul %398, %0, %cst_156 {dimension_numbers = #tpu.dot_dimension_numbers<[1], [0], [0], [1], [0, 0, 1, 1], [], []>} : vector<16x16xf32>, vector<16x9xf32>, vector<16x9xf32> -> vector<16x9xf32>
    %cst_157 = arith.constant dense<0.000000e+00> : vector<16x9xf32>
    %402 = tpu.matmul %398, %1, %cst_157 {dimension_numbers = #tpu.dot_dimension_numbers<[1], [0], [0], [1], [0, 0, 1, 1], [], []>} : vector<16x16xf32>, vector<16x9xf32>, vector<16x9xf32> -> vector<16x9xf32>
    %cst_158 = arith.constant dense<0.000000e+00> : vector<16x9xf32>
    %403 = tpu.matmul %2, %399, %cst_158 {dimension_numbers = #tpu.dot_dimension_numbers<[1], [0], [0], [1], [0, 0, 1, 1], [], []>} : vector<16x16xf32>, vector<16x9xf32>, vector<16x9xf32> -> vector<16x9xf32>
    %cst_159 = arith.constant dense<0.000000e+00> : vector<16x9xf32>
    %404 = tpu.matmul %3, %400, %cst_159 {dimension_numbers = #tpu.dot_dimension_numbers<[1], [0], [0], [1], [0, 0, 1, 1], [], []>} : vector<16x16xf32>, vector<16x9xf32>, vector<16x9xf32> -> vector<16x9xf32>
    %405 = arith.subf %403, %404 : vector<16x9xf32>
    %cst_160 = arith.constant dense<0.000000e+00> : vector<16x9xf32>
    %406 = tpu.matmul %2, %400, %cst_160 {dimension_numbers = #tpu.dot_dimension_numbers<[1], [0], [0], [1], [0, 0, 1, 1], [], []>} : vector<16x16xf32>, vector<16x9xf32>, vector<16x9xf32> -> vector<16x9xf32>
    %cst_161 = arith.constant dense<0.000000e+00> : vector<16x9xf32>
    %407 = tpu.matmul %3, %399, %cst_161 {dimension_numbers = #tpu.dot_dimension_numbers<[1], [0], [0], [1], [0, 0, 1, 1], [], []>} : vector<16x16xf32>, vector<16x9xf32>, vector<16x9xf32> -> vector<16x9xf32>
    %408 = arith.addf %406, %407 : vector<16x9xf32>
    %cst_162 = arith.constant dense<0.000000e+00> : vector<16x9xf32>
    %409 = tpu.matmul %2, %401, %cst_162 {dimension_numbers = #tpu.dot_dimension_numbers<[1], [0], [0], [1], [0, 0, 1, 1], [], []>} : vector<16x16xf32>, vector<16x9xf32>, vector<16x9xf32> -> vector<16x9xf32>
    %cst_163 = arith.constant dense<0.000000e+00> : vector<16x9xf32>
    %410 = tpu.matmul %3, %402, %cst_163 {dimension_numbers = #tpu.dot_dimension_numbers<[1], [0], [0], [1], [0, 0, 1, 1], [], []>} : vector<16x16xf32>, vector<16x9xf32>, vector<16x9xf32> -> vector<16x9xf32>
    %411 = arith.subf %409, %410 : vector<16x9xf32>
    %cst_164 = arith.constant dense<0.000000e+00> : vector<16x9xf32>
    %412 = tpu.matmul %2, %402, %cst_164 {dimension_numbers = #tpu.dot_dimension_numbers<[1], [0], [0], [1], [0, 0, 1, 1], [], []>} : vector<16x16xf32>, vector<16x9xf32>, vector<16x9xf32> -> vector<16x9xf32>
    %cst_165 = arith.constant dense<0.000000e+00> : vector<16x9xf32>
    %413 = tpu.matmul %3, %401, %cst_165 {dimension_numbers = #tpu.dot_dimension_numbers<[1], [0], [0], [1], [0, 0, 1, 1], [], []>} : vector<16x16xf32>, vector<16x9xf32>, vector<16x9xf32> -> vector<16x9xf32>
    %414 = arith.addf %412, %413 : vector<16x9xf32>
    %415 = arith.mulf %405, %405 : vector<16x9xf32>
    %416 = arith.mulf %408, %408 : vector<16x9xf32>
    %417 = arith.addf %415, %416 : vector<16x9xf32>
    %418 = math.sqrt %417 : vector<16x9xf32>
    %419 = arith.mulf %411, %411 : vector<16x9xf32>
    %420 = arith.mulf %414, %414 : vector<16x9xf32>
    %421 = arith.addf %419, %420 : vector<16x9xf32>
    %422 = math.sqrt %421 : vector<16x9xf32>
    %423 = math.absf %408 : vector<16x9xf32>
    %424 = math.absf %405 : vector<16x9xf32>
    %425 = arith.minimumf %424, %423 : vector<16x9xf32>
    %426 = arith.maximumf %424, %423 : vector<16x9xf32>
    %cst_166 = arith.constant 0.000000e+00 : f32
    %427 = vector.broadcast %cst_166 : f32 to vector<16x9xf32>
    %428 = arith.cmpf ogt, %426, %427 : vector<16x9xf32>
    %cst_167 = arith.constant 1.000000e+00 : f32
    %429 = vector.broadcast %cst_167 : f32 to vector<16x9xf32>
    %430 = arith.select %428, %426, %429 : vector<16x9xi1>, vector<16x9xf32>
    %431 = arith.divf %425, %430 : vector<16x9xf32>
    %cst_168 = arith.constant 0.414213568 : f32
    %432 = vector.broadcast %cst_168 : f32 to vector<16x9xf32>
    %433 = arith.cmpf ogt, %431, %432 : vector<16x9xf32>
    %cst_169 = arith.constant 1.000000e+00 : f32
    %434 = vector.broadcast %cst_169 : f32 to vector<16x9xf32>
    %435 = arith.subf %431, %434 : vector<16x9xf32>
    %cst_170 = arith.constant 1.000000e+00 : f32
    %436 = vector.broadcast %cst_170 : f32 to vector<16x9xf32>
    %437 = arith.addf %431, %436 : vector<16x9xf32>
    %438 = arith.divf %435, %437 : vector<16x9xf32>
    %439 = arith.select %433, %438, %431 : vector<16x9xi1>, vector<16x9xf32>
    %440 = arith.mulf %439, %439 : vector<16x9xf32>
    %cst_171 = arith.constant 0.0805374458 : f32
    %441 = vector.broadcast %cst_171 : f32 to vector<16x9xf32>
    %442 = arith.mulf %441, %440 : vector<16x9xf32>
    %cst_172 = arith.constant -0.138776854 : f32
    %443 = vector.broadcast %cst_172 : f32 to vector<16x9xf32>
    %444 = arith.addf %442, %443 : vector<16x9xf32>
    %445 = arith.mulf %444, %440 : vector<16x9xf32>
    %cst_173 = arith.constant 0.199777111 : f32
    %446 = vector.broadcast %cst_173 : f32 to vector<16x9xf32>
    %447 = arith.addf %445, %446 : vector<16x9xf32>
    %448 = arith.mulf %447, %440 : vector<16x9xf32>
    %cst_174 = arith.constant -0.333329499 : f32
    %449 = vector.broadcast %cst_174 : f32 to vector<16x9xf32>
    %450 = arith.addf %448, %449 : vector<16x9xf32>
    %451 = arith.mulf %450, %440 : vector<16x9xf32>
    %452 = arith.mulf %451, %439 : vector<16x9xf32>
    %453 = arith.addf %452, %439 : vector<16x9xf32>
    %cst_175 = arith.constant 0.785398185 : f32
    %454 = vector.broadcast %cst_175 : f32 to vector<16x9xf32>
    %455 = arith.addf %453, %454 : vector<16x9xf32>
    %456 = arith.select %433, %455, %453 : vector<16x9xi1>, vector<16x9xf32>
    %457 = arith.cmpf ogt, %423, %424 : vector<16x9xf32>
    %cst_176 = arith.constant 1.57079637 : f32
    %458 = vector.broadcast %cst_176 : f32 to vector<16x9xf32>
    %459 = arith.subf %458, %456 : vector<16x9xf32>
    %460 = arith.select %457, %459, %456 : vector<16x9xi1>, vector<16x9xf32>
    %cst_177 = arith.constant 0.000000e+00 : f32
    %461 = vector.broadcast %cst_177 : f32 to vector<16x9xf32>
    %462 = arith.cmpf olt, %405, %461 : vector<16x9xf32>
    %cst_178 = arith.constant 3.14159274 : f32
    %463 = vector.broadcast %cst_178 : f32 to vector<16x9xf32>
    %464 = arith.subf %463, %460 : vector<16x9xf32>
    %465 = arith.select %462, %464, %460 : vector<16x9xi1>, vector<16x9xf32>
    %cst_179 = arith.constant 0.000000e+00 : f32
    %466 = vector.broadcast %cst_179 : f32 to vector<16x9xf32>
    %467 = arith.cmpf olt, %408, %466 : vector<16x9xf32>
    %cst_180 = arith.constant 0.000000e+00 : f32
    %468 = vector.broadcast %cst_180 : f32 to vector<16x9xf32>
    %469 = arith.subf %468, %465 : vector<16x9xf32>
    %470 = arith.select %467, %469, %465 : vector<16x9xi1>, vector<16x9xf32>
    %471 = math.absf %414 : vector<16x9xf32>
    %472 = math.absf %411 : vector<16x9xf32>
    %473 = arith.minimumf %472, %471 : vector<16x9xf32>
    %474 = arith.maximumf %472, %471 : vector<16x9xf32>
    %cst_181 = arith.constant 0.000000e+00 : f32
    %475 = vector.broadcast %cst_181 : f32 to vector<16x9xf32>
    %476 = arith.cmpf ogt, %474, %475 : vector<16x9xf32>
    %cst_182 = arith.constant 1.000000e+00 : f32
    %477 = vector.broadcast %cst_182 : f32 to vector<16x9xf32>
    %478 = arith.select %476, %474, %477 : vector<16x9xi1>, vector<16x9xf32>
    %479 = arith.divf %473, %478 : vector<16x9xf32>
    %cst_183 = arith.constant 0.414213568 : f32
    %480 = vector.broadcast %cst_183 : f32 to vector<16x9xf32>
    %481 = arith.cmpf ogt, %479, %480 : vector<16x9xf32>
    %cst_184 = arith.constant 1.000000e+00 : f32
    %482 = vector.broadcast %cst_184 : f32 to vector<16x9xf32>
    %483 = arith.subf %479, %482 : vector<16x9xf32>
    %cst_185 = arith.constant 1.000000e+00 : f32
    %484 = vector.broadcast %cst_185 : f32 to vector<16x9xf32>
    %485 = arith.addf %479, %484 : vector<16x9xf32>
    %486 = arith.divf %483, %485 : vector<16x9xf32>
    %487 = arith.select %481, %486, %479 : vector<16x9xi1>, vector<16x9xf32>
    %488 = arith.mulf %487, %487 : vector<16x9xf32>
    %cst_186 = arith.constant 0.0805374458 : f32
    %489 = vector.broadcast %cst_186 : f32 to vector<16x9xf32>
    %490 = arith.mulf %489, %488 : vector<16x9xf32>
    %cst_187 = arith.constant -0.138776854 : f32
    %491 = vector.broadcast %cst_187 : f32 to vector<16x9xf32>
    %492 = arith.addf %490, %491 : vector<16x9xf32>
    %493 = arith.mulf %492, %488 : vector<16x9xf32>
    %cst_188 = arith.constant 0.199777111 : f32
    %494 = vector.broadcast %cst_188 : f32 to vector<16x9xf32>
    %495 = arith.addf %493, %494 : vector<16x9xf32>
    %496 = arith.mulf %495, %488 : vector<16x9xf32>
    %cst_189 = arith.constant -0.333329499 : f32
    %497 = vector.broadcast %cst_189 : f32 to vector<16x9xf32>
    %498 = arith.addf %496, %497 : vector<16x9xf32>
    %499 = arith.mulf %498, %488 : vector<16x9xf32>
    %500 = arith.mulf %499, %487 : vector<16x9xf32>
    %501 = arith.addf %500, %487 : vector<16x9xf32>
    %cst_190 = arith.constant 0.785398185 : f32
    %502 = vector.broadcast %cst_190 : f32 to vector<16x9xf32>
    %503 = arith.addf %501, %502 : vector<16x9xf32>
    %504 = arith.select %481, %503, %501 : vector<16x9xi1>, vector<16x9xf32>
    %505 = arith.cmpf ogt, %471, %472 : vector<16x9xf32>
    %cst_191 = arith.constant 1.57079637 : f32
    %506 = vector.broadcast %cst_191 : f32 to vector<16x9xf32>
    %507 = arith.subf %506, %504 : vector<16x9xf32>
    %508 = arith.select %505, %507, %504 : vector<16x9xi1>, vector<16x9xf32>
    %cst_192 = arith.constant 0.000000e+00 : f32
    %509 = vector.broadcast %cst_192 : f32 to vector<16x9xf32>
    %510 = arith.cmpf olt, %411, %509 : vector<16x9xf32>
    %cst_193 = arith.constant 3.14159274 : f32
    %511 = vector.broadcast %cst_193 : f32 to vector<16x9xf32>
    %512 = arith.subf %511, %508 : vector<16x9xf32>
    %513 = arith.select %510, %512, %508 : vector<16x9xi1>, vector<16x9xf32>
    %cst_194 = arith.constant 0.000000e+00 : f32
    %514 = vector.broadcast %cst_194 : f32 to vector<16x9xf32>
    %515 = arith.cmpf olt, %414, %514 : vector<16x9xf32>
    %cst_195 = arith.constant 0.000000e+00 : f32
    %516 = vector.broadcast %cst_195 : f32 to vector<16x9xf32>
    %517 = arith.subf %516, %513 : vector<16x9xf32>
    %518 = arith.select %515, %517, %513 : vector<16x9xi1>, vector<16x9xf32>
    %519 = arith.subf %418, %422 : vector<16x9xf32>
    %520 = arith.subf %470, %518 : vector<16x9xf32>
    %521 = math.absf %519 : vector<16x9xf32>
    %522 = arith.addf %394, %521 : vector<16x9xf32>
    %523 = math.absf %520 : vector<16x9xf32>
    %524 = arith.addf %522, %523 : vector<16x9xf32>
    %525 = vector.shape_cast %524 : vector<16x9xf32> to vector<1x16x9xf32>
    %cst_196 = arith.constant dense<0.000000e+00> : vector<1xf32>
    %526 = vector.multi_reduction <add>, %525, %cst_196 [1, 2] : vector<1x16x9xf32> to vector<1xf32>
    %527 = vector.shape_cast %526 : vector<1xf32> to vector<1x1x1xf32>
    %528 = vector.extract %527[0, 0, 0] : f32 from vector<1x1x1xf32>
    %529 = vector.broadcast %528 : f32 to vector<1x8x128xf32>
    %c0_197 = arith.constant 0 : index
    %c0_198 = arith.constant 0 : index
    %c0_199 = arith.constant 0 : index
    %530 = vector.load %arg7[%c0_197, %c0_198, %c0_199] : memref<1x8x128xf32, #tpu.memory_space<vmem>>, vector<1x8x128xf32>
    tpu.vector_store %arg7[%c0_197, %c0_198, %c0_199], %529 {strides = array<i32>} : memref<1x8x128xf32, #tpu.memory_space<vmem>>, vector<1x8x128xf32>,
    return
  }
  func.func @transform_0(%arg0: i32) -> (i32, i32, i32) {
    %c0_i32 = arith.constant 0 : i32
    %c0_i32_0 = arith.constant 0 : i32
    %c0_i32_1 = arith.constant 0 : i32
    return %arg0, %c0_i32, %c0_i32_0 : i32, i32, i32
  }
  func.func @transform_1(%arg0: i32) -> (i32, i32, i32) {
    %c0_i32 = arith.constant 0 : i32
    %c0_i32_0 = arith.constant 0 : i32
    %c0_i32_1 = arith.constant 0 : i32
    return %arg0, %c0_i32, %c0_i32_0 : i32, i32, i32
  }
  func.func @transform_2(%arg0: i32) -> (i32, i32) {
    %c0_i32 = arith.constant 0 : i32
    %c0_i32_0 = arith.constant 0 : i32
    %c0_i32_1 = arith.constant 0 : i32
    return %c0_i32, %c0_i32_0 : i32, i32
  }
  func.func @transform_3(%arg0: i32) -> (i32, i32) {
    %c0_i32 = arith.constant 0 : i32
    %c0_i32_0 = arith.constant 0 : i32
    %c0_i32_1 = arith.constant 0 : i32
    return %c0_i32, %c0_i32_0 : i32, i32
  }
  func.func @transform_4(%arg0: i32) -> (i32, i32) {
    %c0_i32 = arith.constant 0 : i32
    %c0_i32_0 = arith.constant 0 : i32
    %c0_i32_1 = arith.constant 0 : i32
    return %c0_i32, %c0_i32_0 : i32, i32
  }
  func.func @transform_5(%arg0: i32) -> (i32, i32) {
    %c0_i32 = arith.constant 0 : i32
    %c0_i32_0 = arith.constant 0 : i32
    %c0_i32_1 = arith.constant 0 : i32
    return %c0_i32, %c0_i32_0 : i32, i32
  }
  func.func @transform_6(%arg0: i32) -> (i32, i32, i32) {
    %c0_i32 = arith.constant 0 : i32
    %c0_i32_0 = arith.constant 0 : i32
    %c0_i32_1 = arith.constant 0 : i32
    return %arg0, %c0_i32, %c0_i32_0 : i32, i32, i32
  }
}

</mosaic_0001>

<llo_original>
// kernel: tpu_custom_call.1
$region0: #{tpu_custom_call.1}
  #allocation0 [shape = 'u32[]', space=smem, size = 0x4, offset = 0x4, fixed_abs, tag = 'smem constant byte address 0x4 - core index']
  #allocation1 [shape = 'u32[144,128]{1,0:T(1,128)}', space=vmem, size = 0x12000, scoped, tag = 'internal scratch']
  %s0 = inlined_call_operand.hbm [shape: f32[8,16,16], index: 0, kind: input, shape index: {}]
  %s1 = inlined_call_operand.hbm [shape: f32[8,16,16], index: 1, kind: input, shape index: {}]
  %s2 = inlined_call_operand.hbm [shape: f32[16,9], index: 2, kind: input, shape index: {}]
  %s3 = inlined_call_operand.hbm [shape: f32[16,9], index: 3, kind: input, shape index: {}]
  %s4 = inlined_call_operand.hbm [shape: f32[16,16], index: 4, kind: input, shape index: {}]
  %s5 = inlined_call_operand.hbm [shape: f32[16,16], index: 5, kind: input, shape index: {}]
  %s6 = inlined_call_operand.hbm [shape: f32[2,8,128], index: 6, kind: output, shape index: {}]
  %s7 = sld [smem:[#allocation0]]
  $region81: #{tpu_custom_call.1} parent=0
    _
  %s9 = ssub.s32 1, %s7
  %s10 = scalar_select 0, %s9, %s7
  $region1: #{tpu_custom_call.1} parent=0
    #allocation2 [shape = 'u8[65536]{0}', space=vmem, size = 0x10000, scoped, tag = 'input window, operand 0']
    #allocation3 [shape = 's32[2]{0}', space=sflag, size = 0x8, scoped, tag = 'scoped memory for tpu_custom_call.1']
    #allocation4 [shape = 's32[2]{0}', space=sflag, size = 0x8, scoped, tag = 'scoped memory for tpu_custom_call.1']
    #allocation5 [shape = 'u8[65536]{0}', space=vmem, size = 0x10000, scoped, tag = 'input window, operand 1']
    #allocation6 [shape = 's32[2]{0}', space=sflag, size = 0x8, scoped, tag = 'scoped memory for tpu_custom_call.1']
    #allocation7 [shape = 'u8[8192]{0}', space=vmem, size = 0x2000, scoped, tag = 'input window, operand 2, single buffered']
    #allocation8 [shape = 'u8[8192]{0}', space=vmem, size = 0x2000, scoped, tag = 'input window, operand 3, single buffered']
    #allocation9 [shape = 's32[1]{0}', space=sflag, size = 0x4, scoped, tag = 'scoped memory for tpu_custom_call.1']
    #allocation10 [shape = 'u8[8192]{0}', space=vmem, size = 0x2000, scoped, tag = 'input window, operand 4, single buffered']
    #allocation11 [shape = 'u8[8192]{0}', space=vmem, size = 0x2000, scoped, tag = 'input window, operand 5, single buffered']
    #allocation12 [shape = 's32[1]{0}', space=sflag, size = 0x4, scoped, tag = 'scoped memory for tpu_custom_call.1']
    #allocation13 [shape = 'u8[8192]{0}', space=vmem, size = 0x2000, scoped, tag = 'output window, operand 0']
    %11 = vsyncpa [#allocation3], 0
    %s12 = scalar_lea.sflag [#allocation3], 1
    %13 = vsyncpa %s12, 0
    %14 = vsyncpa [#allocation6], 0
    %s15 = scalar_lea.sflag [#allocation6], 1
    %16 = vsyncpa %s15, 0
    %17 = vsyncpa [#allocation9], 0
    %18 = vsyncpa [#allocation12], 0
    %19 = vsyncpa [#allocation4], 0
    %s20 = scalar_lea.sflag [#allocation4], 1
    %21 = vsyncpa %s20, 0
    loop: start=0, step=1, limit=4
    $region2: #{tpu_custom_call.1} parent=1 // loop_pre_header
      _
    $region3: #{tpu_custom_call.1} parent=1 // loop_header
      %s23 = sphi 0, %s27
      %p24 = scmp.ge.s32.totalorder %s23, 4
      %s33 = sphi 0, %s35
      %s36 = sphi 0, %s33
      %s37 = sphi 0, %s36
      %s53 = sphi 0, %s37
      %s59 = sphi 0, %s61
      %s62 = sphi 0, %s59
      %s63 = sphi 0, %s62
      %s79 = sphi 0, %s63
      %s83 = sphi 0, %s83
      %s85 = sphi 0, %s83
      %s86 = sphi 0, %s85
      %s100 = sphi 0, %s86
      %s104 = sphi 0, %s104
      %s106 = sphi 0, %s104
      %s107 = sphi 0, %s106
      %s121 = sphi 0, %s107
      %s125 = sphi 0, %s125
      %s127 = sphi 0, %s125
      %s128 = sphi 0, %s127
      %s142 = sphi 0, %s128
      %s146 = sphi 0, %s146
      %s148 = sphi 0, %s146
      %s149 = sphi 0, %s148
      %s163 = sphi 0, %s149
      %s169 = sphi 0, %s171
      %s172 = sphi 0, %s169
      %s173 = sphi 0, %s172
      %s189 = sphi 0, %s173
    $region4: #{tpu_custom_call.1} parent=1 // loop_header_branch
      %26 = sbr.rel (%p24) target = $region8
    $region5: #{tpu_custom_call.1} parent=1 // loop_body
      %s28 = ssub.s32 %s23, 1
      %s29 = ssub.s32 %s23, 2
      %s30 = sadd.s32 %s23, 1
      %s31 = ssub.s32 %s23, %s30
      %p32 = scmp.eq.s32.totalorder %s31, 0
      %s34 = sadd.s32 %s33, 1
      %s35 = scalar_select %p32, %s33, %s34
      %p38 = pneg %p32
      %p39 = scmp.eq.s32.totalorder %s23, 1
      %p40 = por %p38, %p39
      %p41 = scmp.ne.s32.totalorder %s33, %s36
      %p42 = scmp.eq.s32.totalorder %s23, 0
      %p43 = por %p41, %p42
      %p44 = scmp.ne.s32.totalorder %s33, %s36
      %p45 = scmp.eq.s32.totalorder %s28, 1
      %p46 = por %p44, %p45
      %p47 = scmp.ne.s32.totalorder %s36, %s37
      %p48 = scmp.eq.s32.totalorder %s28, 0
      %p49 = por %p47, %p48
      %p50 = scmp.ne.s32.totalorder %s36, %s37
      %p51 = scmp.eq.s32.totalorder %s29, 1
      %p52 = por %p50, %p51
      %p54 = scmp.ne.s32.totalorder %s37, %s53
      %p55 = scmp.eq.s32.totalorder %s29, 0
      %p56 = por %p54, %p55
      %s57 = ssub.s32 %s23, %s30
      %p58 = scmp.eq.s32.totalorder %s57, 0
      %s60 = sadd.s32 %s59, 1
      %s61 = scalar_select %p58, %s59, %s60
      %p64 = pneg %p58
      %p65 = scmp.eq.s32.totalorder %s23, 1
      %p66 = por %p64, %p65
      %p67 = scmp.ne.s32.totalorder %s59, %s62
      %p68 = scmp.eq.s32.totalorder %s23, 0
      %p69 = por %p67, %p68
      %p70 = scmp.ne.s32.totalorder %s59, %s62
      %p71 = scmp.eq.s32.totalorder %s28, 1
      %p72 = por %p70, %p71
      %p73 = scmp.ne.s32.totalorder %s62, %s63
      %p74 = scmp.eq.s32.totalorder %s28, 0
      %p75 = por %p73, %p74
      %p76 = scmp.ne.s32.totalorder %s62, %s63
      %p77 = scmp.eq.s32.totalorder %s29, 1
      %p78 = por %p76, %p77
      %p80 = scmp.ne.s32.totalorder %s63, %s79
      %p81 = scmp.eq.s32.totalorder %s29, 0
      %p82 = por %p80, %p81
      %s84 = sadd.s32 %s83, 1
      %p87 = scmp.eq.s32.totalorder %s23, 1
      %p88 = scmp.ne.s32.totalorder %s83, %s85
      %p89 = scmp.eq.s32.totalorder %s23, 0
      %p90 = por %p88, %p89
      %p91 = scmp.ne.s32.totalorder %s83, %s85
      %p92 = scmp.eq.s32.totalorder %s28, 1
      %p93 = por %p91, %p92
      %p94 = scmp.ne.s32.totalorder %s85, %s86
      %p95 = scmp.eq.s32.totalorder %s28, 0
      %p96 = por %p94, %p95
      %p97 = scmp.ne.s32.totalorder %s85, %s86
      %p98 = scmp.eq.s32.totalorder %s29, 1
      %p99 = por %p97, %p98
      %p101 = scmp.ne.s32.totalorder %s86, %s100
      %p102 = scmp.eq.s32.totalorder %s29, 0
      %p103 = por %p101, %p102
      %s105 = sadd.s32 %s104, 1
      %p108 = scmp.eq.s32.totalorder %s23, 1
      %p109 = scmp.ne.s32.totalorder %s104, %s106
      %p110 = scmp.eq.s32.totalorder %s23, 0
      %p111 = por %p109, %p110
      %p112 = scmp.ne.s32.totalorder %s104, %s106
      %p113 = scmp.eq.s32.totalorder %s28, 1
      %p114 = por %p112, %p113
      %p115 = scmp.ne.s32.totalorder %s106, %s107
      %p116 = scmp.eq.s32.totalorder %s28, 0
      %p117 = por %p115, %p116
      %p118 = scmp.ne.s32.totalorder %s106, %s107
      %p119 = scmp.eq.s32.totalorder %s29, 1
      %p120 = por %p118, %p119
      %p122 = scmp.ne.s32.totalorder %s107, %s121
      %p123 = scmp.eq.s32.totalorder %s29, 0
      %p124 = por %p122, %p123
      %s126 = sadd.s32 %s125, 1
      %p129 = scmp.eq.s32.totalorder %s23, 1
      %p130 = scmp.ne.s32.totalorder %s125, %s127
      %p131 = scmp.eq.s32.totalorder %s23, 0
      %p132 = por %p130, %p131
      %p133 = scmp.ne.s32.totalorder %s125, %s127
      %p134 = scmp.eq.s32.totalorder %s28, 1
      %p135 = por %p133, %p134
      %p136 = scmp.ne.s32.totalorder %s127, %s128
      %p137 = scmp.eq.s32.totalorder %s28, 0
      %p138 = por %p136, %p137
      %p139 = scmp.ne.s32.totalorder %s127, %s128
      %p140 = scmp.eq.s32.totalorder %s29, 1
      %p141 = por %p139, %p140
      %p143 = scmp.ne.s32.totalorder %s128, %s142
      %p144 = scmp.eq.s32.totalorder %s29, 0
      %p145 = por %p143, %p144
      %s147 = sadd.s32 %s146, 1
      %p150 = scmp.eq.s32.totalorder %s23, 1
      %p151 = scmp.ne.s32.totalorder %s146, %s148
      %p152 = scmp.eq.s32.totalorder %s23, 0
      %p153 = por %p151, %p152
      %p154 = scmp.ne.s32.totalorder %s146, %s148
      %p155 = scmp.eq.s32.totalorder %s28, 1
      %p156 = por %p154, %p155
      %p157 = scmp.ne.s32.totalorder %s148, %s149
      %p158 = scmp.eq.s32.totalorder %s28, 0
      %p159 = por %p157, %p158
      %p160 = scmp.ne.s32.totalorder %s148, %s149
      %p161 = scmp.eq.s32.totalorder %s29, 1
      %p162 = por %p160, %p161
      %p164 = scmp.ne.s32.totalorder %s149, %s163
      %p165 = scmp.eq.s32.totalorder %s29, 0
      %p166 = por %p164, %p165
      %s167 = ssub.s32 %s23, %s30
      %p168 = scmp.eq.s32.totalorder %s167, 0
      %s170 = sadd.s32 %s169, 1
      %s171 = scalar_select %p168, %s169, %s170
      %p174 = pneg %p168
      %p175 = scmp.eq.s32.totalorder %s23, 1
      %p176 = por %p174, %p175
      %p177 = scmp.ne.s32.totalorder %s169, %s172
      %p178 = scmp.eq.s32.totalorder %s23, 0
      %p179 = por %p177, %p178
      %p180 = scmp.ne.s32.totalorder %s169, %s172
      %p181 = scmp.eq.s32.totalorder %s28, 1
      %p182 = por %p180, %p181
      %p183 = scmp.ne.s32.totalorder %s172, %s173
      %p184 = scmp.eq.s32.totalorder %s28, 0
      %p185 = por %p183, %p184
      %p186 = scmp.ne.s32.totalorder %s172, %s173
      %p187 = scmp.eq.s32.totalorder %s29, 1
      %p188 = por %p186, %p187
      %p190 = scmp.ne.s32.totalorder %s173, %s189
      %p191 = scmp.eq.s32.totalorder %s29, 0
      %p192 = por %p190, %p191
      %p193 = scmp.le.s32.totalorder 1, %s23
      %p194 = scmp.lt.s32.totalorder %s23, 3
      %p195 = pnand %p193, %p194
      %p196 = pneg %p195
      // Predicated region
      $region9: #{tpu_custom_call.1} parent=5 // pred_check
        _
      $region10: #{tpu_custom_call.1} parent=5 // pred_check_branch
        %198 = sbr.rel (%p195) target = $region12
      $region11: #{tpu_custom_call.1} parent=5 // pred_region
        %s199 = ssub.s32 %s23, 1
        // Predicated region
        $region13: #{tpu_custom_call.1} parent=11 // pred_check
          %p200 = pneg %p96
        $region14: #{tpu_custom_call.1} parent=11 // pred_check_branch
          %202 = sbr.rel (%p200) target = $region16
        $region15: #{tpu_custom_call.1} parent=11 // pred_region
          %s204 = ssub.s32 256, 256
          %205 = vsyncadd [#allocation6], %s204
          %s206 = sshll.u32 [#allocation7], 4
          %s207 = int_to_ptr.vmem [resolvable:$true] %s206
          %212 = dma.hbm_to_vmem [thread:$0]  %s2, 256, %s207, [#allocation6], 128, 128, 8
        $region16: #{tpu_custom_call.1} parent=11 // pred_fallthru
          _
        // Predicated region
        $region17: #{tpu_custom_call.1} parent=11 // pred_check
          %p213 = pneg %p117
        $region18: #{tpu_custom_call.1} parent=11 // pred_check_branch
          %215 = sbr.rel (%p213) target = $region20
        $region19: #{tpu_custom_call.1} parent=11 // pred_region
          %s217 = ssub.s32 256, 256
          %218 = vsyncadd [#allocation9], %s217
          %s219 = sshll.u32 [#allocation8], 4
          %s220 = int_to_ptr.vmem [resolvable:$true] %s219
          %225 = dma.hbm_to_vmem [thread:$0]  %s3, 256, %s220, [#allocation9], 128, 128, 8
        $region20: #{tpu_custom_call.1} parent=11 // pred_fallthru
          _
        // Predicated region
        $region21: #{tpu_custom_call.1} parent=11 // pred_check
          %p226 = pneg %p138
        $region22: #{tpu_custom_call.1} parent=11 // pred_check_branch
          %228 = sbr.rel (%p226) target = $region24
        $region23: #{tpu_custom_call.1} parent=11 // pred_region
          %s230 = ssub.s32 256, 256
          %231 = vsyncadd [#allocation9], %s230
          %s232 = sshll.u32 [#allocation10], 4
          %s233 = int_to_ptr.vmem [resolvable:$true] %s232
          %238 = dma.hbm_to_vmem [thread:$0]  %s4, 256, %s233, [#allocation9], 128, 128, 8
        $region24: #{tpu_custom_call.1} parent=11 // pred_fallthru
          _
        // Predicated region
        $region25: #{tpu_custom_call.1} parent=11 // pred_check
          %p239 = pneg %p159
        $region26: #{tpu_custom_call.1} parent=11 // pred_check_branch
          %241 = sbr.rel (%p239) target = $region28
        $region27: #{tpu_custom_call.1} parent=11 // pred_region
          %s243 = ssub.s32 256, 256
          %244 = vsyncadd [#allocation12], %s243
          %s245 = sshll.u32 [#allocation11], 4
          %s246 = int_to_ptr.vmem [resolvable:$true] %s245
          %251 = dma.hbm_to_vmem [thread:$0]  %s5, 256, %s246, [#allocation12], 128, 128, 8
        $region28: #{tpu_custom_call.1} parent=11 // pred_fallthru
          _
      $region12: #{tpu_custom_call.1} parent=5 // pred_fallthru
        _
      %p252 = scmp.lt.s32.totalorder %s23, 2
      // Predicated region
      $region29: #{tpu_custom_call.1} parent=5 // pred_check
        %p253 = pneg %p252
      $region30: #{tpu_custom_call.1} parent=5 // pred_check_branch
        %255 = sbr.rel (%p253) target = $region32
      $region31: #{tpu_custom_call.1} parent=5 // pred_region
        // Predicated region
        $region33: #{tpu_custom_call.1} parent=31 // pred_check
          %p256 = pneg %p43
        $region34: #{tpu_custom_call.1} parent=31 // pred_check_branch
          %258 = sbr.rel (%p256) target = $region36
        $region35: #{tpu_custom_call.1} parent=31 // pred_region
          %s259 = sand.u32 %s33, 1
          %s260 = scalar_lea.sflag [#allocation3], %s259
          %s261 = sand.u32 %s33, 1
          %s262 = smul.addr %s261, 64
          %s263 = scalar_lea.vmem [#allocation2], %s262
          %s264 = smul.u32 4, %s23
          %s266 = ssub.s32 1024, 1024
          %267 = vsyncadd %s260, %s266
          %s268 = smul.addr %s264, 2
          %s269 = smul.addr %s268, 128
          %s270 = scalar_lea.hbm %s0, %s269
          %s271 = sshll.u32 %s263, 4
          %s272 = int_to_ptr.vmem [resolvable:$true] %s271
          %277 = dma.hbm_to_vmem [thread:$0]  %s270, 1024, %s272, %s260, 128, 128, 8
        $region36: #{tpu_custom_call.1} parent=31 // pred_fallthru
          _
        // Predicated region
        $region37: #{tpu_custom_call.1} parent=31 // pred_check
          %p278 = pneg %p69
        $region38: #{tpu_custom_call.1} parent=31 // pred_check_branch
          %280 = sbr.rel (%p278) target = $region40
        $region39: #{tpu_custom_call.1} parent=31 // pred_region
          %s281 = sand.u32 %s23, 1
          %s282 = scalar_lea.sflag [#allocation6], %s281
          %s283 = sand.u32 %s59, 1
          %s284 = smul.addr %s283, 64
          %s285 = scalar_lea.vmem [#allocation5], %s284
          %s286 = smul.u32 4, %s23
          %s288 = ssub.s32 1024, 1024
          %289 = vsyncadd %s282, %s288
          %s290 = smul.addr %s286, 2
          %s291 = smul.addr %s290, 128
          %s292 = scalar_lea.hbm %s1, %s291
          %s293 = sshll.u32 %s285, 4
          %s294 = int_to_ptr.vmem [resolvable:$true] %s293
          %299 = dma.hbm_to_vmem [thread:$0]  %s292, 1024, %s294, %s282, 128, 128, 8
        $region40: #{tpu_custom_call.1} parent=31 // pred_fallthru
          _
      $region32: #{tpu_custom_call.1} parent=5 // pred_fallthru
        _
      %p300 = scmp.le.s32.totalorder 1, %s23
      %p301 = scmp.lt.s32.totalorder %s23, 3
      %p302 = pnand %p300, %p301
      %p303 = pneg %p302
      // Predicated region
      $region41: #{tpu_custom_call.1} parent=5 // pred_check
        _
      $region42: #{tpu_custom_call.1} parent=5 // pred_check_branch
        %305 = sbr.rel (%p302) target = $region44
      $region43: #{tpu_custom_call.1} parent=5 // pred_region
        %s306 = ssub.s32 %s23, 1
        %s307 = sand.u32 %s36, 1
        %s308 = scalar_lea.sflag [#allocation3], %s307
        %s309 = sand.u32 %s36, 1
        %s310 = smul.addr %s309, 64
        %s311 = scalar_lea.vmem [#allocation2], %s310
        // Predicated region
        $region45: #{tpu_custom_call.1} parent=43 // pred_check
          %p312 = pneg %p49
        $region46: #{tpu_custom_call.1} parent=43 // pred_check_branch
          %314 = sbr.rel (%p312) target = $region48
        $region47: #{tpu_custom_call.1} parent=43 // pred_region
          %315 = dma.done %s308, 1024
        $region48: #{tpu_custom_call.1} parent=43 // pred_fallthru
          _
        %s316 = sand.u32 %s28, 1
        %s317 = scalar_lea.sflag [#allocation6], %s316
        %s318 = sand.u32 %s62, 1
        %s319 = smul.addr %s318, 64
        %s320 = scalar_lea.vmem [#allocation5], %s319
        // Predicated region
        $region49: #{tpu_custom_call.1} parent=43 // pred_check
          %p321 = pneg %p75
        $region50: #{tpu_custom_call.1} parent=43 // pred_check_branch
          %323 = sbr.rel (%p321) target = $region52
        $region51: #{tpu_custom_call.1} parent=43 // pred_region
          %324 = dma.done %s317, 1024
        $region52: #{tpu_custom_call.1} parent=43 // pred_fallthru
          _
        // Predicated region
        $region53: #{tpu_custom_call.1} parent=43 // pred_check
          %p325 = pneg %p96
        $region54: #{tpu_custom_call.1} parent=43 // pred_check_branch
          %327 = sbr.rel (%p325) target = $region56
        $region55: #{tpu_custom_call.1} parent=43 // pred_region
          %328 = dma.done [#allocation6], 256
        $region56: #{tpu_custom_call.1} parent=43 // pred_fallthru
          _
        // Predicated region
        $region57: #{tpu_custom_call.1} parent=43 // pred_check
          %p329 = pneg %p117
        $region58: #{tpu_custom_call.1} parent=43 // pred_check_branch
          %331 = sbr.rel (%p329) target = $region60
        $region59: #{tpu_custom_call.1} parent=43 // pred_region
          %332 = dma.done [#allocation9], 256
        $region60: #{tpu_custom_call.1} parent=43 // pred_fallthru
          _
        // Predicated region
        $region61: #{tpu_custom_call.1} parent=43 // pred_check
          %p333 = pneg %p138
        $region62: #{tpu_custom_call.1} parent=43 // pred_check_branch
          %335 = sbr.rel (%p333) target = $region64
        $region63: #{tpu_custom_call.1} parent=43 // pred_region
          %336 = dma.done [#allocation9], 256
        $region64: #{tpu_custom_call.1} parent=43 // pred_fallthru
          _
        // Predicated region
        $region65: #{tpu_custom_call.1} parent=43 // pred_check
          %p337 = pneg %p159
        $region66: #{tpu_custom_call.1} parent=43 // pred_check_branch
          %339 = sbr.rel (%p337) target = $region68
        $region67: #{tpu_custom_call.1} parent=43 // pred_region
          %340 = dma.done [#allocation12], 256
        $region68: #{tpu_custom_call.1} parent=43 // pred_fallthru
          _
        %s341 = sand.u32 %s36, 1
        %s342 = scalar_lea.sflag [#allocation3], %s341
        %s343 = sand.u32 %s36, 1
        %s344 = smul.addr %s343, 64
        %s345 = scalar_lea.vmem [#allocation2], %s344
        %p346 = pneg %p49
        %p347 = pneg %p46
        %s348 = sand.u32 %s28, 1
        %s349 = scalar_lea.sflag [#allocation6], %s348
        %s350 = sand.u32 %s62, 1
        %s351 = smul.addr %s350, 64
        %s352 = scalar_lea.vmem [#allocation5], %s351
        %p353 = pneg %p75
        %p354 = pneg %p72
        %p355 = pneg %p96
        %p356 = pneg %p93
        %p357 = pneg %p117
        %p358 = pneg %p114
        %p359 = pneg %p138
        %p360 = pneg %p135
        %p361 = pneg %p159
        %p362 = pneg %p156
        %p363 = pneg %p185
        %p364 = pneg %p182
        %s365 = sand.u32 %s172, 1
        %s366 = scalar_lea.sflag [#allocation4], %s365
        %s367 = sand.u32 %s172, 1
        %s368 = smul.addr %s367, 8
        %s369 = scalar_lea.vmem [#allocation13], %s368
        %s370 = smul.u32 4, %s28
        %s371 = smul.u32 4, %s28
        %v372 = vld [vmem:[#allocation7] sm:$0xff]
        %v373 = vld [vmem:[#allocation7 + $0x8] sm:$0xff]
        %v374 = vld [vmem:[#allocation8] sm:$0xff]
        %v375 = vld [vmem:[#allocation8 + $0x8] sm:$0xff]
        %v376 = vld [vmem:[#allocation10] sm:$0xff]
        %v377 = vld [vmem:[#allocation10 + $0x8] sm:$0xff]
        %v378 = vld [vmem:[#allocation11] sm:$0xff]
        %v379 = vld [vmem:[#allocation11 + $0x8] sm:$0xff]
        %v380 = vld [vmem:[%s311] sm:$0xff]
        %v381 = vld [vmem:[%s311 + $0x8] sm:$0xff]
        %v382 = vld [vmem:[%s320] sm:$0xff]
        %v383 = vld [vmem:[%s320 + $0x8] sm:$0xff]
        %vm384 = vcmask 130048
        %v386 = vsel %vm384, %v380, 0
        %v389 = vsel %vm384, %v381, 0
        %391 = vmatprep.subr.mxu0 0.0
        %392 = vmatpush1.msra.mxu0 0.0
        %393 = vmatprep.subr.mxu0 0.0
        %394 = vmatpush1.msra.mxu0 0.0
        %395 = vmatprep.subr.mxu0 0.0
        %396 = vmatpush1.msra.mxu0 0.0
        %397 = vmatprep.subr.mxu0 0.0
        %398 = vmatpush1.msra.mxu0 0.0
        %399 = vmatprep.subr.mxu0 0.0
        %400 = vmatpush1.msra.mxu0 0.0
        %401 = vmatprep.subr.mxu0 0.0
        %402 = vmatpush1.msra.mxu0 0.0
        %403 = vmatprep.subr.mxu0 0.0
        %404 = vmatpush1.msra.mxu0 0.0
        %405 = vmatprep.subr.mxu0 0.0
        %406 = vmatpush1.msra.mxu0 0.0
        %407 = vmatprep.subr.mxu0 0.0
        %408 = vmatpush1.msra.mxu0 0.0
        %409 = vmatprep.subr.mxu0 0.0
        %410 = vmatpush1.msra.mxu0 0.0
        %411 = vmatprep.subr.mxu0 0.0
        %412 = vmatpush1.msra.mxu0 0.0
        %413 = vmatprep.subr.mxu0 0.0
        %414 = vmatpush1.msra.mxu0 0.0
        %415 = vmatprep.subr.mxu0 0.0
        %416 = vmatpush1.msra.mxu0 0.0
        %417 = vmatprep.subr.mxu0 0.0
        %418 = vmatpush1.msra.mxu0 0.0
        %419 = vmatprep.subr.mxu0 0.0
        %420 = vmatpush1.msra.mxu0 %v373
        %421 = vmatprep.subr.mxu0 0.0
        %422 = vmatpush1.msra.mxu0 %v372
        %423 = vmatprep.subr.mxu0 0.0
        %424 = vmatpush2.msra.mxu0 0.0
        %425 = vmatprep.subr.mxu0 0.0
        %426 = vmatpush2.msra.mxu0 0.0
        %427 = vmatprep.subr.mxu0 0.0
        %428 = vmatpush2.msra.mxu0 0.0
        %429 = vmatprep.subr.mxu0 0.0
        %430 = vmatpush2.msra.mxu0 0.0
        %431 = vmatprep.subr.mxu0 0.0
        %432 = vmatpush2.msra.mxu0 0.0
        %433 = vmatprep.subr.mxu0 0.0
        %434 = vmatpush2.msra.mxu0 0.0
        %435 = vmatprep.subr.mxu0 0.0
        %436 = vmatpush2.msra.mxu0 0.0
        %437 = vmatprep.subr.mxu0 0.0
        %438 = vmatpush2.msra.mxu0 0.0
        %439 = vmatprep.subr.mxu0 0.0
        %440 = vmatpush2.msra.mxu0 0.0
        %441 = vmatprep.subr.mxu0 0.0
        %442 = vmatpush2.msra.mxu0 0.0
        %443 = vmatprep.subr.mxu0 0.0
        %444 = vmatpush2.msra.mxu0 0.0
        %445 = vmatprep.subr.mxu0 0.0
        %446 = vmatpush2.msra.mxu0 0.0
        %447 = vmatprep.subr.mxu0 0.0
        %448 = vmatpush2.msra.mxu0 0.0
        %449 = vmatprep.subr.mxu0 0.0
        %450 = vmatpush2.msra.mxu0 0.0
        %451 = vmatprep.subr.mxu0 0.0
        %452 = vmatpush2.msra.mxu0 0.0
        %453 = vmatprep.subr.mxu0 0.0
        %454 = vmatpush2.msra.mxu0 0.0
        %455 = vmatprep.mubr.f32.mxu0 0.0
        %456 = vmatmul.mubr.f32.gmra.mxu0 %v386
        %v457 = vpop.f32.mrf.mxu0
        %v458 = vadd.f32 0.0, %v457
        %v459 = vpop.f32.mrf.mxu0
        %460 = vmatprep.mubr.f32.mxu0 0.0
        %461 = vmatmul.mubr.f32.gmra.mxu0 %v389
        %v462 = vpop.f32.mrf.mxu0
        %v463 = vadd.f32 0.0, %v462
        %v464 = vpop.f32.mrf.mxu0
        %465 = vdwg.mxu0
        %466 = vmatprep.subr.mxu0 0.0
        %467 = vmatpush1.msra.mxu0 0.0
        %468 = vmatprep.subr.mxu0 0.0
        %469 = vmatpush1.msra.mxu0 0.0
        %470 = vmatprep.subr.mxu0 0.0
        %471 = vmatpush1.msra.mxu0 0.0
        %472 = vmatprep.subr.mxu0 0.0
        %473 = vmatpush1.msra.mxu0 0.0
        %474 = vmatprep.subr.mxu0 0.0
        %475 = vmatpush1.msra.mxu0 0.0
        %476 = vmatprep.subr.mxu0 0.0
        %477 = vmatpush1.msra.mxu0 0.0
        %478 = vmatprep.subr.mxu0 0.0
        %479 = vmatpush1.msra.mxu0 0.0
        %480 = vmatprep.subr.mxu0 0.0
        %481 = vmatpush1.msra.mxu0 0.0
        %482 = vmatprep.subr.mxu0 0.0
        %483 = vmatpush1.msra.mxu0 0.0
        %484 = vmatprep.subr.mxu0 0.0
        %485 = vmatpush1.msra.mxu0 0.0
        %486 = vmatprep.subr.mxu0 0.0
        %487 = vmatpush1.msra.mxu0 0.0
        %488 = vmatprep.subr.mxu0 0.0
        %489 = vmatpush1.msra.mxu0 0.0
        %490 = vmatprep.subr.mxu0 0.0
        %491 = vmatpush1.msra.mxu0 0.0
        %492 = vmatprep.subr.mxu0 0.0
        %493 = vmatpush1.msra.mxu0 0.0
        %494 = vmatprep.subr.mxu0 0.0
        %495 = vmatpush1.msra.mxu0 %v375
        %496 = vmatprep.subr.mxu0 0.0
        %497 = vmatpush1.msra.mxu0 %v374
        %498 = vmatprep.subr.mxu0 0.0
        %499 = vmatpush2.msra.mxu0 0.0
        %500 = vmatprep.subr.mxu0 0.0
        %501 = vmatpush2.msra.mxu0 0.0
        %502 = vmatprep.subr.mxu0 0.0
        %503 = vmatpush2.msra.mxu0 0.0
        %504 = vmatprep.subr.mxu0 0.0
        %505 = vmatpush2.msra.mxu0 0.0
        %506 = vmatprep.subr.mxu0 0.0
        %507 = vmatpush2.msra.mxu0 0.0
        %508 = vmatprep.subr.mxu0 0.0
        %509 = vmatpush2.msra.mxu0 0.0
        %510 = vmatprep.subr.mxu0 0.0
        %511 = vmatpush2.msra.mxu0 0.0
        %512 = vmatprep.subr.mxu0 0.0
        %513 = vmatpush2.msra.mxu0 0.0
        %514 = vmatprep.subr.mxu0 0.0
        %515 = vmatpush2.msra.mxu0 0.0
        %516 = vmatprep.subr.mxu0 0.0
        %517 = vmatpush2.msra.mxu0 0.0
        %518 = vmatprep.subr.mxu0 0.0
        %519 = vmatpush2.msra.mxu0 0.0
        %520 = vmatprep.subr.mxu0 0.0
        %521 = vmatpush2.msra.mxu0 0.0
        %522 = vmatprep.subr.mxu0 0.0
        %523 = vmatpush2.msra.mxu0 0.0
        %524 = vmatprep.subr.mxu0 0.0
        %525 = vmatpush2.msra.mxu0 0.0
        %526 = vmatprep.subr.mxu0 0.0
        %527 = vmatpush2.msra.mxu0 0.0
        %528 = vmatprep.subr.mxu0 0.0
        %529 = vmatpush2.msra.mxu0 0.0
        %530 = vmatprep.mubr.f32.mxu0 0.0
        %531 = vmatmul.mubr.f32.gmra.mxu0 %v386
        %v532 = vpop.f32.mrf.mxu0
        %v533 = vadd.f32 0.0, %v532
        %v534 = vpop.f32.mrf.mxu0
        %535 = vmatprep.mubr.f32.mxu0 0.0
        %536 = vmatmul.mubr.f32.gmra.mxu0 %v389
        %v537 = vpop.f32.mrf.mxu0
        %v538 = vadd.f32 0.0, %v537
        %v539 = vpop.f32.mrf.mxu0
        %540 = vdwg.mxu0
        %v542 = vsel %vm384, %v382, 0
        %v545 = vsel %vm384, %v383, 0
        %547 = vmatprep.subr.mxu0 0.0
        %548 = vmatpush1.msra.mxu0 0.0
        %549 = vmatprep.subr.mxu0 0.0
        %550 = vmatpush1.msra.mxu0 0.0
        %551 = vmatprep.subr.mxu0 0.0
        %552 = vmatpush1.msra.mxu0 0.0
        %553 = vmatprep.subr.mxu0 0.0
        %554 = vmatpush1.msra.mxu0 0.0
        %555 = vmatprep.subr.mxu0 0.0
        %556 = vmatpush1.msra.mxu0 0.0
        %557 = vmatprep.subr.mxu0 0.0
        %558 = vmatpush1.msra.mxu0 0.0
        %559 = vmatprep.subr.mxu0 0.0
        %560 = vmatpush1.msra.mxu0 0.0
        %561 = vmatprep.subr.mxu0 0.0
        %562 = vmatpush1.msra.mxu0 0.0
        %563 = vmatprep.subr.mxu0 0.0
        %564 = vmatpush1.msra.mxu0 0.0
        %565 = vmatprep.subr.mxu0 0.0
        %566 = vmatpush1.msra.mxu0 0.0
        %567 = vmatprep.subr.mxu0 0.0
        %568 = vmatpush1.msra.mxu0 0.0
        %569 = vmatprep.subr.mxu0 0.0
        %570 = vmatpush1.msra.mxu0 0.0
        %571 = vmatprep.subr.mxu0 0.0
        %572 = vmatpush1.msra.mxu0 0.0
        %573 = vmatprep.subr.mxu0 0.0
        %574 = vmatpush1.msra.mxu0 0.0
        %575 = vmatprep.subr.mxu0 0.0
        %576 = vmatpush1.msra.mxu0 %v373
        %577 = vmatprep.subr.mxu0 0.0
        %578 = vmatpush1.msra.mxu0 %v372
        %579 = vmatprep.subr.mxu0 0.0
        %580 = vmatpush2.msra.mxu0 0.0
        %581 = vmatprep.subr.mxu0 0.0
        %582 = vmatpush2.msra.mxu0 0.0
        %583 = vmatprep.subr.mxu0 0.0
        %584 = vmatpush2.msra.mxu0 0.0
        %585 = vmatprep.subr.mxu0 0.0
        %586 = vmatpush2.msra.mxu0 0.0
        %587 = vmatprep.subr.mxu0 0.0
        %588 = vmatpush2.msra.mxu0 0.0
        %589 = vmatprep.subr.mxu0 0.0
        %590 = vmatpush2.msra.mxu0 0.0
        %591 = vmatprep.subr.mxu0 0.0
        %592 = vmatpush2.msra.mxu0 0.0
        %593 = vmatprep.subr.mxu0 0.0
        %594 = vmatpush2.msra.mxu0 0.0
        %595 = vmatprep.subr.mxu0 0.0
        %596 = vmatpush2.msra.mxu0 0.0
        %597 = vmatprep.subr.mxu0 0.0
        %598 = vmatpush2.msra.mxu0 0.0
        %599 = vmatprep.subr.mxu0 0.0
        %600 = vmatpush2.msra.mxu0 0.0
        %601 = vmatprep.subr.mxu0 0.0
        %602 = vmatpush2.msra.mxu0 0.0
        %603 = vmatprep.subr.mxu0 0.0
        %604 = vmatpush2.msra.mxu0 0.0
        %605 = vmatprep.subr.mxu0 0.0
        %606 = vmatpush2.msra.mxu0 0.0
        %607 = vmatprep.subr.mxu0 0.0
        %608 = vmatpush2.msra.mxu0 0.0
        %609 = vmatprep.subr.mxu0 0.0
        %610 = vmatpush2.msra.mxu0 0.0
        %611 = vmatprep.mubr.f32.mxu0 0.0
        %612 = vmatmul.mubr.f32.gmra.mxu0 %v542
        %v613 = vpop.f32.mrf.mxu0
        %v614 = vadd.f32 0.0, %v613
        %v615 = vpop.f32.mrf.mxu0
        %616 = vmatprep.mubr.f32.mxu0 0.0
        %617 = vmatmul.mubr.f32.gmra.mxu0 %v545
        %v618 = vpop.f32.mrf.mxu0
        %v619 = vadd.f32 0.0, %v618
        %v620 = vpop.f32.mrf.mxu0
        %621 = vdwg.mxu0
        %622 = vmatprep.subr.mxu0 0.0
        %623 = vmatpush1.msra.mxu0 0.0
        %624 = vmatprep.subr.mxu0 0.0
        %625 = vmatpush1.msra.mxu0 0.0
        %626 = vmatprep.subr.mxu0 0.0
        %627 = vmatpush1.msra.mxu0 0.0
        %628 = vmatprep.subr.mxu0 0.0
        %629 = vmatpush1.msra.mxu0 0.0
        %630 = vmatprep.subr.mxu0 0.0
        %631 = vmatpush1.msra.mxu0 0.0
        %632 = vmatprep.subr.mxu0 0.0
        %633 = vmatpush1.msra.mxu0 0.0
        %634 = vmatprep.subr.mxu0 0.0
        %635 = vmatpush1.msra.mxu0 0.0
        %636 = vmatprep.subr.mxu0 0.0
        %637 = vmatpush1.msra.mxu0 0.0
        %638 = vmatprep.subr.mxu0 0.0
        %639 = vmatpush1.msra.mxu0 0.0
        %640 = vmatprep.subr.mxu0 0.0
        %641 = vmatpush1.msra.mxu0 0.0
        %642 = vmatprep.subr.mxu0 0.0
        %643 = vmatpush1.msra.mxu0 0.0
        %644 = vmatprep.subr.mxu0 0.0
        %645 = vmatpush1.msra.mxu0 0.0
        %646 = vmatprep.subr.mxu0 0.0
        %647 = vmatpush1.msra.mxu0 0.0
        %648 = vmatprep.subr.mxu0 0.0
        %649 = vmatpush1.msra.mxu0 0.0
        %650 = vmatprep.subr.mxu0 0.0
        %651 = vmatpush1.msra.mxu0 %v375
        %652 = vmatprep.subr.mxu0 0.0
        %653 = vmatpush1.msra.mxu0 %v374
        %654 = vmatprep.subr.mxu0 0.0
        %655 = vmatpush2.msra.mxu0 0.0
        %656 = vmatprep.subr.mxu0 0.0
        %657 = vmatpush2.msra.mxu0 0.0
        %658 = vmatprep.subr.mxu0 0.0
        %659 = vmatpush2.msra.mxu0 0.0
        %660 = vmatprep.subr.mxu0 0.0
        %661 = vmatpush2.msra.mxu0 0.0
        %662 = vmatprep.subr.mxu0 0.0
        %663 = vmatpush2.msra.mxu0 0.0
        %664 = vmatprep.subr.mxu0 0.0
        %665 = vmatpush2.msra.mxu0 0.0
        %666 = vmatprep.subr.mxu0 0.0
        %667 = vmatpush2.msra.mxu0 0.0
        %668 = vmatprep.subr.mxu0 0.0
        %669 = vmatpush2.msra.mxu0 0.0
        %670 = vmatprep.subr.mxu0 0.0
        %671 = vmatpush2.msra.mxu0 0.0
        %672 = vmatprep.subr.mxu0 0.0
        %673 = vmatpush2.msra.mxu0 0.0
        %674 = vmatprep.subr.mxu0 0.0
        %675 = vmatpush2.msra.mxu0 0.0
        %676 = vmatprep.subr.mxu0 0.0
        %677 = vmatpush2.msra.mxu0 0.0
        %678 = vmatprep.subr.mxu0 0.0
        %679 = vmatpush2.msra.mxu0 0.0
        %680 = vmatprep.subr.mxu0 0.0
        %681 = vmatpush2.msra.mxu0 0.0
        %682 = vmatprep.subr.mxu0 0.0
        %683 = vmatpush2.msra.mxu0 0.0
        %684 = vmatprep.subr.mxu0 0.0
        %685 = vmatpush2.msra.mxu0 0.0
        %686 = vmatprep.mubr.f32.mxu0 0.0
        %687 = vmatmul.mubr.f32.gmra.mxu0 %v542
        %v688 = vpop.f32.mrf.mxu0
        %v689 = vadd.f32 0.0, %v688
        %v690 = vpop.f32.mrf.mxu0
        %691 = vmatprep.mubr.f32.mxu0 0.0
        %692 = vmatmul.mubr.f32.gmra.mxu0 %v545
        %v693 = vpop.f32.mrf.mxu0
        %v694 = vadd.f32 0.0, %v693
        %v695 = vpop.f32.mrf.mxu0
        %696 = vdwg.mxu0
        %v698 = vsel %vm384, %v376, 0
        %v701 = vsel %vm384, %v377, 0
        %703 = vmatprep.subr.mxu0 0.0
        %704 = vmatpush1.msra.mxu0 0.0
        %705 = vmatprep.subr.mxu0 0.0
        %706 = vmatpush1.msra.mxu0 0.0
        %707 = vmatprep.subr.mxu0 0.0
        %708 = vmatpush1.msra.mxu0 0.0
        %709 = vmatprep.subr.mxu0 0.0
        %710 = vmatpush1.msra.mxu0 0.0
        %711 = vmatprep.subr.mxu0 0.0
        %712 = vmatpush1.msra.mxu0 0.0
        %713 = vmatprep.subr.mxu0 0.0
        %714 = vmatpush1.msra.mxu0 0.0
        %715 = vmatprep.subr.mxu0 0.0
        %716 = vmatpush1.msra.mxu0 0.0
        %717 = vmatprep.subr.mxu0 0.0
        %718 = vmatpush1.msra.mxu0 0.0
        %719 = vmatprep.subr.mxu0 0.0
        %720 = vmatpush1.msra.mxu0 0.0
        %721 = vmatprep.subr.mxu0 0.0
        %722 = vmatpush1.msra.mxu0 0.0
        %723 = vmatprep.subr.mxu0 0.0
        %724 = vmatpush1.msra.mxu0 0.0
        %725 = vmatprep.subr.mxu0 0.0
        %726 = vmatpush1.msra.mxu0 0.0
        %727 = vmatprep.subr.mxu0 0.0
        %728 = vmatpush1.msra.mxu0 0.0
        %729 = vmatprep.subr.mxu0 0.0
        %730 = vmatpush1.msra.mxu0 0.0
        %731 = vmatprep.subr.mxu0 0.0
        %732 = vmatpush1.msra.mxu0 %v463
        %733 = vmatprep.subr.mxu0 0.0
        %734 = vmatpush1.msra.mxu0 %v458
        %735 = vmatprep.subr.mxu0 0.0
        %736 = vmatpush2.msra.mxu0 0.0
        %737 = vmatprep.subr.mxu0 0.0
        %738 = vmatpush2.msra.mxu0 0.0
        %739 = vmatprep.subr.mxu0 0.0
        %740 = vmatpush2.msra.mxu0 0.0
        %741 = vmatprep.subr.mxu0 0.0
        %742 = vmatpush2.msra.mxu0 0.0
        %743 = vmatprep.subr.mxu0 0.0
        %744 = vmatpush2.msra.mxu0 0.0
        %745 = vmatprep.subr.mxu0 0.0
        %746 = vmatpush2.msra.mxu0 0.0
        %747 = vmatprep.subr.mxu0 0.0
        %748 = vmatpush2.msra.mxu0 0.0
        %749 = vmatprep.subr.mxu0 0.0
        %750 = vmatpush2.msra.mxu0 0.0
        %751 = vmatprep.subr.mxu0 0.0
        %752 = vmatpush2.msra.mxu0 0.0
        %753 = vmatprep.subr.mxu0 0.0
        %754 = vmatpush2.msra.mxu0 0.0
        %755 = vmatprep.subr.mxu0 0.0
        %756 = vmatpush2.msra.mxu0 0.0
        %757 = vmatprep.subr.mxu0 0.0
        %758 = vmatpush2.msra.mxu0 0.0
        %759 = vmatprep.subr.mxu0 0.0
        %760 = vmatpush2.msra.mxu0 0.0
        %761 = vmatprep.subr.mxu0 0.0
        %762 = vmatpush2.msra.mxu0 0.0
        %763 = vmatprep.subr.mxu0 0.0
        %764 = vmatpush2.msra.mxu0 0.0
        %765 = vmatprep.subr.mxu0 0.0
        %766 = vmatpush2.msra.mxu0 0.0
        %767 = vmatprep.mubr.f32.mxu0 0.0
        %768 = vmatmul.mubr.f32.gmra.mxu0 %v698
        %v769 = vpop.f32.mrf.mxu0
        %v770 = vadd.f32 0.0, %v769
        %v771 = vpop.f32.mrf.mxu0
        %772 = vmatprep.mubr.f32.mxu0 0.0
        %773 = vmatmul.mubr.f32.gmra.mxu0 %v701
        %v774 = vpop.f32.mrf.mxu0
        %v775 = vadd.f32 0.0, %v774
        %v776 = vpop.f32.mrf.mxu0
        %777 = vdwg.mxu0
        %v779 = vsel %vm384, %v378, 0
        %v782 = vsel %vm384, %v379, 0
        %784 = vmatprep.subr.mxu0 0.0
        %785 = vmatpush1.msra.mxu0 0.0
        %786 = vmatprep.subr.mxu0 0.0
        %787 = vmatpush1.msra.mxu0 0.0
        %788 = vmatprep.subr.mxu0 0.0
        %789 = vmatpush1.msra.mxu0 0.0
        %790 = vmatprep.subr.mxu0 0.0
        %791 = vmatpush1.msra.mxu0 0.0
        %792 = vmatprep.subr.mxu0 0.0
        %793 = vmatpush1.msra.mxu0 0.0
        %794 = vmatprep.subr.mxu0 0.0
        %795 = vmatpush1.msra.mxu0 0.0
        %796 = vmatprep.subr.mxu0 0.0
        %797 = vmatpush1.msra.mxu0 0.0
        %798 = vmatprep.subr.mxu0 0.0
        %799 = vmatpush1.msra.mxu0 0.0
        %800 = vmatprep.subr.mxu0 0.0
        %801 = vmatpush1.msra.mxu0 0.0
        %802 = vmatprep.subr.mxu0 0.0
        %803 = vmatpush1.msra.mxu0 0.0
        %804 = vmatprep.subr.mxu0 0.0
        %805 = vmatpush1.msra.mxu0 0.0
        %806 = vmatprep.subr.mxu0 0.0
        %807 = vmatpush1.msra.mxu0 0.0
        %808 = vmatprep.subr.mxu0 0.0
        %809 = vmatpush1.msra.mxu0 0.0
        %810 = vmatprep.subr.mxu0 0.0
        %811 = vmatpush1.msra.mxu0 0.0
        %812 = vmatprep.subr.mxu0 0.0
        %813 = vmatpush1.msra.mxu0 %v538
        %814 = vmatprep.subr.mxu0 0.0
        %815 = vmatpush1.msra.mxu0 %v533
        %816 = vmatprep.subr.mxu0 0.0
        %817 = vmatpush2.msra.mxu0 0.0
        %818 = vmatprep.subr.mxu0 0.0
        %819 = vmatpush2.msra.mxu0 0.0
        %820 = vmatprep.subr.mxu0 0.0
        %821 = vmatpush2.msra.mxu0 0.0
        %822 = vmatprep.subr.mxu0 0.0
        %823 = vmatpush2.msra.mxu0 0.0
        %824 = vmatprep.subr.mxu0 0.0
        %825 = vmatpush2.msra.mxu0 0.0
        %826 = vmatprep.subr.mxu0 0.0
        %827 = vmatpush2.msra.mxu0 0.0
        %828 = vmatprep.subr.mxu0 0.0
        %829 = vmatpush2.msra.mxu0 0.0
        %830 = vmatprep.subr.mxu0 0.0
        %831 = vmatpush2.msra.mxu0 0.0
        %832 = vmatprep.subr.mxu0 0.0
        %833 = vmatpush2.msra.mxu0 0.0
        %834 = vmatprep.subr.mxu0 0.0
        %835 = vmatpush2.msra.mxu0 0.0
        %836 = vmatprep.subr.mxu0 0.0
        %837 = vmatpush2.msra.mxu0 0.0
        %838 = vmatprep.subr.mxu0 0.0
        %839 = vmatpush2.msra.mxu0 0.0
        %840 = vmatprep.subr.mxu0 0.0
        %841 = vmatpush2.msra.mxu0 0.0
        %842 = vmatprep.subr.mxu0 0.0
        %843 = vmatpush2.msra.mxu0 0.0
        %844 = vmatprep.subr.mxu0 0.0
        %845 = vmatpush2.msra.mxu0 0.0
        %846 = vmatprep.subr.mxu0 0.0
        %847 = vmatpush2.msra.mxu0 0.0
        %848 = vmatprep.mubr.f32.mxu0 0.0
        %849 = vmatmul.mubr.f32.gmra.mxu0 %v779
        %v850 = vpop.f32.mrf.mxu0
        %v851 = vadd.f32 0.0, %v850
        %v852 = vpop.f32.mrf.mxu0
        %853 = vmatprep.mubr.f32.mxu0 0.0
        %854 = vmatmul.mubr.f32.gmra.mxu0 %v782
        %v855 = vpop.f32.mrf.mxu0
        %v856 = vadd.f32 0.0, %v855
        %v857 = vpop.f32.mrf.mxu0
        %858 = vdwg.mxu0
        %v859 = vsub.f32 %v770, %v851
        %v860 = vsub.f32 %v775, %v856
        %861 = vmatprep.subr.mxu0 0.0
        %862 = vmatpush1.msra.mxu0 0.0
        %863 = vmatprep.subr.mxu0 0.0
        %864 = vmatpush1.msra.mxu0 0.0
        %865 = vmatprep.subr.mxu0 0.0
        %866 = vmatpush1.msra.mxu0 0.0
        %867 = vmatprep.subr.mxu0 0.0
        %868 = vmatpush1.msra.mxu0 0.0
        %869 = vmatprep.subr.mxu0 0.0
        %870 = vmatpush1.msra.mxu0 0.0
        %871 = vmatprep.subr.mxu0 0.0
        %872 = vmatpush1.msra.mxu0 0.0
        %873 = vmatprep.subr.mxu0 0.0
        %874 = vmatpush1.msra.mxu0 0.0
        %875 = vmatprep.subr.mxu0 0.0
        %876 = vmatpush1.msra.mxu0 0.0
        %877 = vmatprep.subr.mxu0 0.0
        %878 = vmatpush1.msra.mxu0 0.0
        %879 = vmatprep.subr.mxu0 0.0
        %880 = vmatpush1.msra.mxu0 0.0
        %881 = vmatprep.subr.mxu0 0.0
        %882 = vmatpush1.msra.mxu0 0.0
        %883 = vmatprep.subr.mxu0 0.0
        %884 = vmatpush1.msra.mxu0 0.0
        %885 = vmatprep.subr.mxu0 0.0
        %886 = vmatpush1.msra.mxu0 0.0
        %887 = vmatprep.subr.mxu0 0.0
        %888 = vmatpush1.msra.mxu0 0.0
        %889 = vmatprep.subr.mxu0 0.0
        %890 = vmatpush1.msra.mxu0 %v463
        %891 = vmatprep.subr.mxu0 0.0
        %892 = vmatpush1.msra.mxu0 %v458
        %893 = vmatprep.subr.mxu0 0.0
        %894 = vmatpush2.msra.mxu0 0.0
        %895 = vmatprep.subr.mxu0 0.0
        %896 = vmatpush2.msra.mxu0 0.0
        %897 = vmatprep.subr.mxu0 0.0
        %898 = vmatpush2.msra.mxu0 0.0
        %899 = vmatprep.subr.mxu0 0.0
        %900 = vmatpush2.msra.mxu0 0.0
        %901 = vmatprep.subr.mxu0 0.0
        %902 = vmatpush2.msra.mxu0 0.0
        %903 = vmatprep.subr.mxu0 0.0
        %904 = vmatpush2.msra.mxu0 0.0
        %905 = vmatprep.subr.mxu0 0.0
        %906 = vmatpush2.msra.mxu0 0.0
        %907 = vmatprep.subr.mxu0 0.0
        %908 = vmatpush2.msra.mxu0 0.0
        %909 = vmatprep.subr.mxu0 0.0
        %910 = vmatpush2.msra.mxu0 0.0
        %911 = vmatprep.subr.mxu0 0.0
        %912 = vmatpush2.msra.mxu0 0.0
        %913 = vmatprep.subr.mxu0 0.0
        %914 = vmatpush2.msra.mxu0 0.0
        %915 = vmatprep.subr.mxu0 0.0
        %916 = vmatpush2.msra.mxu0 0.0
        %917 = vmatprep.subr.mxu0 0.0
        %918 = vmatpush2.msra.mxu0 0.0
        %919 = vmatprep.subr.mxu0 0.0
        %920 = vmatpush2.msra.mxu0 0.0
        %921 = vmatprep.subr.mxu0 0.0
        %922 = vmatpush2.msra.mxu0 0.0
        %923 = vmatprep.subr.mxu0 0.0
        %924 = vmatpush2.msra.mxu0 0.0
        %925 = vmatprep.mubr.f32.mxu0 0.0
        %926 = vmatmul.mubr.f32.gmra.mxu0 %v779
        %v927 = vpop.f32.mrf.mxu0
        %v928 = vadd.f32 0.0, %v927
        %v929 = vpop.f32.mrf.mxu0
        %930 = vmatprep.mubr.f32.mxu0 0.0
        %931 = vmatmul.mubr.f32.gmra.mxu0 %v782
        %v932 = vpop.f32.mrf.mxu0
        %v933 = vadd.f32 0.0, %v932
        %v934 = vpop.f32.mrf.mxu0
        %935 = vdwg.mxu0
        %936 = vmatprep.subr.mxu0 0.0
        %937 = vmatpush1.msra.mxu0 0.0
        %938 = vmatprep.subr.mxu0 0.0
        %939 = vmatpush1.msra.mxu0 0.0
        %940 = vmatprep.subr.mxu0 0.0
        %941 = vmatpush1.msra.mxu0 0.0
        %942 = vmatprep.subr.mxu0 0.0
        %943 = vmatpush1.msra.mxu0 0.0
        %944 = vmatprep.subr.mxu0 0.0
        %945 = vmatpush1.msra.mxu0 0.0
        %946 = vmatprep.subr.mxu0 0.0
        %947 = vmatpush1.msra.mxu0 0.0
        %948 = vmatprep.subr.mxu0 0.0
        %949 = vmatpush1.msra.mxu0 0.0
        %950 = vmatprep.subr.mxu0 0.0
        %951 = vmatpush1.msra.mxu0 0.0
        %952 = vmatprep.subr.mxu0 0.0
        %953 = vmatpush1.msra.mxu0 0.0
        %954 = vmatprep.subr.mxu0 0.0
        %955 = vmatpush1.msra.mxu0 0.0
        %956 = vmatprep.subr.mxu0 0.0
        %957 = vmatpush1.msra.mxu0 0.0
        %958 = vmatprep.subr.mxu0 0.0
        %959 = vmatpush1.msra.mxu0 0.0
        %960 = vmatprep.subr.mxu0 0.0
        %961 = vmatpush1.msra.mxu0 0.0
        %962 = vmatprep.subr.mxu0 0.0
        %963 = vmatpush1.msra.mxu0 0.0
        %964 = vmatprep.subr.mxu0 0.0
        %965 = vmatpush1.msra.mxu0 %v538
        %966 = vmatprep.subr.mxu0 0.0
        %967 = vmatpush1.msra.mxu0 %v533
        %968 = vmatprep.subr.mxu0 0.0
        %969 = vmatpush2.msra.mxu0 0.0
        %970 = vmatprep.subr.mxu0 0.0
        %971 = vmatpush2.msra.mxu0 0.0
        %972 = vmatprep.subr.mxu0 0.0
        %973 = vmatpush2.msra.mxu0 0.0
        %974 = vmatprep.subr.mxu0 0.0
        %975 = vmatpush2.msra.mxu0 0.0
        %976 = vmatprep.subr.mxu0 0.0
        %977 = vmatpush2.msra.mxu0 0.0
        %978 = vmatprep.subr.mxu0 0.0
        %979 = vmatpush2.msra.mxu0 0.0
        %980 = vmatprep.subr.mxu0 0.0
        %981 = vmatpush2.msra.mxu0 0.0
        %982 = vmatprep.subr.mxu0 0.0
        %983 = vmatpush2.msra.mxu0 0.0
        %984 = vmatprep.subr.mxu0 0.0
        %985 = vmatpush2.msra.mxu0 0.0
        %986 = vmatprep.subr.mxu0 0.0
        %987 = vmatpush2.msra.mxu0 0.0
        %988 = vmatprep.subr.mxu0 0.0
        %989 = vmatpush2.msra.mxu0 0.0
        %990 = vmatprep.subr.mxu0 0.0
        %991 = vmatpush2.msra.mxu0 0.0
        %992 = vmatprep.subr.mxu0 0.0
        %993 = vmatpush2.msra.mxu0 0.0
        %994 = vmatprep.subr.mxu0 0.0
        %995 = vmatpush2.msra.mxu0 0.0
        %996 = vmatprep.subr.mxu0 0.0
        %997 = vmatpush2.msra.mxu0 0.0
        %998 = vmatprep.subr.mxu0 0.0
        %999 = vmatpush2.msra.mxu0 0.0
        %1000 = vmatprep.mubr.f32.mxu0 0.0
        %1001 = vmatmul.mubr.f32.gmra.mxu0 %v698
        %v1002 = vpop.f32.mrf.mxu0
        %v1003 = vadd.f32 %v928, %v1002
        %v1004 = vpop.f32.mrf.mxu0
        %1005 = vmatprep.mubr.f32.mxu0 0.0
        %1006 = vmatmul.mubr.f32.gmra.mxu0 %v701
        %v1007 = vpop.f32.mrf.mxu0
        %v1008 = vadd.f32 %v933, %v1007
        %v1009 = vpop.f32.mrf.mxu0
        %1010 = vdwg.mxu0
        %1011 = vmatprep.subr.mxu0 0.0
        %1012 = vmatpush1.msra.mxu0 0.0
        %1013 = vmatprep.subr.mxu0 0.0
        %1014 = vmatpush1.msra.mxu0 0.0
        %1015 = vmatprep.subr.mxu0 0.0
        %1016 = vmatpush1.msra.mxu0 0.0
        %1017 = vmatprep.subr.mxu0 0.0
        %1018 = vmatpush1.msra.mxu0 0.0
        %1019 = vmatprep.subr.mxu0 0.0
        %1020 = vmatpush1.msra.mxu0 0.0
        %1021 = vmatprep.subr.mxu0 0.0
        %1022 = vmatpush1.msra.mxu0 0.0
        %1023 = vmatprep.subr.mxu0 0.0
        %1024 = vmatpush1.msra.mxu0 0.0
        %1025 = vmatprep.subr.mxu0 0.0
        %1026 = vmatpush1.msra.mxu0 0.0
        %1027 = vmatprep.subr.mxu0 0.0
        %1028 = vmatpush1.msra.mxu0 0.0
        %1029 = vmatprep.subr.mxu0 0.0
        %1030 = vmatpush1.msra.mxu0 0.0
        %1031 = vmatprep.subr.mxu0 0.0
        %1032 = vmatpush1.msra.mxu0 0.0
        %1033 = vmatprep.subr.mxu0 0.0
        %1034 = vmatpush1.msra.mxu0 0.0
        %1035 = vmatprep.subr.mxu0 0.0
        %1036 = vmatpush1.msra.mxu0 0.0
        %1037 = vmatprep.subr.mxu0 0.0
        %1038 = vmatpush1.msra.mxu0 0.0
        %1039 = vmatprep.subr.mxu0 0.0
        %1040 = vmatpush1.msra.mxu0 %v619
        %1041 = vmatprep.subr.mxu0 0.0
        %1042 = vmatpush1.msra.mxu0 %v614
        %1043 = vmatprep.subr.mxu0 0.0
        %1044 = vmatpush2.msra.mxu0 0.0
        %1045 = vmatprep.subr.mxu0 0.0
        %1046 = vmatpush2.msra.mxu0 0.0
        %1047 = vmatprep.subr.mxu0 0.0
        %1048 = vmatpush2.msra.mxu0 0.0
        %1049 = vmatprep.subr.mxu0 0.0
        %1050 = vmatpush2.msra.mxu0 0.0
        %1051 = vmatprep.subr.mxu0 0.0
        %1052 = vmatpush2.msra.mxu0 0.0
        %1053 = vmatprep.subr.mxu0 0.0
        %1054 = vmatpush2.msra.mxu0 0.0
        %1055 = vmatprep.subr.mxu0 0.0
        %1056 = vmatpush2.msra.mxu0 0.0
        %1057 = vmatprep.subr.mxu0 0.0
        %1058 = vmatpush2.msra.mxu0 0.0
        %1059 = vmatprep.subr.mxu0 0.0
        %1060 = vmatpush2.msra.mxu0 0.0
        %1061 = vmatprep.subr.mxu0 0.0
        %1062 = vmatpush2.msra.mxu0 0.0
        %1063 = vmatprep.subr.mxu0 0.0
        %1064 = vmatpush2.msra.mxu0 0.0
        %1065 = vmatprep.subr.mxu0 0.0
        %1066 = vmatpush2.msra.mxu0 0.0
        %1067 = vmatprep.subr.mxu0 0.0
        %1068 = vmatpush2.msra.mxu0 0.0
        %1069 = vmatprep.subr.mxu0 0.0
        %1070 = vmatpush2.msra.mxu0 0.0
        %1071 = vmatprep.subr.mxu0 0.0
        %1072 = vmatpush2.msra.mxu0 0.0
        %1073 = vmatprep.subr.mxu0 0.0
        %1074 = vmatpush2.msra.mxu0 0.0
        %1075 = vmatprep.mubr.f32.mxu0 0.0
        %1076 = vmatmul.mubr.f32.gmra.mxu0 %v698
        %v1077 = vpop.f32.mrf.mxu0
        %v1078 = vadd.f32 0.0, %v1077
        %v1079 = vpop.f32.mrf.mxu0
        %1080 = vmatprep.mubr.f32.mxu0 0.0
        %1081 = vmatmul.mubr.f32.gmra.mxu0 %v701
        %v1082 = vpop.f32.mrf.mxu0
        %v1083 = vadd.f32 0.0, %v1082
        %v1084 = vpop.f32.mrf.mxu0
        %1085 = vdwg.mxu0
        %1086 = vmatprep.subr.mxu0 0.0
        %1087 = vmatpush1.msra.mxu0 0.0
        %1088 = vmatprep.subr.mxu0 0.0
        %1089 = vmatpush1.msra.mxu0 0.0
        %1090 = vmatprep.subr.mxu0 0.0
        %1091 = vmatpush1.msra.mxu0 0.0
        %1092 = vmatprep.subr.mxu0 0.0
        %1093 = vmatpush1.msra.mxu0 0.0
        %1094 = vmatprep.subr.mxu0 0.0
        %1095 = vmatpush1.msra.mxu0 0.0
        %1096 = vmatprep.subr.mxu0 0.0
        %1097 = vmatpush1.msra.mxu0 0.0
        %1098 = vmatprep.subr.mxu0 0.0
        %1099 = vmatpush1.msra.mxu0 0.0
        %1100 = vmatprep.subr.mxu0 0.0
        %1101 = vmatpush1.msra.mxu0 0.0
        %1102 = vmatprep.subr.mxu0 0.0
        %1103 = vmatpush1.msra.mxu0 0.0
        %1104 = vmatprep.subr.mxu0 0.0
        %1105 = vmatpush1.msra.mxu0 0.0
        %1106 = vmatprep.subr.mxu0 0.0
        %1107 = vmatpush1.msra.mxu0 0.0
        %1108 = vmatprep.subr.mxu0 0.0
        %1109 = vmatpush1.msra.mxu0 0.0
        %1110 = vmatprep.subr.mxu0 0.0
        %1111 = vmatpush1.msra.mxu0 0.0
        %1112 = vmatprep.subr.mxu0 0.0
        %1113 = vmatpush1.msra.mxu0 0.0
        %1114 = vmatprep.subr.mxu0 0.0
        %1115 = vmatpush1.msra.mxu0 %v694
        %1116 = vmatprep.subr.mxu0 0.0
        %1117 = vmatpush1.msra.mxu0 %v689
        %1118 = vmatprep.subr.mxu0 0.0
        %1119 = vmatpush2.msra.mxu0 0.0
        %1120 = vmatprep.subr.mxu0 0.0
        %1121 = vmatpush2.msra.mxu0 0.0
        %1122 = vmatprep.subr.mxu0 0.0
        %1123 = vmatpush2.msra.mxu0 0.0
        %1124 = vmatprep.subr.mxu0 0.0
        %1125 = vmatpush2.msra.mxu0 0.0
        %1126 = vmatprep.subr.mxu0 0.0
        %1127 = vmatpush2.msra.mxu0 0.0
        %1128 = vmatprep.subr.mxu0 0.0
        %1129 = vmatpush2.msra.mxu0 0.0
        %1130 = vmatprep.subr.mxu0 0.0
        %1131 = vmatpush2.msra.mxu0 0.0
        %1132 = vmatprep.subr.mxu0 0.0
        %1133 = vmatpush2.msra.mxu0 0.0
        %1134 = vmatprep.subr.mxu0 0.0
        %1135 = vmatpush2.msra.mxu0 0.0
        %1136 = vmatprep.subr.mxu0 0.0
        %1137 = vmatpush2.msra.mxu0 0.0
        %1138 = vmatprep.subr.mxu0 0.0
        %1139 = vmatpush2.msra.mxu0 0.0
        %1140 = vmatprep.subr.mxu0 0.0
        %1141 = vmatpush2.msra.mxu0 0.0
        %1142 = vmatprep.subr.mxu0 0.0
        %1143 = vmatpush2.msra.mxu0 0.0
        %1144 = vmatprep.subr.mxu0 0.0
        %1145 = vmatpush2.msra.mxu0 0.0
        %1146 = vmatprep.subr.mxu0 0.0
        %1147 = vmatpush2.msra.mxu0 0.0
        %1148 = vmatprep.subr.mxu0 0.0
        %1149 = vmatpush2.msra.mxu0 0.0
        %1150 = vmatprep.mubr.f32.mxu0 0.0
        %1151 = vmatmul.mubr.f32.gmra.mxu0 %v779
        %v1152 = vpop.f32.mrf.mxu0
        %v1153 = vadd.f32 0.0, %v1152
        %v1154 = vpop.f32.mrf.mxu0
        %1155 = vmatprep.mubr.f32.mxu0 0.0
        %1156 = vmatmul.mubr.f32.gmra.mxu0 %v782
        %v1157 = vpop.f32.mrf.mxu0
        %v1158 = vadd.f32 0.0, %v1157
        %v1159 = vpop.f32.mrf.mxu0
        %1160 = vdwg.mxu0
        %v1161 = vsub.f32 %v1078, %v1153
        %v1162 = vsub.f32 %v1083, %v1158
        %1163 = vmatprep.subr.mxu0 0.0
        %1164 = vmatpush1.msra.mxu0 0.0
        %1165 = vmatprep.subr.mxu0 0.0
        %1166 = vmatpush1.msra.mxu0 0.0
        %1167 = vmatprep.subr.mxu0 0.0
        %1168 = vmatpush1.msra.mxu0 0.0
        %1169 = vmatprep.subr.mxu0 0.0
        %1170 = vmatpush1.msra.mxu0 0.0
        %1171 = vmatprep.subr.mxu0 0.0
        %1172 = vmatpush1.msra.mxu0 0.0
        %1173 = vmatprep.subr.mxu0 0.0
        %1174 = vmatpush1.msra.mxu0 0.0
        %1175 = vmatprep.subr.mxu0 0.0
        %1176 = vmatpush1.msra.mxu0 0.0
        %1177 = vmatprep.subr.mxu0 0.0
        %1178 = vmatpush1.msra.mxu0 0.0
        %1179 = vmatprep.subr.mxu0 0.0
        %1180 = vmatpush1.msra.mxu0 0.0
        %1181 = vmatprep.subr.mxu0 0.0
        %1182 = vmatpush1.msra.mxu0 0.0
        %1183 = vmatprep.subr.mxu0 0.0
        %1184 = vmatpush1.msra.mxu0 0.0
        %1185 = vmatprep.subr.mxu0 0.0
        %1186 = vmatpush1.msra.mxu0 0.0
        %1187 = vmatprep.subr.mxu0 0.0
        %1188 = vmatpush1.msra.mxu0 0.0
        %1189 = vmatprep.subr.mxu0 0.0
        %1190 = vmatpush1.msra.mxu0 0.0
        %1191 = vmatprep.subr.mxu0 0.0
        %1192 = vmatpush1.msra.mxu0 %v619
        %1193 = vmatprep.subr.mxu0 0.0
        %1194 = vmatpush1.msra.mxu0 %v614
        %1195 = vmatprep.subr.mxu0 0.0
        %1196 = vmatpush2.msra.mxu0 0.0
        %1197 = vmatprep.subr.mxu0 0.0
        %1198 = vmatpush2.msra.mxu0 0.0
        %1199 = vmatprep.subr.mxu0 0.0
        %1200 = vmatpush2.msra.mxu0 0.0
        %1201 = vmatprep.subr.mxu0 0.0
        %1202 = vmatpush2.msra.mxu0 0.0
        %1203 = vmatprep.subr.mxu0 0.0
        %1204 = vmatpush2.msra.mxu0 0.0
        %1205 = vmatprep.subr.mxu0 0.0
        %1206 = vmatpush2.msra.mxu0 0.0
        %1207 = vmatprep.subr.mxu0 0.0
        %1208 = vmatpush2.msra.mxu0 0.0
        %1209 = vmatprep.subr.mxu0 0.0
        %1210 = vmatpush2.msra.mxu0 0.0
        %1211 = vmatprep.subr.mxu0 0.0
        %1212 = vmatpush2.msra.mxu0 0.0
        %1213 = vmatprep.subr.mxu0 0.0
        %1214 = vmatpush2.msra.mxu0 0.0
        %1215 = vmatprep.subr.mxu0 0.0
        %1216 = vmatpush2.msra.mxu0 0.0
        %1217 = vmatprep.subr.mxu0 0.0
        %1218 = vmatpush2.msra.mxu0 0.0
        %1219 = vmatprep.subr.mxu0 0.0
        %1220 = vmatpush2.msra.mxu0 0.0
        %1221 = vmatprep.subr.mxu0 0.0
        %1222 = vmatpush2.msra.mxu0 0.0
        %1223 = vmatprep.subr.mxu0 0.0
        %1224 = vmatpush2.msra.mxu0 0.0
        %1225 = vmatprep.subr.mxu0 0.0
        %1226 = vmatpush2.msra.mxu0 0.0
        %1227 = vmatprep.mubr.f32.mxu0 0.0
        %1228 = vmatmul.mubr.f32.gmra.mxu0 %v779
        %v1229 = vpop.f32.mrf.mxu0
        %v1230 = vadd.f32 0.0, %v1229
        %v1231 = vpop.f32.mrf.mxu0
        %1232 = vmatprep.mubr.f32.mxu0 0.0
        %1233 = vmatmul.mubr.f32.gmra.mxu0 %v782
        %v1234 = vpop.f32.mrf.mxu0
        %v1235 = vadd.f32 0.0, %v1234
        %v1236 = vpop.f32.mrf.mxu0
        %1237 = vdwg.mxu0
        %1238 = vmatprep.subr.mxu0 0.0
        %1239 = vmatpush1.msra.mxu0 0.0
        %1240 = vmatprep.subr.mxu0 0.0
        %1241 = vmatpush1.msra.mxu0 0.0
        %1242 = vmatprep.subr.mxu0 0.0
        %1243 = vmatpush1.msra.mxu0 0.0
        %1244 = vmatprep.subr.mxu0 0.0
        %1245 = vmatpush1.msra.mxu0 0.0
        %1246 = vmatprep.subr.mxu0 0.0
        %1247 = vmatpush1.msra.mxu0 0.0
        %1248 = vmatprep.subr.mxu0 0.0
        %1249 = vmatpush1.msra.mxu0 0.0
        %1250 = vmatprep.subr.mxu0 0.0
        %1251 = vmatpush1.msra.mxu0 0.0
        %1252 = vmatprep.subr.mxu0 0.0
        %1253 = vmatpush1.msra.mxu0 0.0
        %1254 = vmatprep.subr.mxu0 0.0
        %1255 = vmatpush1.msra.mxu0 0.0
        %1256 = vmatprep.subr.mxu0 0.0
        %1257 = vmatpush1.msra.mxu0 0.0
        %1258 = vmatprep.subr.mxu0 0.0
        %1259 = vmatpush1.msra.mxu0 0.0
        %1260 = vmatprep.subr.mxu0 0.0
        %1261 = vmatpush1.msra.mxu0 0.0
        %1262 = vmatprep.subr.mxu0 0.0
        %1263 = vmatpush1.msra.mxu0 0.0
        %1264 = vmatprep.subr.mxu0 0.0
        %1265 = vmatpush1.msra.mxu0 0.0
        %1266 = vmatprep.subr.mxu0 0.0
        %1267 = vmatpush1.msra.mxu0 %v694
        %1268 = vmatprep.subr.mxu0 0.0
        %1269 = vmatpush1.msra.mxu0 %v689
        %1270 = vmatprep.subr.mxu0 0.0
        %1271 = vmatpush2.msra.mxu0 0.0
        %1272 = vmatprep.subr.mxu0 0.0
        %1273 = vmatpush2.msra.mxu0 0.0
        %1274 = vmatprep.subr.mxu0 0.0
        %1275 = vmatpush2.msra.mxu0 0.0
        %1276 = vmatprep.subr.mxu0 0.0
        %1277 = vmatpush2.msra.mxu0 0.0
        %1278 = vmatprep.subr.mxu0 0.0
        %1279 = vmatpush2.msra.mxu0 0.0
        %1280 = vmatprep.subr.mxu0 0.0
        %1281 = vmatpush2.msra.mxu0 0.0
        %1282 = vmatprep.subr.mxu0 0.0
        %1283 = vmatpush2.msra.mxu0 0.0
        %1284 = vmatprep.subr.mxu0 0.0
        %1285 = vmatpush2.msra.mxu0 0.0
        %1286 = vmatprep.subr.mxu0 0.0
        %1287 = vmatpush2.msra.mxu0 0.0
        %1288 = vmatprep.subr.mxu0 0.0
        %1289 = vmatpush2.msra.mxu0 0.0
        %1290 = vmatprep.subr.mxu0 0.0
        %1291 = vmatpush2.msra.mxu0 0.0
        %1292 = vmatprep.subr.mxu0 0.0
        %1293 = vmatpush2.msra.mxu0 0.0
        %1294 = vmatprep.subr.mxu0 0.0
        %1295 = vmatpush2.msra.mxu0 0.0
        %1296 = vmatprep.subr.mxu0 0.0
        %1297 = vmatpush2.msra.mxu0 0.0
        %1298 = vmatprep.subr.mxu0 0.0
        %1299 = vmatpush2.msra.mxu0 0.0
        %1300 = vmatprep.subr.mxu0 0.0
        %1301 = vmatpush2.msra.mxu0 0.0
        %1302 = vmatprep.mubr.f32.mxu0 0.0
        %1303 = vmatmul.mubr.f32.gmra.mxu0 %v698
        %v1304 = vpop.f32.mrf.mxu0
        %v1305 = vadd.f32 %v1230, %v1304
        %v1306 = vpop.f32.mrf.mxu0
        %1307 = vmatprep.mubr.f32.mxu0 0.0
        %1308 = vmatmul.mubr.f32.gmra.mxu0 %v701
        %v1309 = vpop.f32.mrf.mxu0
        %v1310 = vadd.f32 %v1235, %v1309
        %v1311 = vpop.f32.mrf.mxu0
        %1312 = vdwg.mxu0
        %v1313 = vmul.f32 %v859, %v859
        %v1314 = vmul.f32 %v860, %v860
        %v1315 = vmul.f32 %v1003, %v1003
        %v1316 = vmul.f32 %v1008, %v1008
        %v1317 = vadd.f32 %v1313, %v1315
        %v1318 = vadd.f32 %v1314, %v1316
        %v1319 = vrsqrt.pop %v1317
        %v1320 = vmul.f32 %v1317, %v1319
        %vm1321 = vcmp.eq.f32.partialorder %v1317, inf
        %v1322 = vsel %vm1321, %v1317, %v1320
        %vm1323 = vcmp.eq.f32.partialorder %v1317, 0.0
        %v1324 = vand.u32 %v1317, 2147483648
        %v1325 = vsel %vm1323, %v1324, %v1322
        %v1326 = vrsqrt.pop %v1318
        %v1327 = vmul.f32 %v1318, %v1326
        %vm1328 = vcmp.eq.f32.partialorder %v1318, inf
        %v1329 = vsel %vm1328, %v1318, %v1327
        %vm1330 = vcmp.eq.f32.partialorder %v1318, 0.0
        %v1331 = vand.u32 %v1318, 2147483648
        %v1332 = vsel %vm1330, %v1331, %v1329
        %v1333 = vmul.f32 %v1161, %v1161
        %v1334 = vmul.f32 %v1162, %v1162
        %v1335 = vmul.f32 %v1305, %v1305
        %v1336 = vmul.f32 %v1310, %v1310
        %v1337 = vadd.f32 %v1333, %v1335
        %v1338 = vadd.f32 %v1334, %v1336
        %v1339 = vrsqrt.pop %v1337
        %v1340 = vmul.f32 %v1337, %v1339
        %vm1341 = vcmp.eq.f32.partialorder %v1337, inf
        %v1342 = vsel %vm1341, %v1337, %v1340
        %vm1343 = vcmp.eq.f32.partialorder %v1337, 0.0
        %v1344 = vand.u32 %v1337, 2147483648
        %v1345 = vsel %vm1343, %v1344, %v1342
        %v1346 = vrsqrt.pop %v1338
        %v1347 = vmul.f32 %v1338, %v1346
        %vm1348 = vcmp.eq.f32.partialorder %v1338, inf
        %v1349 = vsel %vm1348, %v1338, %v1347
        %vm1350 = vcmp.eq.f32.partialorder %v1338, 0.0
        %v1351 = vand.u32 %v1338, 2147483648
        %v1352 = vsel %vm1350, %v1351, %v1349
        %v1353 = vand.u32 2147483647, %v1003
        %v1354 = vand.u32 2147483647, %v1008
        %v1355 = vand.u32 2147483647, %v859
        %v1356 = vand.u32 2147483647, %v860
        %v1357 = vmin.f32 %v1355, %v1353
        %v1358 = vmin.f32 %v1356, %v1354
        %v1359 = vmax.f32 %v1355, %v1353
        %v1360 = vmax.f32 %v1356, %v1354
        %vm1361 = vcmp.gt.f32.partialorder %v1359, 0.0
        %vm1362 = vcmp.gt.f32.partialorder %v1360, 0.0
        %v1363 = vsel %vm1361, %v1359, 1.0
        %v1364 = vsel %vm1362, %v1360, 1.0
        %v1365 = vrcp.pop %v1363
        %v1366 = vmul.f32 %v1357, %v1365
        %v1367 = vrcp.pop %v1364
        %v1368 = vmul.f32 %v1358, %v1367
        %vm1369 = vcmp.gt.f32.partialorder %v1366, 0.41421357
        %vm1370 = vcmp.gt.f32.partialorder %v1368, 0.41421357
        %v1371 = vsub.f32 %v1366, 1.0
        %v1372 = vsub.f32 %v1368, 1.0
        %v1373 = vadd.f32 %v1366, 1.0
        %v1374 = vadd.f32 %v1368, 1.0
        %v1375 = vrcp.pop %v1373
        %v1376 = vmul.f32 %v1371, %v1375
        %v1377 = vrcp.pop %v1374
        %v1378 = vmul.f32 %v1372, %v1377
        %v1379 = vsel %vm1369, %v1376, %v1366
        %v1380 = vsel %vm1370, %v1378, %v1368
        %v1381 = vmul.f32 %v1379, %v1379
        %v1382 = vmul.f32 %v1380, %v1380
        %v1383 = vmul.f32 %v1381, 0.080537446
        %v1384 = vmul.f32 %v1382, 0.080537446
        %v1385 = vadd.f32 %v1383, -0.13877685
        %v1386 = vadd.f32 %v1384, -0.13877685
        %v1387 = vmul.f32 %v1385, %v1381
        %v1388 = vmul.f32 %v1386, %v1382
        %v1389 = vadd.f32 %v1387, 0.19977711
        %v1390 = vadd.f32 %v1388, 0.19977711
        %v1391 = vmul.f32 %v1389, %v1381
        %v1392 = vmul.f32 %v1390, %v1382
        %v1393 = vadd.f32 %v1391, -0.3333295
        %v1394 = vadd.f32 %v1392, -0.3333295
        %v1395 = vmul.f32 %v1393, %v1381
        %v1396 = vmul.f32 %v1394, %v1382
        %v1397 = vmul.f32 %v1395, %v1379
        %v1398 = vmul.f32 %v1396, %v1380
        %v1399 = vadd.f32 %v1397, %v1379
        %v1400 = vadd.f32 %v1398, %v1380
        %v1401 = vadd.f32 %v1399, 0.7853982
        %v1402 = vadd.f32 %v1400, 0.7853982
        %v1403 = vsel %vm1369, %v1401, %v1399
        %v1404 = vsel %vm1370, %v1402, %v1400
        %vm1405 = vcmp.gt.f32.partialorder %v1353, %v1355
        %vm1406 = vcmp.gt.f32.partialorder %v1354, %v1356
        %v1407 = vsub.f32 1.5707964, %v1403
        %v1408 = vsub.f32 1.5707964, %v1404
        %v1409 = vsel %vm1405, %v1407, %v1403
        %v1410 = vsel %vm1406, %v1408, %v1404
        %vm1411 = vcmp.lt.f32.partialorder %v859, 0.0
        %vm1412 = vcmp.lt.f32.partialorder %v860, 0.0
        %v1413 = vsub.f32 3.1415927, %v1409
        %v1414 = vsub.f32 3.1415927, %v1410
        %v1415 = vsel %vm1411, %v1413, %v1409
        %v1416 = vsel %vm1412, %v1414, %v1410
        %vm1417 = vcmp.lt.f32.partialorder %v1003, 0.0
        %vm1418 = vcmp.lt.f32.partialorder %v1008, 0.0
        %v1419 = vsub.f32 0.0, %v1415
        %v1420 = vsub.f32 0.0, %v1416
        %v1421 = vsel %vm1417, %v1419, %v1415
        %v1422 = vsel %vm1418, %v1420, %v1416
        %v1423 = vand.u32 2147483647, %v1305
        %v1424 = vand.u32 2147483647, %v1310
        %v1425 = vand.u32 2147483647, %v1161
        %v1426 = vand.u32 2147483647, %v1162
        %v1427 = vmin.f32 %v1425, %v1423
        %v1428 = vmin.f32 %v1426, %v1424
        %v1429 = vmax.f32 %v1425, %v1423
        %v1430 = vmax.f32 %v1426, %v1424
        %vm1431 = vcmp.gt.f32.partialorder %v1429, 0.0
        %vm1432 = vcmp.gt.f32.partialorder %v1430, 0.0
        %v1433 = vsel %vm1431, %v1429, 1.0
        %v1434 = vsel %vm1432, %v1430, 1.0
        %v1435 = vrcp.pop %v1433
        %v1436 = vmul.f32 %v1427, %v1435
        %v1437 = vrcp.pop %v1434
        %v1438 = vmul.f32 %v1428, %v1437
        %vm1439 = vcmp.gt.f32.partialorder %v1436, 0.41421357
        %vm1440 = vcmp.gt.f32.partialorder %v1438, 0.41421357
        %v1441 = vsub.f32 %v1436, 1.0
        %v1442 = vsub.f32 %v1438, 1.0
        %v1443 = vadd.f32 %v1436, 1.0
        %v1444 = vadd.f32 %v1438, 1.0
        %v1445 = vrcp.pop %v1443
        %v1446 = vmul.f32 %v1441, %v1445
        %v1447 = vrcp.pop %v1444
        %v1448 = vmul.f32 %v1442, %v1447
        %v1449 = vsel %vm1439, %v1446, %v1436
        %v1450 = vsel %vm1440, %v1448, %v1438
        %v1451 = vmul.f32 %v1449, %v1449
        %v1452 = vmul.f32 %v1450, %v1450
        %v1453 = vmul.f32 %v1451, 0.080537446
        %v1454 = vmul.f32 %v1452, 0.080537446
        %v1455 = vadd.f32 %v1453, -0.13877685
        %v1456 = vadd.f32 %v1454, -0.13877685
        %v1457 = vmul.f32 %v1455, %v1451
        %v1458 = vmul.f32 %v1456, %v1452
        %v1459 = vadd.f32 %v1457, 0.19977711
        %v1460 = vadd.f32 %v1458, 0.19977711
        %v1461 = vmul.f32 %v1459, %v1451
        %v1462 = vmul.f32 %v1460, %v1452
        %v1463 = vadd.f32 %v1461, -0.3333295
        %v1464 = vadd.f32 %v1462, -0.3333295
        %v1465 = vmul.f32 %v1463, %v1451
        %v1466 = vmul.f32 %v1464, %v1452
        %v1467 = vmul.f32 %v1465, %v1449
        %v1468 = vmul.f32 %v1466, %v1450
        %v1469 = vadd.f32 %v1467, %v1449
        %v1470 = vadd.f32 %v1468, %v1450
        %v1471 = vadd.f32 %v1469, 0.7853982
        %v1472 = vadd.f32 %v1470, 0.7853982
        %v1473 = vsel %vm1439, %v1471, %v1469
        %v1474 = vsel %vm1440, %v1472, %v1470
        %vm1475 = vcmp.gt.f32.partialorder %v1423, %v1425
        %vm1476 = vcmp.gt.f32.partialorder %v1424, %v1426
        %v1477 = vsub.f32 1.5707964, %v1473
        %v1478 = vsub.f32 1.5707964, %v1474
        %v1479 = vsel %vm1475, %v1477, %v1473
        %v1480 = vsel %vm1476, %v1478, %v1474
        %vm1481 = vcmp.lt.f32.partialorder %v1161, 0.0
        %vm1482 = vcmp.lt.f32.partialorder %v1162, 0.0
        %v1483 = vsub.f32 3.1415927, %v1479
        %v1484 = vsub.f32 3.1415927, %v1480
        %v1485 = vsel %vm1481, %v1483, %v1479
        %v1486 = vsel %vm1482, %v1484, %v1480
        %vm1487 = vcmp.lt.f32.partialorder %v1305, 0.0
        %vm1488 = vcmp.lt.f32.partialorder %v1310, 0.0
        %v1489 = vsub.f32 0.0, %v1485
        %v1490 = vsub.f32 0.0, %v1486
        %v1491 = vsel %vm1487, %v1489, %v1485
        %v1492 = vsel %vm1488, %v1490, %v1486
        %v1493 = vsub.f32 %v1325, %v1345
        %v1494 = vsub.f32 %v1332, %v1352
        %v1495 = vsub.f32 %v1421, %v1491
        %v1496 = vsub.f32 %v1422, %v1492
        %v1497 = vand.u32 2147483647, %v1493
        %v1498 = vand.u32 2147483647, %v1494
        %v1499 = vadd.f32 %v1497, 0.0
        %v1500 = vadd.f32 %v1498, 0.0
        %v1501 = vand.u32 2147483647, %v1495
        %v1502 = vand.u32 2147483647, %v1496
        %v1503 = vadd.f32 %v1499, %v1501
        %v1504 = vadd.f32 %v1500, %v1502
        %s1505 = scalar_lea.vmem %s311, 16 [#allocation2]
        %v1506 = vld [vmem:[%s1505] sm:$0xff]
        %v1507 = vld [vmem:[%s1505 + $0x8] sm:$0xff]
        %s1508 = scalar_lea.vmem %s320, 16 [#allocation5]
        %v1509 = vld [vmem:[%s1508] sm:$0xff]
        %v1510 = vld [vmem:[%s1508 + $0x8] sm:$0xff]
        %v1512 = vsel %vm384, %v1506, 0
        %v1515 = vsel %vm384, %v1507, 0
        %1517 = vmatprep.subr.mxu0 0.0
        %1518 = vmatpush1.msra.mxu0 0.0
        %1519 = vmatprep.subr.mxu0 0.0
        %1520 = vmatpush1.msra.mxu0 0.0
        %1521 = vmatprep.subr.mxu0 0.0
        %1522 = vmatpush1.msra.mxu0 0.0
        %1523 = vmatprep.subr.mxu0 0.0
        %1524 = vmatpush1.msra.mxu0 0.0
        %1525 = vmatprep.subr.mxu0 0.0
        %1526 = vmatpush1.msra.mxu0 0.0
        %1527 = vmatprep.subr.mxu0 0.0
        %1528 = vmatpush1.msra.mxu0 0.0
        %1529 = vmatprep.subr.mxu0 0.0
        %1530 = vmatpush1.msra.mxu0 0.0
        %1531 = vmatprep.subr.mxu0 0.0
        %1532 = vmatpush1.msra.mxu0 0.0
        %1533 = vmatprep.subr.mxu0 0.0
        %1534 = vmatpush1.msra.mxu0 0.0
        %1535 = vmatprep.subr.mxu0 0.0
        %1536 = vmatpush1.msra.mxu0 0.0
        %1537 = vmatprep.subr.mxu0 0.0
        %1538 = vmatpush1.msra.mxu0 0.0
        %1539 = vmatprep.subr.mxu0 0.0
        %1540 = vmatpush1.msra.mxu0 0.0
        %1541 = vmatprep.subr.mxu0 0.0
        %1542 = vmatpush1.msra.mxu0 0.0
        %1543 = vmatprep.subr.mxu0 0.0
        %1544 = vmatpush1.msra.mxu0 0.0
        %1545 = vmatprep.subr.mxu0 0.0
        %1546 = vmatpush1.msra.mxu0 %v373
        %1547 = vmatprep.subr.mxu0 0.0
        %1548 = vmatpush1.msra.mxu0 %v372
        %1549 = vmatprep.subr.mxu0 0.0
        %1550 = vmatpush2.msra.mxu0 0.0
        %1551 = vmatprep.subr.mxu0 0.0
        %1552 = vmatpush2.msra.mxu0 0.0
        %1553 = vmatprep.subr.mxu0 0.0
        %1554 = vmatpush2.msra.mxu0 0.0
        %1555 = vmatprep.subr.mxu0 0.0
        %1556 = vmatpush2.msra.mxu0 0.0
        %1557 = vmatprep.subr.mxu0 0.0
        %1558 = vmatpush2.msra.mxu0 0.0
        %1559 = vmatprep.subr.mxu0 0.0
        %1560 = vmatpush2.msra.mxu0 0.0
        %1561 = vmatprep.subr.mxu0 0.0
        %1562 = vmatpush2.msra.mxu0 0.0
        %1563 = vmatprep.subr.mxu0 0.0
        %1564 = vmatpush2.msra.mxu0 0.0
        %1565 = vmatprep.subr.mxu0 0.0
        %1566 = vmatpush2.msra.mxu0 0.0
        %1567 = vmatprep.subr.mxu0 0.0
        %1568 = vmatpush2.msra.mxu0 0.0
        %1569 = vmatprep.subr.mxu0 0.0
        %1570 = vmatpush2.msra.mxu0 0.0
        %1571 = vmatprep.subr.mxu0 0.0
        %1572 = vmatpush2.msra.mxu0 0.0
        %1573 = vmatprep.subr.mxu0 0.0
        %1574 = vmatpush2.msra.mxu0 0.0
        %1575 = vmatprep.subr.mxu0 0.0
        %1576 = vmatpush2.msra.mxu0 0.0
        %1577 = vmatprep.subr.mxu0 0.0
        %1578 = vmatpush2.msra.mxu0 0.0
        %1579 = vmatprep.subr.mxu0 0.0
        %1580 = vmatpush2.msra.mxu0 0.0
        %1581 = vmatprep.mubr.f32.mxu0 0.0
        %1582 = vmatmul.mubr.f32.gmra.mxu0 %v1512
        %v1583 = vpop.f32.mrf.mxu0
        %v1584 = vadd.f32 0.0, %v1583
        %v1585 = vpop.f32.mrf.mxu0
        %1586 = vmatprep.mubr.f32.mxu0 0.0
        %1587 = vmatmul.mubr.f32.gmra.mxu0 %v1515
        %v1588 = vpop.f32.mrf.mxu0
        %v1589 = vadd.f32 0.0, %v1588
        %v1590 = vpop.f32.mrf.mxu0
        %1591 = vdwg.mxu0
        %1592 = vmatprep.subr.mxu0 0.0
        %1593 = vmatpush1.msra.mxu0 0.0
        %1594 = vmatprep.subr.mxu0 0.0
        %1595 = vmatpush1.msra.mxu0 0.0
        %1596 = vmatprep.subr.mxu0 0.0
        %1597 = vmatpush1.msra.mxu0 0.0
        %1598 = vmatprep.subr.mxu0 0.0
        %1599 = vmatpush1.msra.mxu0 0.0
        %1600 = vmatprep.subr.mxu0 0.0
        %1601 = vmatpush1.msra.mxu0 0.0
        %1602 = vmatprep.subr.mxu0 0.0
        %1603 = vmatpush1.msra.mxu0 0.0
        %1604 = vmatprep.subr.mxu0 0.0
        %1605 = vmatpush1.msra.mxu0 0.0
        %1606 = vmatprep.subr.mxu0 0.0
        %1607 = vmatpush1.msra.mxu0 0.0
        %1608 = vmatprep.subr.mxu0 0.0
        %1609 = vmatpush1.msra.mxu0 0.0
        %1610 = vmatprep.subr.mxu0 0.0
        %1611 = vmatpush1.msra.mxu0 0.0
        %1612 = vmatprep.subr.mxu0 0.0
        %1613 = vmatpush1.msra.mxu0 0.0
        %1614 = vmatprep.subr.mxu0 0.0
        %1615 = vmatpush1.msra.mxu0 0.0
        %1616 = vmatprep.subr.mxu0 0.0
        %1617 = vmatpush1.msra.mxu0 0.0
        %1618 = vmatprep.subr.mxu0 0.0
        %1619 = vmatpush1.msra.mxu0 0.0
        %1620 = vmatprep.subr.mxu0 0.0
        %1621 = vmatpush1.msra.mxu0 %v375
        %1622 = vmatprep.subr.mxu0 0.0
        %1623 = vmatpush1.msra.mxu0 %v374
        %1624 = vmatprep.subr.mxu0 0.0
        %1625 = vmatpush2.msra.mxu0 0.0
        %1626 = vmatprep.subr.mxu0 0.0
        %1627 = vmatpush2.msra.mxu0 0.0
        %1628 = vmatprep.subr.mxu0 0.0
        %1629 = vmatpush2.msra.mxu0 0.0
        %1630 = vmatprep.subr.mxu0 0.0
        %1631 = vmatpush2.msra.mxu0 0.0
        %1632 = vmatprep.subr.mxu0 0.0
        %1633 = vmatpush2.msra.mxu0 0.0
        %1634 = vmatprep.subr.mxu0 0.0
        %1635 = vmatpush2.msra.mxu0 0.0
        %1636 = vmatprep.subr.mxu0 0.0
        %1637 = vmatpush2.msra.mxu0 0.0
        %1638 = vmatprep.subr.mxu0 0.0
        %1639 = vmatpush2.msra.mxu0 0.0
        %1640 = vmatprep.subr.mxu0 0.0
        %1641 = vmatpush2.msra.mxu0 0.0
        %1642 = vmatprep.subr.mxu0 0.0
        %1643 = vmatpush2.msra.mxu0 0.0
        %1644 = vmatprep.subr.mxu0 0.0
        %1645 = vmatpush2.msra.mxu0 0.0
        %1646 = vmatprep.subr.mxu0 0.0
        %1647 = vmatpush2.msra.mxu0 0.0
        %1648 = vmatprep.subr.mxu0 0.0
        %1649 = vmatpush2.msra.mxu0 0.0
        %1650 = vmatprep.subr.mxu0 0.0
        %1651 = vmatpush2.msra.mxu0 0.0
        %1652 = vmatprep.subr.mxu0 0.0
        %1653 = vmatpush2.msra.mxu0 0.0
        %1654 = vmatprep.subr.mxu0 0.0
        %1655 = vmatpush2.msra.mxu0 0.0
        %1656 = vmatprep.mubr.f32.mxu0 0.0
        %1657 = vmatmul.mubr.f32.gmra.mxu0 %v1512
        %v1658 = vpop.f32.mrf.mxu0
        %v1659 = vadd.f32 0.0, %v1658
        %v1660 = vpop.f32.mrf.mxu0
        %1661 = vmatprep.mubr.f32.mxu0 0.0
        %1662 = vmatmul.mubr.f32.gmra.mxu0 %v1515
        %v1663 = vpop.f32.mrf.mxu0
        %v1664 = vadd.f32 0.0, %v1663
        %v1665 = vpop.f32.mrf.mxu0
        %1666 = vdwg.mxu0
        %v1668 = vsel %vm384, %v1509, 0
        %v1671 = vsel %vm384, %v1510, 0
        %1673 = vmatprep.subr.mxu0 0.0
        %1674 = vmatpush1.msra.mxu0 0.0
        %1675 = vmatprep.subr.mxu0 0.0
        %1676 = vmatpush1.msra.mxu0 0.0
        %1677 = vmatprep.subr.mxu0 0.0
        %1678 = vmatpush1.msra.mxu0 0.0
        %1679 = vmatprep.subr.mxu0 0.0
        %1680 = vmatpush1.msra.mxu0 0.0
        %1681 = vmatprep.subr.mxu0 0.0
        %1682 = vmatpush1.msra.mxu0 0.0
        %1683 = vmatprep.subr.mxu0 0.0
        %1684 = vmatpush1.msra.mxu0 0.0
        %1685 = vmatprep.subr.mxu0 0.0
        %1686 = vmatpush1.msra.mxu0 0.0
        %1687 = vmatprep.subr.mxu0 0.0
        %1688 = vmatpush1.msra.mxu0 0.0
        %1689 = vmatprep.subr.mxu0 0.0
        %1690 = vmatpush1.msra.mxu0 0.0
        %1691 = vmatprep.subr.mxu0 0.0
        %1692 = vmatpush1.msra.mxu0 0.0
        %1693 = vmatprep.subr.mxu0 0.0
        %1694 = vmatpush1.msra.mxu0 0.0
        %1695 = vmatprep.subr.mxu0 0.0
        %1696 = vmatpush1.msra.mxu0 0.0
        %1697 = vmatprep.subr.mxu0 0.0
        %1698 = vmatpush1.msra.mxu0 0.0
        %1699 = vmatprep.subr.mxu0 0.0
        %1700 = vmatpush1.msra.mxu0 0.0
        %1701 = vmatprep.subr.mxu0 0.0
        %1702 = vmatpush1.msra.mxu0 %v373
        %1703 = vmatprep.subr.mxu0 0.0
        %1704 = vmatpush1.msra.mxu0 %v372
        %1705 = vmatprep.subr.mxu0 0.0
        %1706 = vmatpush2.msra.mxu0 0.0
        %1707 = vmatprep.subr.mxu0 0.0
        %1708 = vmatpush2.msra.mxu0 0.0
        %1709 = vmatprep.subr.mxu0 0.0
        %1710 = vmatpush2.msra.mxu0 0.0
        %1711 = vmatprep.subr.mxu0 0.0
        %1712 = vmatpush2.msra.mxu0 0.0
        %1713 = vmatprep.subr.mxu0 0.0
        %1714 = vmatpush2.msra.mxu0 0.0
        %1715 = vmatprep.subr.mxu0 0.0
        %1716 = vmatpush2.msra.mxu0 0.0
        %1717 = vmatprep.subr.mxu0 0.0
        %1718 = vmatpush2.msra.mxu0 0.0
        %1719 = vmatprep.subr.mxu0 0.0
        %1720 = vmatpush2.msra.mxu0 0.0
        %1721 = vmatprep.subr.mxu0 0.0
        %1722 = vmatpush2.msra.mxu0 0.0
        %1723 = vmatprep.subr.mxu0 0.0
        %1724 = vmatpush2.msra.mxu0 0.0
        %1725 = vmatprep.subr.mxu0 0.0
        %1726 = vmatpush2.msra.mxu0 0.0
        %1727 = vmatprep.subr.mxu0 0.0
        %1728 = vmatpush2.msra.mxu0 0.0
        %1729 = vmatprep.subr.mxu0 0.0
        %1730 = vmatpush2.msra.mxu0 0.0
        %1731 = vmatprep.subr.mxu0 0.0
        %1732 = vmatpush2.msra.mxu0 0.0
        %1733 = vmatprep.subr.mxu0 0.0
        %1734 = vmatpush2.msra.mxu0 0.0
        %1735 = vmatprep.subr.mxu0 0.0
        %1736 = vmatpush2.msra.mxu0 0.0
        %1737 = vmatprep.mubr.f32.mxu0 0.0
        %1738 = vmatmul.mubr.f32.gmra.mxu0 %v1668
        %v1739 = vpop.f32.mrf.mxu0
        %v1740 = vadd.f32 0.0, %v1739
        %v1741 = vpop.f32.mrf.mxu0
        %1742 = vmatprep.mubr.f32.mxu0 0.0
        %1743 = vmatmul.mubr.f32.gmra.mxu0 %v1671
        %v1744 = vpop.f32.mrf.mxu0
        %v1745 = vadd.f32 0.0, %v1744
        %v1746 = vpop.f32.mrf.mxu0
        %1747 = vdwg.mxu0
        %1748 = vmatprep.subr.mxu0 0.0
        %1749 = vmatpush1.msra.mxu0 0.0
        %1750 = vmatprep.subr.mxu0 0.0
        %1751 = vmatpush1.msra.mxu0 0.0
        %1752 = vmatprep.subr.mxu0 0.0
        %1753 = vmatpush1.msra.mxu0 0.0
        %1754 = vmatprep.subr.mxu0 0.0
        %1755 = vmatpush1.msra.mxu0 0.0
        %1756 = vmatprep.subr.mxu0 0.0
        %1757 = vmatpush1.msra.mxu0 0.0
        %1758 = vmatprep.subr.mxu0 0.0
        %1759 = vmatpush1.msra.mxu0 0.0
        %1760 = vmatprep.subr.mxu0 0.0
        %1761 = vmatpush1.msra.mxu0 0.0
        %1762 = vmatprep.subr.mxu0 0.0
        %1763 = vmatpush1.msra.mxu0 0.0
        %1764 = vmatprep.subr.mxu0 0.0
        %1765 = vmatpush1.msra.mxu0 0.0
        %1766 = vmatprep.subr.mxu0 0.0
        %1767 = vmatpush1.msra.mxu0 0.0
        %1768 = vmatprep.subr.mxu0 0.0
        %1769 = vmatpush1.msra.mxu0 0.0
        %1770 = vmatprep.subr.mxu0 0.0
        %1771 = vmatpush1.msra.mxu0 0.0
        %1772 = vmatprep.subr.mxu0 0.0
        %1773 = vmatpush1.msra.mxu0 0.0
        %1774 = vmatprep.subr.mxu0 0.0
        %1775 = vmatpush1.msra.mxu0 0.0
        %1776 = vmatprep.subr.mxu0 0.0
        %1777 = vmatpush1.msra.mxu0 %v375
        %1778 = vmatprep.subr.mxu0 0.0
        %1779 = vmatpush1.msra.mxu0 %v374
        %1780 = vmatprep.subr.mxu0 0.0
        %1781 = vmatpush2.msra.mxu0 0.0
        %1782 = vmatprep.subr.mxu0 0.0
        %1783 = vmatpush2.msra.mxu0 0.0
        %1784 = vmatprep.subr.mxu0 0.0
        %1785 = vmatpush2.msra.mxu0 0.0
        %1786 = vmatprep.subr.mxu0 0.0
        %1787 = vmatpush2.msra.mxu0 0.0
        %1788 = vmatprep.subr.mxu0 0.0
        %1789 = vmatpush2.msra.mxu0 0.0
        %1790 = vmatprep.subr.mxu0 0.0
        %1791 = vmatpush2.msra.mxu0 0.0
        %1792 = vmatprep.subr.mxu0 0.0
        %1793 = vmatpush2.msra.mxu0 0.0
        %1794 = vmatprep.subr.mxu0 0.0
        %1795 = vmatpush2.msra.mxu0 0.0
        %1796 = vmatprep.subr.mxu0 0.0
        %1797 = vmatpush2.msra.mxu0 0.0
        %1798 = vmatprep.subr.mxu0 0.0
        %1799 = vmatpush2.msra.mxu0 0.0
        %1800 = vmatprep.subr.mxu0 0.0
        %1801 = vmatpush2.msra.mxu0 0.0
        %1802 = vmatprep.subr.mxu0 0.0
        %1803 = vmatpush2.msra.mxu0 0.0
        %1804 = vmatprep.subr.mxu0 0.0
        %1805 = vmatpush2.msra.mxu0 0.0
        %1806 = vmatprep.subr.mxu0 0.0
        %1807 = vmatpush2.msra.mxu0 0.0
        %1808 = vmatprep.subr.mxu0 0.0
        %1809 = vmatpush2.msra.mxu0 0.0
        %1810 = vmatprep.subr.mxu0 0.0
        %1811 = vmatpush2.msra.mxu0 0.0
        %1812 = vmatprep.mubr.f32.mxu0 0.0
        %1813 = vmatmul.mubr.f32.gmra.mxu0 %v1668
        %v1814 = vpop.f32.mrf.mxu0
        %v1815 = vadd.f32 0.0, %v1814
        %v1816 = vpop.f32.mrf.mxu0
        %1817 = vmatprep.mubr.f32.mxu0 0.0
        %1818 = vmatmul.mubr.f32.gmra.mxu0 %v1671
        %v1819 = vpop.f32.mrf.mxu0
        %v1820 = vadd.f32 0.0, %v1819
        %v1821 = vpop.f32.mrf.mxu0
        %1822 = vdwg.mxu0
        %1823 = vmatprep.subr.mxu0 0.0
        %1824 = vmatpush1.msra.mxu0 0.0
        %1825 = vmatprep.subr.mxu0 0.0
        %1826 = vmatpush1.msra.mxu0 0.0
        %1827 = vmatprep.subr.mxu0 0.0
        %1828 = vmatpush1.msra.mxu0 0.0
        %1829 = vmatprep.subr.mxu0 0.0
        %1830 = vmatpush1.msra.mxu0 0.0
        %1831 = vmatprep.subr.mxu0 0.0
        %1832 = vmatpush1.msra.mxu0 0.0
        %1833 = vmatprep.subr.mxu0 0.0
        %1834 = vmatpush1.msra.mxu0 0.0
        %1835 = vmatprep.subr.mxu0 0.0
        %1836 = vmatpush1.msra.mxu0 0.0
        %1837 = vmatprep.subr.mxu0 0.0
        %1838 = vmatpush1.msra.mxu0 0.0
        %1839 = vmatprep.subr.mxu0 0.0
        %1840 = vmatpush1.msra.mxu0 0.0
        %1841 = vmatprep.subr.mxu0 0.0
        %1842 = vmatpush1.msra.mxu0 0.0
        %1843 = vmatprep.subr.mxu0 0.0
        %1844 = vmatpush1.msra.mxu0 0.0
        %1845 = vmatprep.subr.mxu0 0.0
        %1846 = vmatpush1.msra.mxu0 0.0
        %1847 = vmatprep.subr.mxu0 0.0
        %1848 = vmatpush1.msra.mxu0 0.0
        %1849 = vmatprep.subr.mxu0 0.0
        %1850 = vmatpush1.msra.mxu0 0.0
        %1851 = vmatprep.subr.mxu0 0.0
        %1852 = vmatpush1.msra.mxu0 %v1589
        %1853 = vmatprep.subr.mxu0 0.0
        %1854 = vmatpush1.msra.mxu0 %v1584
        %1855 = vmatprep.subr.mxu0 0.0
        %1856 = vmatpush2.msra.mxu0 0.0
        %1857 = vmatprep.subr.mxu0 0.0
        %1858 = vmatpush2.msra.mxu0 0.0
        %1859 = vmatprep.subr.mxu0 0.0
        %1860 = vmatpush2.msra.mxu0 0.0
        %1861 = vmatprep.subr.mxu0 0.0
        %1862 = vmatpush2.msra.mxu0 0.0
        %1863 = vmatprep.subr.mxu0 0.0
        %1864 = vmatpush2.msra.mxu0 0.0
        %1865 = vmatprep.subr.mxu0 0.0
        %1866 = vmatpush2.msra.mxu0 0.0
        %1867 = vmatprep.subr.mxu0 0.0
        %1868 = vmatpush2.msra.mxu0 0.0
        %1869 = vmatprep.subr.mxu0 0.0
        %1870 = vmatpush2.msra.mxu0 0.0
        %1871 = vmatprep.subr.mxu0 0.0
        %1872 = vmatpush2.msra.mxu0 0.0
        %1873 = vmatprep.subr.mxu0 0.0
        %1874 = vmatpush2.msra.mxu0 0.0
        %1875 = vmatprep.subr.mxu0 0.0
        %1876 = vmatpush2.msra.mxu0 0.0
        %1877 = vmatprep.subr.mxu0 0.0
        %1878 = vmatpush2.msra.mxu0 0.0
        %1879 = vmatprep.subr.mxu0 0.0
        %1880 = vmatpush2.msra.mxu0 0.0
        %1881 = vmatprep.subr.mxu0 0.0
        %1882 = vmatpush2.msra.mxu0 0.0
        %1883 = vmatprep.subr.mxu0 0.0
        %1884 = vmatpush2.msra.mxu0 0.0
        %1885 = vmatprep.subr.mxu0 0.0
        %1886 = vmatpush2.msra.mxu0 0.0
        %1887 = vmatprep.mubr.f32.mxu0 0.0
        %1888 = vmatmul.mubr.f32.gmra.mxu0 %v698
        %v1889 = vpop.f32.mrf.mxu0
        %v1890 = vadd.f32 0.0, %v1889
        %v1891 = vpop.f32.mrf.mxu0
        %1892 = vmatprep.mubr.f32.mxu0 0.0
        %1893 = vmatmul.mubr.f32.gmra.mxu0 %v701
        %v1894 = vpop.f32.mrf.mxu0
        %v1895 = vadd.f32 0.0, %v1894
        %v1896 = vpop.f32.mrf.mxu0
        %1897 = vdwg.mxu0
        %1898 = vmatprep.subr.mxu0 0.0
        %1899 = vmatpush1.msra.mxu0 0.0
        %1900 = vmatprep.subr.mxu0 0.0
        %1901 = vmatpush1.msra.mxu0 0.0
        %1902 = vmatprep.subr.mxu0 0.0
        %1903 = vmatpush1.msra.mxu0 0.0
        %1904 = vmatprep.subr.mxu0 0.0
        %1905 = vmatpush1.msra.mxu0 0.0
        %1906 = vmatprep.subr.mxu0 0.0
        %1907 = vmatpush1.msra.mxu0 0.0
        %1908 = vmatprep.subr.mxu0 0.0
        %1909 = vmatpush1.msra.mxu0 0.0
        %1910 = vmatprep.subr.mxu0 0.0
        %1911 = vmatpush1.msra.mxu0 0.0
        %1912 = vmatprep.subr.mxu0 0.0
        %1913 = vmatpush1.msra.mxu0 0.0
        %1914 = vmatprep.subr.mxu0 0.0
        %1915 = vmatpush1.msra.mxu0 0.0
        %1916 = vmatprep.subr.mxu0 0.0
        %1917 = vmatpush1.msra.mxu0 0.0
        %1918 = vmatprep.subr.mxu0 0.0
        %1919 = vmatpush1.msra.mxu0 0.0
        %1920 = vmatprep.subr.mxu0 0.0
        %1921 = vmatpush1.msra.mxu0 0.0
        %1922 = vmatprep.subr.mxu0 0.0
        %1923 = vmatpush1.msra.mxu0 0.0
        %1924 = vmatprep.subr.mxu0 0.0
        %1925 = vmatpush1.msra.mxu0 0.0
        %1926 = vmatprep.subr.mxu0 0.0
        %1927 = vmatpush1.msra.mxu0 %v1664
        %1928 = vmatprep.subr.mxu0 0.0
        %1929 = vmatpush1.msra.mxu0 %v1659
        %1930 = vmatprep.subr.mxu0 0.0
        %1931 = vmatpush2.msra.mxu0 0.0
        %1932 = vmatprep.subr.mxu0 0.0
        %1933 = vmatpush2.msra.mxu0 0.0
        %1934 = vmatprep.subr.mxu0 0.0
        %1935 = vmatpush2.msra.mxu0 0.0
        %1936 = vmatprep.subr.mxu0 0.0
        %1937 = vmatpush2.msra.mxu0 0.0
        %1938 = vmatprep.subr.mxu0 0.0
        %1939 = vmatpush2.msra.mxu0 0.0
        %1940 = vmatprep.subr.mxu0 0.0
        %1941 = vmatpush2.msra.mxu0 0.0
        %1942 = vmatprep.subr.mxu0 0.0
        %1943 = vmatpush2.msra.mxu0 0.0
        %1944 = vmatprep.subr.mxu0 0.0
        %1945 = vmatpush2.msra.mxu0 0.0
        %1946 = vmatprep.subr.mxu0 0.0
        %1947 = vmatpush2.msra.mxu0 0.0
        %1948 = vmatprep.subr.mxu0 0.0
        %1949 = vmatpush2.msra.mxu0 0.0
        %1950 = vmatprep.subr.mxu0 0.0
        %1951 = vmatpush2.msra.mxu0 0.0
        %1952 = vmatprep.subr.mxu0 0.0
        %1953 = vmatpush2.msra.mxu0 0.0
        %1954 = vmatprep.subr.mxu0 0.0
        %1955 = vmatpush2.msra.mxu0 0.0
        %1956 = vmatprep.subr.mxu0 0.0
        %1957 = vmatpush2.msra.mxu0 0.0
        %1958 = vmatprep.subr.mxu0 0.0
        %1959 = vmatpush2.msra.mxu0 0.0
        %1960 = vmatprep.subr.mxu0 0.0
        %1961 = vmatpush2.msra.mxu0 0.0
        %1962 = vmatprep.mubr.f32.mxu0 0.0
        %1963 = vmatmul.mubr.f32.gmra.mxu0 %v779
        %v1964 = vpop.f32.mrf.mxu0
        %v1965 = vadd.f32 0.0, %v1964
        %v1966 = vpop.f32.mrf.mxu0
        %1967 = vmatprep.mubr.f32.mxu0 0.0
        %1968 = vmatmul.mubr.f32.gmra.mxu0 %v782
        %v1969 = vpop.f32.mrf.mxu0
        %v1970 = vadd.f32 0.0, %v1969
        %v1971 = vpop.f32.mrf.mxu0
        %1972 = vdwg.mxu0
        %v1973 = vsub.f32 %v1890, %v1965
        %v1974 = vsub.f32 %v1895, %v1970
        %1975 = vmatprep.subr.mxu0 0.0
        %1976 = vmatpush1.msra.mxu0 0.0
        %1977 = vmatprep.subr.mxu0 0.0
        %1978 = vmatpush1.msra.mxu0 0.0
        %1979 = vmatprep.subr.mxu0 0.0
        %1980 = vmatpush1.msra.mxu0 0.0
        %1981 = vmatprep.subr.mxu0 0.0
        %1982 = vmatpush1.msra.mxu0 0.0
        %1983 = vmatprep.subr.mxu0 0.0
        %1984 = vmatpush1.msra.mxu0 0.0
        %1985 = vmatprep.subr.mxu0 0.0
        %1986 = vmatpush1.msra.mxu0 0.0
        %1987 = vmatprep.subr.mxu0 0.0
        %1988 = vmatpush1.msra.mxu0 0.0
        %1989 = vmatprep.subr.mxu0 0.0
        %1990 = vmatpush1.msra.mxu0 0.0
        %1991 = vmatprep.subr.mxu0 0.0
        %1992 = vmatpush1.msra.mxu0 0.0
        %1993 = vmatprep.subr.mxu0 0.0
        %1994 = vmatpush1.msra.mxu0 0.0
        %1995 = vmatprep.subr.mxu0 0.0
        %1996 = vmatpush1.msra.mxu0 0.0
        %1997 = vmatprep.subr.mxu0 0.0
        %1998 = vmatpush1.msra.mxu0 0.0
        %1999 = vmatprep.subr.mxu0 0.0
        %2000 = vmatpush1.msra.mxu0 0.0
        %2001 = vmatprep.subr.mxu0 0.0
        %2002 = vmatpush1.msra.mxu0 0.0
        %2003 = vmatprep.subr.mxu0 0.0
        %2004 = vmatpush1.msra.mxu0 %v1589
        %2005 = vmatprep.subr.mxu0 0.0
        %2006 = vmatpush1.msra.mxu0 %v1584
        %2007 = vmatprep.subr.mxu0 0.0
        %2008 = vmatpush2.msra.mxu0 0.0
        %2009 = vmatprep.subr.mxu0 0.0
        %2010 = vmatpush2.msra.mxu0 0.0
        %2011 = vmatprep.subr.mxu0 0.0
        %2012 = vmatpush2.msra.mxu0 0.0
        %2013 = vmatprep.subr.mxu0 0.0
        %2014 = vmatpush2.msra.mxu0 0.0
        %2015 = vmatprep.subr.mxu0 0.0
        %2016 = vmatpush2.msra.mxu0 0.0
        %2017 = vmatprep.subr.mxu0 0.0
        %2018 = vmatpush2.msra.mxu0 0.0
        %2019 = vmatprep.subr.mxu0 0.0
        %2020 = vmatpush2.msra.mxu0 0.0
        %2021 = vmatprep.subr.mxu0 0.0
        %2022 = vmatpush2.msra.mxu0 0.0
        %2023 = vmatprep.subr.mxu0 0.0
        %2024 = vmatpush2.msra.mxu0 0.0
        %2025 = vmatprep.subr.mxu0 0.0
        %2026 = vmatpush2.msra.mxu0 0.0
        %2027 = vmatprep.subr.mxu0 0.0
        %2028 = vmatpush2.msra.mxu0 0.0
        %2029 = vmatprep.subr.mxu0 0.0
        %2030 = vmatpush2.msra.mxu0 0.0
        %2031 = vmatprep.subr.mxu0 0.0
        %2032 = vmatpush2.msra.mxu0 0.0
        %2033 = vmatprep.subr.mxu0 0.0
        %2034 = vmatpush2.msra.mxu0 0.0
        %2035 = vmatprep.subr.mxu0 0.0
        %2036 = vmatpush2.msra.mxu0 0.0
        %2037 = vmatprep.subr.mxu0 0.0
        %2038 = vmatpush2.msra.mxu0 0.0
        %2039 = vmatprep.mubr.f32.mxu0 0.0
        %2040 = vmatmul.mubr.f32.gmra.mxu0 %v779
        %v2041 = vpop.f32.mrf.mxu0
        %v2042 = vadd.f32 0.0, %v2041
        %v2043 = vpop.f32.mrf.mxu0
        %2044 = vmatprep.mubr.f32.mxu0 0.0
        %2045 = vmatmul.mubr.f32.gmra.mxu0 %v782
        %v2046 = vpop.f32.mrf.mxu0
        %v2047 = vadd.f32 0.0, %v2046
        %v2048 = vpop.f32.mrf.mxu0
        %2049 = vdwg.mxu0
        %2050 = vmatprep.subr.mxu0 0.0
        %2051 = vmatpush1.msra.mxu0 0.0
        %2052 = vmatprep.subr.mxu0 0.0
        %2053 = vmatpush1.msra.mxu0 0.0
        %2054 = vmatprep.subr.mxu0 0.0
        %2055 = vmatpush1.msra.mxu0 0.0
        %2056 = vmatprep.subr.mxu0 0.0
        %2057 = vmatpush1.msra.mxu0 0.0
        %2058 = vmatprep.subr.mxu0 0.0
        %2059 = vmatpush1.msra.mxu0 0.0
        %2060 = vmatprep.subr.mxu0 0.0
        %2061 = vmatpush1.msra.mxu0 0.0
        %2062 = vmatprep.subr.mxu0 0.0
        %2063 = vmatpush1.msra.mxu0 0.0
        %2064 = vmatprep.subr.mxu0 0.0
        %2065 = vmatpush1.msra.mxu0 0.0
        %2066 = vmatprep.subr.mxu0 0.0
        %2067 = vmatpush1.msra.mxu0 0.0
        %2068 = vmatprep.subr.mxu0 0.0
        %2069 = vmatpush1.msra.mxu0 0.0
        %2070 = vmatprep.subr.mxu0 0.0
        %2071 = vmatpush1.msra.mxu0 0.0
        %2072 = vmatprep.subr.mxu0 0.0
        %2073 = vmatpush1.msra.mxu0 0.0
        %2074 = vmatprep.subr.mxu0 0.0
        %2075 = vmatpush1.msra.mxu0 0.0
        %2076 = vmatprep.subr.mxu0 0.0
        %2077 = vmatpush1.msra.mxu0 0.0
        %2078 = vmatprep.subr.mxu0 0.0
        %2079 = vmatpush1.msra.mxu0 %v1664
        %2080 = vmatprep.subr.mxu0 0.0
        %2081 = vmatpush1.msra.mxu0 %v1659
        %2082 = vmatprep.subr.mxu0 0.0
        %2083 = vmatpush2.msra.mxu0 0.0
        %2084 = vmatprep.subr.mxu0 0.0
        %2085 = vmatpush2.msra.mxu0 0.0
        %2086 = vmatprep.subr.mxu0 0.0
        %2087 = vmatpush2.msra.mxu0 0.0
        %2088 = vmatprep.subr.mxu0 0.0
        %2089 = vmatpush2.msra.mxu0 0.0
        %2090 = vmatprep.subr.mxu0 0.0
        %2091 = vmatpush2.msra.mxu0 0.0
        %2092 = vmatprep.subr.mxu0 0.0
        %2093 = vmatpush2.msra.mxu0 0.0
        %2094 = vmatprep.subr.mxu0 0.0
        %2095 = vmatpush2.msra.mxu0 0.0
        %2096 = vmatprep.subr.mxu0 0.0
        %2097 = vmatpush2.msra.mxu0 0.0
        %2098 = vmatprep.subr.mxu0 0.0
        %2099 = vmatpush2.msra.mxu0 0.0
        %2100 = vmatprep.subr.mxu0 0.0
        %2101 = vmatpush2.msra.mxu0 0.0
        %2102 = vmatprep.subr.mxu0 0.0
        %2103 = vmatpush2.msra.mxu0 0.0
        %2104 = vmatprep.subr.mxu0 0.0
        %2105 = vmatpush2.msra.mxu0 0.0
        %2106 = vmatprep.subr.mxu0 0.0
        %2107 = vmatpush2.msra.mxu0 0.0
        %2108 = vmatprep.subr.mxu0 0.0
        %2109 = vmatpush2.msra.mxu0 0.0
        %2110 = vmatprep.subr.mxu0 0.0
        %2111 = vmatpush2.msra.mxu0 0.0
        %2112 = vmatprep.subr.mxu0 0.0
        %2113 = vmatpush2.msra.mxu0 0.0
        %2114 = vmatprep.mubr.f32.mxu0 0.0
        %2115 = vmatmul.mubr.f32.gmra.mxu0 %v698
        %v2116 = vpop.f32.mrf.mxu0
        %v2117 = vadd.f32 %v2042, %v2116
        %v2118 = vpop.f32.mrf.mxu0
        %2119 = vmatprep.mubr.f32.mxu0 0.0
        %2120 = vmatmul.mubr.f32.gmra.mxu0 %v701
        %v2121 = vpop.f32.mrf.mxu0
        %v2122 = vadd.f32 %v2047, %v2121
        %v2123 = vpop.f32.mrf.mxu0
        %2124 = vdwg.mxu0
        %2125 = vmatprep.subr.mxu0 0.0
        %2126 = vmatpush1.msra.mxu0 0.0
        %2127 = vmatprep.subr.mxu0 0.0
        %2128 = vmatpush1.msra.mxu0 0.0
        %2129 = vmatprep.subr.mxu0 0.0
        %2130 = vmatpush1.msra.mxu0 0.0
        %2131 = vmatprep.subr.mxu0 0.0
        %2132 = vmatpush1.msra.mxu0 0.0
        %2133 = vmatprep.subr.mxu0 0.0
        %2134 = vmatpush1.msra.mxu0 0.0
        %2135 = vmatprep.subr.mxu0 0.0
        %2136 = vmatpush1.msra.mxu0 0.0
        %2137 = vmatprep.subr.mxu0 0.0
        %2138 = vmatpush1.msra.mxu0 0.0
        %2139 = vmatprep.subr.mxu0 0.0
        %2140 = vmatpush1.msra.mxu0 0.0
        %2141 = vmatprep.subr.mxu0 0.0
        %2142 = vmatpush1.msra.mxu0 0.0
        %2143 = vmatprep.subr.mxu0 0.0
        %2144 = vmatpush1.msra.mxu0 0.0
        %2145 = vmatprep.subr.mxu0 0.0
        %2146 = vmatpush1.msra.mxu0 0.0
        %2147 = vmatprep.subr.mxu0 0.0
        %2148 = vmatpush1.msra.mxu0 0.0
        %2149 = vmatprep.subr.mxu0 0.0
        %2150 = vmatpush1.msra.mxu0 0.0
        %2151 = vmatprep.subr.mxu0 0.0
        %2152 = vmatpush1.msra.mxu0 0.0
        %2153 = vmatprep.subr.mxu0 0.0
        %2154 = vmatpush1.msra.mxu0 %v1745
        %2155 = vmatprep.subr.mxu0 0.0
        %2156 = vmatpush1.msra.mxu0 %v1740
        %2157 = vmatprep.subr.mxu0 0.0
        %2158 = vmatpush2.msra.mxu0 0.0
        %2159 = vmatprep.subr.mxu0 0.0
        %2160 = vmatpush2.msra.mxu0 0.0
        %2161 = vmatprep.subr.mxu0 0.0
        %2162 = vmatpush2.msra.mxu0 0.0
        %2163 = vmatprep.subr.mxu0 0.0
        %2164 = vmatpush2.msra.mxu0 0.0
        %2165 = vmatprep.subr.mxu0 0.0
        %2166 = vmatpush2.msra.mxu0 0.0
        %2167 = vmatprep.subr.mxu0 0.0
        %2168 = vmatpush2.msra.mxu0 0.0
        %2169 = vmatprep.subr.mxu0 0.0
        %2170 = vmatpush2.msra.mxu0 0.0
        %2171 = vmatprep.subr.mxu0 0.0
        %2172 = vmatpush2.msra.mxu0 0.0
        %2173 = vmatprep.subr.mxu0 0.0
        %2174 = vmatpush2.msra.mxu0 0.0
        %2175 = vmatprep.subr.mxu0 0.0
        %2176 = vmatpush2.msra.mxu0 0.0
        %2177 = vmatprep.subr.mxu0 0.0
        %2178 = vmatpush2.msra.mxu0 0.0
        %2179 = vmatprep.subr.mxu0 0.0
        %2180 = vmatpush2.msra.mxu0 0.0
        %2181 = vmatprep.subr.mxu0 0.0
        %2182 = vmatpush2.msra.mxu0 0.0
        %2183 = vmatprep.subr.mxu0 0.0
        %2184 = vmatpush2.msra.mxu0 0.0
        %2185 = vmatprep.subr.mxu0 0.0
        %2186 = vmatpush2.msra.mxu0 0.0
        %2187 = vmatprep.subr.mxu0 0.0
        %2188 = vmatpush2.msra.mxu0 0.0
        %2189 = vmatprep.mubr.f32.mxu0 0.0
        %2190 = vmatmul.mubr.f32.gmra.mxu0 %v698
        %v2191 = vpop.f32.mrf.mxu0
        %v2192 = vadd.f32 0.0, %v2191
        %v2193 = vpop.f32.mrf.mxu0
        %2194 = vmatprep.mubr.f32.mxu0 0.0
        %2195 = vmatmul.mubr.f32.gmra.mxu0 %v701
        %v2196 = vpop.f32.mrf.mxu0
        %v2197 = vadd.f32 0.0, %v2196
        %v2198 = vpop.f32.mrf.mxu0
        %2199 = vdwg.mxu0
        %2200 = vmatprep.subr.mxu0 0.0
        %2201 = vmatpush1.msra.mxu0 0.0
        %2202 = vmatprep.subr.mxu0 0.0
        %2203 = vmatpush1.msra.mxu0 0.0
        %2204 = vmatprep.subr.mxu0 0.0
        %2205 = vmatpush1.msra.mxu0 0.0
        %2206 = vmatprep.subr.mxu0 0.0
        %2207 = vmatpush1.msra.mxu0 0.0
        %2208 = vmatprep.subr.mxu0 0.0
        %2209 = vmatpush1.msra.mxu0 0.0
        %2210 = vmatprep.subr.mxu0 0.0
        %2211 = vmatpush1.msra.mxu0 0.0
        %2212 = vmatprep.subr.mxu0 0.0
        %2213 = vmatpush1.msra.mxu0 0.0
        %2214 = vmatprep.subr.mxu0 0.0
        %2215 = vmatpush1.msra.mxu0 0.0
        %2216 = vmatprep.subr.mxu0 0.0
        %2217 = vmatpush1.msra.mxu0 0.0
        %2218 = vmatprep.subr.mxu0 0.0
        %2219 = vmatpush1.msra.mxu0 0.0
        %2220 = vmatprep.subr.mxu0 0.0
        %2221 = vmatpush1.msra.mxu0 0.0
        %2222 = vmatprep.subr.mxu0 0.0
        %2223 = vmatpush1.msra.mxu0 0.0
        %2224 = vmatprep.subr.mxu0 0.0
        %2225 = vmatpush1.msra.mxu0 0.0
        %2226 = vmatprep.subr.mxu0 0.0
        %2227 = vmatpush1.msra.mxu0 0.0
        %2228 = vmatprep.subr.mxu0 0.0
        %2229 = vmatpush1.msra.mxu0 %v1820
        %2230 = vmatprep.subr.mxu0 0.0
        %2231 = vmatpush1.msra.mxu0 %v1815
        %2232 = vmatprep.subr.mxu0 0.0
        %2233 = vmatpush2.msra.mxu0 0.0
        %2234 = vmatprep.subr.mxu0 0.0
        %2235 = vmatpush2.msra.mxu0 0.0
        %2236 = vmatprep.subr.mxu0 0.0
        %2237 = vmatpush2.msra.mxu0 0.0
        %2238 = vmatprep.subr.mxu0 0.0
        %2239 = vmatpush2.msra.mxu0 0.0
        %2240 = vmatprep.subr.mxu0 0.0
        %2241 = vmatpush2.msra.mxu0 0.0
        %2242 = vmatprep.subr.mxu0 0.0
        %2243 = vmatpush2.msra.mxu0 0.0
        %2244 = vmatprep.subr.mxu0 0.0
        %2245 = vmatpush2.msra.mxu0 0.0
        %2246 = vmatprep.subr.mxu0 0.0
        %2247 = vmatpush2.msra.mxu0 0.0
        %2248 = vmatprep.subr.mxu0 0.0
        %2249 = vmatpush2.msra.mxu0 0.0
        %2250 = vmatprep.subr.mxu0 0.0
        %2251 = vmatpush2.msra.mxu0 0.0
        %2252 = vmatprep.subr.mxu0 0.0
        %2253 = vmatpush2.msra.mxu0 0.0
        %2254 = vmatprep.subr.mxu0 0.0
        %2255 = vmatpush2.msra.mxu0 0.0
        %2256 = vmatprep.subr.mxu0 0.0
        %2257 = vmatpush2.msra.mxu0 0.0
        %2258 = vmatprep.subr.mxu0 0.0
        %2259 = vmatpush2.msra.mxu0 0.0
        %2260 = vmatprep.subr.mxu0 0.0
        %2261 = vmatpush2.msra.mxu0 0.0
        %2262 = vmatprep.subr.mxu0 0.0
        %2263 = vmatpush2.msra.mxu0 0.0
        %2264 = vmatprep.mubr.f32.mxu0 0.0
        %2265 = vmatmul.mubr.f32.gmra.mxu0 %v779
        %v2266 = vpop.f32.mrf.mxu0
        %v2267 = vadd.f32 0.0, %v2266
        %v2268 = vpop.f32.mrf.mxu0
        %2269 = vmatprep.mubr.f32.mxu0 0.0
        %2270 = vmatmul.mubr.f32.gmra.mxu0 %v782
        %v2271 = vpop.f32.mrf.mxu0
        %v2272 = vadd.f32 0.0, %v2271
        %v2273 = vpop.f32.mrf.mxu0
        %2274 = vdwg.mxu0
        %v2275 = vsub.f32 %v2192, %v2267
        %v2276 = vsub.f32 %v2197, %v2272
        %2277 = vmatprep.subr.mxu0 0.0
        %2278 = vmatpush1.msra.mxu0 0.0
        %2279 = vmatprep.subr.mxu0 0.0
        %2280 = vmatpush1.msra.mxu0 0.0
        %2281 = vmatprep.subr.mxu0 0.0
        %2282 = vmatpush1.msra.mxu0 0.0
        %2283 = vmatprep.subr.mxu0 0.0
        %2284 = vmatpush1.msra.mxu0 0.0
        %2285 = vmatprep.subr.mxu0 0.0
        %2286 = vmatpush1.msra.mxu0 0.0
        %2287 = vmatprep.subr.mxu0 0.0
        %2288 = vmatpush1.msra.mxu0 0.0
        %2289 = vmatprep.subr.mxu0 0.0
        %2290 = vmatpush1.msra.mxu0 0.0
        %2291 = vmatprep.subr.mxu0 0.0
        %2292 = vmatpush1.msra.mxu0 0.0
        %2293 = vmatprep.subr.mxu0 0.0
        %2294 = vmatpush1.msra.mxu0 0.0
        %2295 = vmatprep.subr.mxu0 0.0
        %2296 = vmatpush1.msra.mxu0 0.0
        %2297 = vmatprep.subr.mxu0 0.0
        %2298 = vmatpush1.msra.mxu0 0.0
        %2299 = vmatprep.subr.mxu0 0.0
        %2300 = vmatpush1.msra.mxu0 0.0
        %2301 = vmatprep.subr.mxu0 0.0
        %2302 = vmatpush1.msra.mxu0 0.0
        %2303 = vmatprep.subr.mxu0 0.0
        %2304 = vmatpush1.msra.mxu0 0.0
        %2305 = vmatprep.subr.mxu0 0.0
        %2306 = vmatpush1.msra.mxu0 %v1745
        %2307 = vmatprep.subr.mxu0 0.0
        %2308 = vmatpush1.msra.mxu0 %v1740
        %2309 = vmatprep.subr.mxu0 0.0
        %2310 = vmatpush2.msra.mxu0 0.0
        %2311 = vmatprep.subr.mxu0 0.0
        %2312 = vmatpush2.msra.mxu0 0.0
        %2313 = vmatprep.subr.mxu0 0.0
        %2314 = vmatpush2.msra.mxu0 0.0
        %2315 = vmatprep.subr.mxu0 0.0
        %2316 = vmatpush2.msra.mxu0 0.0
        %2317 = vmatprep.subr.mxu0 0.0
        %2318 = vmatpush2.msra.mxu0 0.0
        %2319 = vmatprep.subr.mxu0 0.0
        %2320 = vmatpush2.msra.mxu0 0.0
        %2321 = vmatprep.subr.mxu0 0.0
        %2322 = vmatpush2.msra.mxu0 0.0
        %2323 = vmatprep.subr.mxu0 0.0
        %2324 = vmatpush2.msra.mxu0 0.0
        %2325 = vmatprep.subr.mxu0 0.0
        %2326 = vmatpush2.msra.mxu0 0.0
        %2327 = vmatprep.subr.mxu0 0.0
        %2328 = vmatpush2.msra.mxu0 0.0
        %2329 = vmatprep.subr.mxu0 0.0
        %2330 = vmatpush2.msra.mxu0 0.0
        %2331 = vmatprep.subr.mxu0 0.0
        %2332 = vmatpush2.msra.mxu0 0.0
        %2333 = vmatprep.subr.mxu0 0.0
        %2334 = vmatpush2.msra.mxu0 0.0
        %2335 = vmatprep.subr.mxu0 0.0
        %2336 = vmatpush2.msra.mxu0 0.0
        %2337 = vmatprep.subr.mxu0 0.0
        %2338 = vmatpush2.msra.mxu0 0.0
        %2339 = vmatprep.subr.mxu0 0.0
        %2340 = vmatpush2.msra.mxu0 0.0
        %2341 = vmatprep.mubr.f32.mxu0 0.0
        %2342 = vmatmul.mubr.f32.gmra.mxu0 %v779
        %v2343 = vpop.f32.mrf.mxu0
        %v2344 = vadd.f32 0.0, %v2343
        %v2345 = vpop.f32.mrf.mxu0
        %2346 = vmatprep.mubr.f32.mxu0 0.0
        %2347 = vmatmul.mubr.f32.gmra.mxu0 %v782
        %v2348 = vpop.f32.mrf.mxu0
        %v2349 = vadd.f32 0.0, %v2348
        %v2350 = vpop.f32.mrf.mxu0
        %2351 = vdwg.mxu0
        %2352 = vmatprep.subr.mxu0 0.0
        %2353 = vmatpush1.msra.mxu0 0.0
        %2354 = vmatprep.subr.mxu0 0.0
        %2355 = vmatpush1.msra.mxu0 0.0
        %2356 = vmatprep.subr.mxu0 0.0
        %2357 = vmatpush1.msra.mxu0 0.0
        %2358 = vmatprep.subr.mxu0 0.0
        %2359 = vmatpush1.msra.mxu0 0.0
        %2360 = vmatprep.subr.mxu0 0.0
        %2361 = vmatpush1.msra.mxu0 0.0
        %2362 = vmatprep.subr.mxu0 0.0
        %2363 = vmatpush1.msra.mxu0 0.0
        %2364 = vmatprep.subr.mxu0 0.0
        %2365 = vmatpush1.msra.mxu0 0.0
        %2366 = vmatprep.subr.mxu0 0.0
        %2367 = vmatpush1.msra.mxu0 0.0
        %2368 = vmatprep.subr.mxu0 0.0
        %2369 = vmatpush1.msra.mxu0 0.0
        %2370 = vmatprep.subr.mxu0 0.0
        %2371 = vmatpush1.msra.mxu0 0.0
        %2372 = vmatprep.subr.mxu0 0.0
        %2373 = vmatpush1.msra.mxu0 0.0
        %2374 = vmatprep.subr.mxu0 0.0
        %2375 = vmatpush1.msra.mxu0 0.0
        %2376 = vmatprep.subr.mxu0 0.0
        %2377 = vmatpush1.msra.mxu0 0.0
        %2378 = vmatprep.subr.mxu0 0.0
        %2379 = vmatpush1.msra.mxu0 0.0
        %2380 = vmatprep.subr.mxu0 0.0
        %2381 = vmatpush1.msra.mxu0 %v1820
        %2382 = vmatprep.subr.mxu0 0.0
        %2383 = vmatpush1.msra.mxu0 %v1815
        %2384 = vmatprep.subr.mxu0 0.0
        %2385 = vmatpush2.msra.mxu0 0.0
        %2386 = vmatprep.subr.mxu0 0.0
        %2387 = vmatpush2.msra.mxu0 0.0
        %2388 = vmatprep.subr.mxu0 0.0
        %2389 = vmatpush2.msra.mxu0 0.0
        %2390 = vmatprep.subr.mxu0 0.0
        %2391 = vmatpush2.msra.mxu0 0.0
        %2392 = vmatprep.subr.mxu0 0.0
        %2393 = vmatpush2.msra.mxu0 0.0
        %2394 = vmatprep.subr.mxu0 0.0
        %2395 = vmatpush2.msra.mxu0 0.0
        %2396 = vmatprep.subr.mxu0 0.0
        %2397 = vmatpush2.msra.mxu0 0.0
        %2398 = vmatprep.subr.mxu0 0.0
        %2399 = vmatpush2.msra.mxu0 0.0
        %2400 = vmatprep.subr.mxu0 0.0
        %2401 = vmatpush2.msra.mxu0 0.0
        %2402 = vmatprep.subr.mxu0 0.0
        %2403 = vmatpush2.msra.mxu0 0.0
        %2404 = vmatprep.subr.mxu0 0.0
        %2405 = vmatpush2.msra.mxu0 0.0
        %2406 = vmatprep.subr.mxu0 0.0
        %2407 = vmatpush2.msra.mxu0 0.0
        %2408 = vmatprep.subr.mxu0 0.0
        %2409 = vmatpush2.msra.mxu0 0.0
        %2410 = vmatprep.subr.mxu0 0.0
        %2411 = vmatpush2.msra.mxu0 0.0
        %2412 = vmatprep.subr.mxu0 0.0
        %2413 = vmatpush2.msra.mxu0 0.0
        %2414 = vmatprep.subr.mxu0 0.0
        %2415 = vmatpush2.msra.mxu0 0.0
        %2416 = vmatprep.mubr.f32.mxu0 0.0
        %2417 = vmatmul.mubr.f32.gmra.mxu0 %v698
        %v2418 = vpop.f32.mrf.mxu0
        %v2419 = vadd.f32 %v2344, %v2418
        %v2420 = vpop.f32.mrf.mxu0
        %2421 = vmatprep.mubr.f32.mxu0 0.0
        %2422 = vmatmul.mubr.f32.gmra.mxu0 %v701
        %v2423 = vpop.f32.mrf.mxu0
        %v2424 = vadd.f32 %v2349, %v2423
        %v2425 = vpop.f32.mrf.mxu0
        %2426 = vdwg.mxu0
        %v2427 = vmul.f32 %v1973, %v1973
        %v2428 = vmul.f32 %v1974, %v1974
        %v2429 = vmul.f32 %v2117, %v2117
        %v2430 = vmul.f32 %v2122, %v2122
        %v2431 = vadd.f32 %v2427, %v2429
        %v2432 = vadd.f32 %v2428, %v2430
        %v2433 = vrsqrt.pop %v2431
        %v2434 = vmul.f32 %v2431, %v2433
        %vm2435 = vcmp.eq.f32.partialorder %v2431, inf
        %v2436 = vsel %vm2435, %v2431, %v2434
        %vm2437 = vcmp.eq.f32.partialorder %v2431, 0.0
        %v2438 = vand.u32 %v2431, 2147483648
        %v2439 = vsel %vm2437, %v2438, %v2436
        %v2440 = vrsqrt.pop %v2432
        %v2441 = vmul.f32 %v2432, %v2440
        %vm2442 = vcmp.eq.f32.partialorder %v2432, inf
        %v2443 = vsel %vm2442, %v2432, %v2441
        %vm2444 = vcmp.eq.f32.partialorder %v2432, 0.0
        %v2445 = vand.u32 %v2432, 2147483648
        %v2446 = vsel %vm2444, %v2445, %v2443
        %v2447 = vmul.f32 %v2275, %v2275
        %v2448 = vmul.f32 %v2276, %v2276
        %v2449 = vmul.f32 %v2419, %v2419
        %v2450 = vmul.f32 %v2424, %v2424
        %v2451 = vadd.f32 %v2447, %v2449
        %v2452 = vadd.f32 %v2448, %v2450
        %v2453 = vrsqrt.pop %v2451
        %v2454 = vmul.f32 %v2451, %v2453
        %vm2455 = vcmp.eq.f32.partialorder %v2451, inf
        %v2456 = vsel %vm2455, %v2451, %v2454
        %vm2457 = vcmp.eq.f32.partialorder %v2451, 0.0
        %v2458 = vand.u32 %v2451, 2147483648
        %v2459 = vsel %vm2457, %v2458, %v2456
        %v2460 = vrsqrt.pop %v2452
        %v2461 = vmul.f32 %v2452, %v2460
        %vm2462 = vcmp.eq.f32.partialorder %v2452, inf
        %v2463 = vsel %vm2462, %v2452, %v2461
        %vm2464 = vcmp.eq.f32.partialorder %v2452, 0.0
        %v2465 = vand.u32 %v2452, 2147483648
        %v2466 = vsel %vm2464, %v2465, %v2463
        %v2467 = vand.u32 2147483647, %v2117
        %v2468 = vand.u32 2147483647, %v2122
        %v2469 = vand.u32 2147483647, %v1973
        %v2470 = vand.u32 2147483647, %v1974
        %v2471 = vmin.f32 %v2469, %v2467
        %v2472 = vmin.f32 %v2470, %v2468
        %v2473 = vmax.f32 %v2469, %v2467
        %v2474 = vmax.f32 %v2470, %v2468
        %vm2475 = vcmp.gt.f32.partialorder %v2473, 0.0
        %vm2476 = vcmp.gt.f32.partialorder %v2474, 0.0
        %v2477 = vsel %vm2475, %v2473, 1.0
        %v2478 = vsel %vm2476, %v2474, 1.0
        %v2479 = vrcp.pop %v2477
        %v2480 = vmul.f32 %v2471, %v2479
        %v2481 = vrcp.pop %v2478
        %v2482 = vmul.f32 %v2472, %v2481
        %vm2483 = vcmp.gt.f32.partialorder %v2480, 0.41421357
        %vm2484 = vcmp.gt.f32.partialorder %v2482, 0.41421357
        %v2485 = vsub.f32 %v2480, 1.0
        %v2486 = vsub.f32 %v2482, 1.0
        %v2487 = vadd.f32 %v2480, 1.0
        %v2488 = vadd.f32 %v2482, 1.0
        %v2489 = vrcp.pop %v2487
        %v2490 = vmul.f32 %v2485, %v2489
        %v2491 = vrcp.pop %v2488
        %v2492 = vmul.f32 %v2486, %v2491
        %v2493 = vsel %vm2483, %v2490, %v2480
        %v2494 = vsel %vm2484, %v2492, %v2482
        %v2495 = vmul.f32 %v2493, %v2493
        %v2496 = vmul.f32 %v2494, %v2494
        %v2497 = vmul.f32 %v2495, 0.080537446
        %v2498 = vmul.f32 %v2496, 0.080537446
        %v2499 = vadd.f32 %v2497, -0.13877685
        %v2500 = vadd.f32 %v2498, -0.13877685
        %v2501 = vmul.f32 %v2499, %v2495
        %v2502 = vmul.f32 %v2500, %v2496
        %v2503 = vadd.f32 %v2501, 0.19977711
        %v2504 = vadd.f32 %v2502, 0.19977711
        %v2505 = vmul.f32 %v2503, %v2495
        %v2506 = vmul.f32 %v2504, %v2496
        %v2507 = vadd.f32 %v2505, -0.3333295
        %v2508 = vadd.f32 %v2506, -0.3333295
        %v2509 = vmul.f32 %v2507, %v2495
        %v2510 = vmul.f32 %v2508, %v2496
        %v2511 = vmul.f32 %v2509, %v2493
        %v2512 = vmul.f32 %v2510, %v2494
        %v2513 = vadd.f32 %v2511, %v2493
        %v2514 = vadd.f32 %v2512, %v2494
        %v2515 = vadd.f32 %v2513, 0.7853982
        %v2516 = vadd.f32 %v2514, 0.7853982
        %v2517 = vsel %vm2483, %v2515, %v2513
        %v2518 = vsel %vm2484, %v2516, %v2514
        %vm2519 = vcmp.gt.f32.partialorder %v2467, %v2469
        %vm2520 = vcmp.gt.f32.partialorder %v2468, %v2470
        %v2521 = vsub.f32 1.5707964, %v2517
        %v2522 = vsub.f32 1.5707964, %v2518
        %v2523 = vsel %vm2519, %v2521, %v2517
        %v2524 = vsel %vm2520, %v2522, %v2518
        %vm2525 = vcmp.lt.f32.partialorder %v1973, 0.0
        %vm2526 = vcmp.lt.f32.partialorder %v1974, 0.0
        %v2527 = vsub.f32 3.1415927, %v2523
        %v2528 = vsub.f32 3.1415927, %v2524
        %v2529 = vsel %vm2525, %v2527, %v2523
        %v2530 = vsel %vm2526, %v2528, %v2524
        %vm2531 = vcmp.lt.f32.partialorder %v2117, 0.0
        %vm2532 = vcmp.lt.f32.partialorder %v2122, 0.0
        %v2533 = vsub.f32 0.0, %v2529
        %v2534 = vsub.f32 0.0, %v2530
        %v2535 = vsel %vm2531, %v2533, %v2529
        %v2536 = vsel %vm2532, %v2534, %v2530
        %v2537 = vand.u32 2147483647, %v2419
        %v2538 = vand.u32 2147483647, %v2424
        %v2539 = vand.u32 2147483647, %v2275
        %v2540 = vand.u32 2147483647, %v2276
        %v2541 = vmin.f32 %v2539, %v2537
        %v2542 = vmin.f32 %v2540, %v2538
        %v2543 = vmax.f32 %v2539, %v2537
        %v2544 = vmax.f32 %v2540, %v2538
        %vm2545 = vcmp.gt.f32.partialorder %v2543, 0.0
        %vm2546 = vcmp.gt.f32.partialorder %v2544, 0.0
        %v2547 = vsel %vm2545, %v2543, 1.0
        %v2548 = vsel %vm2546, %v2544, 1.0
        %v2549 = vrcp.pop %v2547
        %v2550 = vmul.f32 %v2541, %v2549
        %v2551 = vrcp.pop %v2548
        %v2552 = vmul.f32 %v2542, %v2551
        %vm2553 = vcmp.gt.f32.partialorder %v2550, 0.41421357
        %vm2554 = vcmp.gt.f32.partialorder %v2552, 0.41421357
        %v2555 = vsub.f32 %v2550, 1.0
        %v2556 = vsub.f32 %v2552, 1.0
        %v2557 = vadd.f32 %v2550, 1.0
        %v2558 = vadd.f32 %v2552, 1.0
        %v2559 = vrcp.pop %v2557
        %v2560 = vmul.f32 %v2555, %v2559
        %v2561 = vrcp.pop %v2558
        %v2562 = vmul.f32 %v2556, %v2561
        %v2563 = vsel %vm2553, %v2560, %v2550
        %v2564 = vsel %vm2554, %v2562, %v2552
        %v2565 = vmul.f32 %v2563, %v2563
        %v2566 = vmul.f32 %v2564, %v2564
        %v2567 = vmul.f32 %v2565, 0.080537446
        %v2568 = vmul.f32 %v2566, 0.080537446
        %v2569 = vadd.f32 %v2567, -0.13877685
        %v2570 = vadd.f32 %v2568, -0.13877685
        %v2571 = vmul.f32 %v2569, %v2565
        %v2572 = vmul.f32 %v2570, %v2566
        %v2573 = vadd.f32 %v2571, 0.19977711
        %v2574 = vadd.f32 %v2572, 0.19977711
        %v2575 = vmul.f32 %v2573, %v2565
        %v2576 = vmul.f32 %v2574, %v2566
        %v2577 = vadd.f32 %v2575, -0.3333295
        %v2578 = vadd.f32 %v2576, -0.3333295
        %v2579 = vmul.f32 %v2577, %v2565
        %v2580 = vmul.f32 %v2578, %v2566
        %v2581 = vmul.f32 %v2579, %v2563
        %v2582 = vmul.f32 %v2580, %v2564
        %v2583 = vadd.f32 %v2581, %v2563
        %v2584 = vadd.f32 %v2582, %v2564
        %v2585 = vadd.f32 %v2583, 0.7853982
        %v2586 = vadd.f32 %v2584, 0.7853982
        %v2587 = vsel %vm2553, %v2585, %v2583
        %v2588 = vsel %vm2554, %v2586, %v2584
        %vm2589 = vcmp.gt.f32.partialorder %v2537, %v2539
        %vm2590 = vcmp.gt.f32.partialorder %v2538, %v2540
        %v2591 = vsub.f32 1.5707964, %v2587
        %v2592 = vsub.f32 1.5707964, %v2588
        %v2593 = vsel %vm2589, %v2591, %v2587
        %v2594 = vsel %vm2590, %v2592, %v2588
        %vm2595 = vcmp.lt.f32.partialorder %v2275, 0.0
        %vm2596 = vcmp.lt.f32.partialorder %v2276, 0.0
        %v2597 = vsub.f32 3.1415927, %v2593
        %v2598 = vsub.f32 3.1415927, %v2594
        %v2599 = vsel %vm2595, %v2597, %v2593
        %v2600 = vsel %vm2596, %v2598, %v2594
        %vm2601 = vcmp.lt.f32.partialorder %v2419, 0.0
        %vm2602 = vcmp.lt.f32.partialorder %v2424, 0.0
        %v2603 = vsub.f32 0.0, %v2599
        %v2604 = vsub.f32 0.0, %v2600
        %v2605 = vsel %vm2601, %v2603, %v2599
        %v2606 = vsel %vm2602, %v2604, %v2600
        %v2607 = vsub.f32 %v2439, %v2459
        %v2608 = vsub.f32 %v2446, %v2466
        %v2609 = vsub.f32 %v2535, %v2605
        %v2610 = vsub.f32 %v2536, %v2606
        %v2611 = vand.u32 2147483647, %v2607
        %v2612 = vand.u32 2147483647, %v2608
        %v2613 = vadd.f32 %v1503, %v2611
        %v2614 = vadd.f32 %v1504, %v2612
        %v2615 = vand.u32 2147483647, %v2609
        %v2616 = vand.u32 2147483647, %v2610
        %v2617 = vadd.f32 %v2613, %v2615
        %v2618 = vadd.f32 %v2614, %v2616
        %s2619 = scalar_lea.vmem %s311, 32 [#allocation2]
        %v2620 = vld [vmem:[%s2619] sm:$0xff]
        %v2621 = vld [vmem:[%s2619 + $0x8] sm:$0xff]
        %s2622 = scalar_lea.vmem %s320, 32 [#allocation5]
        %v2623 = vld [vmem:[%s2622] sm:$0xff]
        %v2624 = vld [vmem:[%s2622 + $0x8] sm:$0xff]
        %v2626 = vsel %vm384, %v2620, 0
        %v2629 = vsel %vm384, %v2621, 0
        %2631 = vmatprep.subr.mxu0 0.0
        %2632 = vmatpush1.msra.mxu0 0.0
        %2633 = vmatprep.subr.mxu0 0.0
        %2634 = vmatpush1.msra.mxu0 0.0
        %2635 = vmatprep.subr.mxu0 0.0
        %2636 = vmatpush1.msra.mxu0 0.0
        %2637 = vmatprep.subr.mxu0 0.0
        %2638 = vmatpush1.msra.mxu0 0.0
        %2639 = vmatprep.subr.mxu0 0.0
        %2640 = vmatpush1.msra.mxu0 0.0
        %2641 = vmatprep.subr.mxu0 0.0
        %2642 = vmatpush1.msra.mxu0 0.0
        %2643 = vmatprep.subr.mxu0 0.0
        %2644 = vmatpush1.msra.mxu0 0.0
        %2645 = vmatprep.subr.mxu0 0.0
        %2646 = vmatpush1.msra.mxu0 0.0
        %2647 = vmatprep.subr.mxu0 0.0
        %2648 = vmatpush1.msra.mxu0 0.0
        %2649 = vmatprep.subr.mxu0 0.0
        %2650 = vmatpush1.msra.mxu0 0.0
        %2651 = vmatprep.subr.mxu0 0.0
        %2652 = vmatpush1.msra.mxu0 0.0
        %2653 = vmatprep.subr.mxu0 0.0
        %2654 = vmatpush1.msra.mxu0 0.0
        %2655 = vmatprep.subr.mxu0 0.0
        %2656 = vmatpush1.msra.mxu0 0.0
        %2657 = vmatprep.subr.mxu0 0.0
        %2658 = vmatpush1.msra.mxu0 0.0
        %2659 = vmatprep.subr.mxu0 0.0
        %2660 = vmatpush1.msra.mxu0 %v373
        %2661 = vmatprep.subr.mxu0 0.0
        %2662 = vmatpush1.msra.mxu0 %v372
        %2663 = vmatprep.subr.mxu0 0.0
        %2664 = vmatpush2.msra.mxu0 0.0
        %2665 = vmatprep.subr.mxu0 0.0
        %2666 = vmatpush2.msra.mxu0 0.0
        %2667 = vmatprep.subr.mxu0 0.0
        %2668 = vmatpush2.msra.mxu0 0.0
        %2669 = vmatprep.subr.mxu0 0.0
        %2670 = vmatpush2.msra.mxu0 0.0
        %2671 = vmatprep.subr.mxu0 0.0
        %2672 = vmatpush2.msra.mxu0 0.0
        %2673 = vmatprep.subr.mxu0 0.0
        %2674 = vmatpush2.msra.mxu0 0.0
        %2675 = vmatprep.subr.mxu0 0.0
        %2676 = vmatpush2.msra.mxu0 0.0
        %2677 = vmatprep.subr.mxu0 0.0
        %2678 = vmatpush2.msra.mxu0 0.0
        %2679 = vmatprep.subr.mxu0 0.0
        %2680 = vmatpush2.msra.mxu0 0.0
        %2681 = vmatprep.subr.mxu0 0.0
        %2682 = vmatpush2.msra.mxu0 0.0
        %2683 = vmatprep.subr.mxu0 0.0
        %2684 = vmatpush2.msra.mxu0 0.0
        %2685 = vmatprep.subr.mxu0 0.0
        %2686 = vmatpush2.msra.mxu0 0.0
        %2687 = vmatprep.subr.mxu0 0.0
        %2688 = vmatpush2.msra.mxu0 0.0
        %2689 = vmatprep.subr.mxu0 0.0
        %2690 = vmatpush2.msra.mxu0 0.0
        %2691 = vmatprep.subr.mxu0 0.0
        %2692 = vmatpush2.msra.mxu0 0.0
        %2693 = vmatprep.subr.mxu0 0.0
        %2694 = vmatpush2.msra.mxu0 0.0
        %2695 = vmatprep.mubr.f32.mxu0 0.0
        %2696 = vmatmul.mubr.f32.gmra.mxu0 %v2626
        %v2697 = vpop.f32.mrf.mxu0
        %v2698 = vadd.f32 0.0, %v2697
        %v2699 = vpop.f32.mrf.mxu0
        %2700 = vmatprep.mubr.f32.mxu0 0.0
        %2701 = vmatmul.mubr.f32.gmra.mxu0 %v2629
        %v2702 = vpop.f32.mrf.mxu0
        %v2703 = vadd.f32 0.0, %v2702
        %v2704 = vpop.f32.mrf.mxu0
        %2705 = vdwg.mxu0
        %2706 = vmatprep.subr.mxu0 0.0
        %2707 = vmatpush1.msra.mxu0 0.0
        %2708 = vmatprep.subr.mxu0 0.0
        %2709 = vmatpush1.msra.mxu0 0.0
        %2710 = vmatprep.subr.mxu0 0.0
        %2711 = vmatpush1.msra.mxu0 0.0
        %2712 = vmatprep.subr.mxu0 0.0
        %2713 = vmatpush1.msra.mxu0 0.0
        %2714 = vmatprep.subr.mxu0 0.0
        %2715 = vmatpush1.msra.mxu0 0.0
        %2716 = vmatprep.subr.mxu0 0.0
        %2717 = vmatpush1.msra.mxu0 0.0
        %2718 = vmatprep.subr.mxu0 0.0
        %2719 = vmatpush1.msra.mxu0 0.0
        %2720 = vmatprep.subr.mxu0 0.0
        %2721 = vmatpush1.msra.mxu0 0.0
        %2722 = vmatprep.subr.mxu0 0.0
        %2723 = vmatpush1.msra.mxu0 0.0
        %2724 = vmatprep.subr.mxu0 0.0
        %2725 = vmatpush1.msra.mxu0 0.0
        %2726 = vmatprep.subr.mxu0 0.0
        %2727 = vmatpush1.msra.mxu0 0.0
        %2728 = vmatprep.subr.mxu0 0.0
        %2729 = vmatpush1.msra.mxu0 0.0
        %2730 = vmatprep.subr.mxu0 0.0
        %2731 = vmatpush1.msra.mxu0 0.0
        %2732 = vmatprep.subr.mxu0 0.0
        %2733 = vmatpush1.msra.mxu0 0.0
        %2734 = vmatprep.subr.mxu0 0.0
        %2735 = vmatpush1.msra.mxu0 %v375
        %2736 = vmatprep.subr.mxu0 0.0
        %2737 = vmatpush1.msra.mxu0 %v374
        %2738 = vmatprep.subr.mxu0 0.0
        %2739 = vmatpush2.msra.mxu0 0.0
        %2740 = vmatprep.subr.mxu0 0.0
        %2741 = vmatpush2.msra.mxu0 0.0
        %2742 = vmatprep.subr.mxu0 0.0
        %2743 = vmatpush2.msra.mxu0 0.0
        %2744 = vmatprep.subr.mxu0 0.0
        %2745 = vmatpush2.msra.mxu0 0.0
        %2746 = vmatprep.subr.mxu0 0.0
        %2747 = vmatpush2.msra.mxu0 0.0
        %2748 = vmatprep.subr.mxu0 0.0
        %2749 = vmatpush2.msra.mxu0 0.0
        %2750 = vmatprep.subr.mxu0 0.0
        %2751 = vmatpush2.msra.mxu0 0.0
        %2752 = vmatprep.subr.mxu0 0.0
        %2753 = vmatpush2.msra.mxu0 0.0
        %2754 = vmatprep.subr.mxu0 0.0
        %2755 = vmatpush2.msra.mxu0 0.0
        %2756 = vmatprep.subr.mxu0 0.0
        %2757 = vmatpush2.msra.mxu0 0.0
        %2758 = vmatprep.subr.mxu0 0.0
        %2759 = vmatpush2.msra.mxu0 0.0
        %2760 = vmatprep.subr.mxu0 0.0
        %2761 = vmatpush2.msra.mxu0 0.0
        %2762 = vmatprep.subr.mxu0 0.0
        %2763 = vmatpush2.msra.mxu0 0.0
        %2764 = vmatprep.subr.mxu0 0.0
        %2765 = vmatpush2.msra.mxu0 0.0
        %2766 = vmatprep.subr.mxu0 0.0
        %2767 = vmatpush2.msra.mxu0 0.0
        %2768 = vmatprep.subr.mxu0 0.0
        %2769 = vmatpush2.msra.mxu0 0.0
        %2770 = vmatprep.mubr.f32.mxu0 0.0
        %2771 = vmatmul.mubr.f32.gmra.mxu0 %v2626
        %v2772 = vpop.f32.mrf.mxu0
        %v2773 = vadd.f32 0.0, %v2772
        %v2774 = vpop.f32.mrf.mxu0
        %2775 = vmatprep.mubr.f32.mxu0 0.0
        %2776 = vmatmul.mubr.f32.gmra.mxu0 %v2629
        %v2777 = vpop.f32.mrf.mxu0
        %v2778 = vadd.f32 0.0, %v2777
        %v2779 = vpop.f32.mrf.mxu0
        %2780 = vdwg.mxu0
        %v2782 = vsel %vm384, %v2623, 0
        %v2785 = vsel %vm384, %v2624, 0
        %2787 = vmatprep.subr.mxu0 0.0
        %2788 = vmatpush1.msra.mxu0 0.0
        %2789 = vmatprep.subr.mxu0 0.0
        %2790 = vmatpush1.msra.mxu0 0.0
        %2791 = vmatprep.subr.mxu0 0.0
        %2792 = vmatpush1.msra.mxu0 0.0
        %2793 = vmatprep.subr.mxu0 0.0
        %2794 = vmatpush1.msra.mxu0 0.0
        %2795 = vmatprep.subr.mxu0 0.0
        %2796 = vmatpush1.msra.mxu0 0.0
        %2797 = vmatprep.subr.mxu0 0.0
        %2798 = vmatpush1.msra.mxu0 0.0
        %2799 = vmatprep.subr.mxu0 0.0
        %2800 = vmatpush1.msra.mxu0 0.0
        %2801 = vmatprep.subr.mxu0 0.0
        %2802 = vmatpush1.msra.mxu0 0.0
        %2803 = vmatprep.subr.mxu0 0.0
        %2804 = vmatpush1.msra.mxu0 0.0
        %2805 = vmatprep.subr.mxu0 0.0
        %2806 = vmatpush1.msra.mxu0 0.0
        %2807 = vmatprep.subr.mxu0 0.0
        %2808 = vmatpush1.msra.mxu0 0.0
        %2809 = vmatprep.subr.mxu0 0.0
        %2810 = vmatpush1.msra.mxu0 0.0
        %2811 = vmatprep.subr.mxu0 0.0
        %2812 = vmatpush1.msra.mxu0 0.0
        %2813 = vmatprep.subr.mxu0 0.0
        %2814 = vmatpush1.msra.mxu0 0.0
        %2815 = vmatprep.subr.mxu0 0.0
        %2816 = vmatpush1.msra.mxu0 %v373
        %2817 = vmatprep.subr.mxu0 0.0
        %2818 = vmatpush1.msra.mxu0 %v372
        %2819 = vmatprep.subr.mxu0 0.0
        %2820 = vmatpush2.msra.mxu0 0.0
        %2821 = vmatprep.subr.mxu0 0.0
        %2822 = vmatpush2.msra.mxu0 0.0
        %2823 = vmatprep.subr.mxu0 0.0
        %2824 = vmatpush2.msra.mxu0 0.0
        %2825 = vmatprep.subr.mxu0 0.0
        %2826 = vmatpush2.msra.mxu0 0.0
        %2827 = vmatprep.subr.mxu0 0.0
        %2828 = vmatpush2.msra.mxu0 0.0
        %2829 = vmatprep.subr.mxu0 0.0
        %2830 = vmatpush2.msra.mxu0 0.0
        %2831 = vmatprep.subr.mxu0 0.0
        %2832 = vmatpush2.msra.mxu0 0.0
        %2833 = vmatprep.subr.mxu0 0.0
        %2834 = vmatpush2.msra.mxu0 0.0
        %2835 = vmatprep.subr.mxu0 0.0
        %2836 = vmatpush2.msra.mxu0 0.0
        %2837 = vmatprep.subr.mxu0 0.0
        %2838 = vmatpush2.msra.mxu0 0.0
        %2839 = vmatprep.subr.mxu0 0.0
        %2840 = vmatpush2.msra.mxu0 0.0
        %2841 = vmatprep.subr.mxu0 0.0
        %2842 = vmatpush2.msra.mxu0 0.0
        %2843 = vmatprep.subr.mxu0 0.0
        %2844 = vmatpush2.msra.mxu0 0.0
        %2845 = vmatprep.subr.mxu0 0.0
        %2846 = vmatpush2.msra.mxu0 0.0
        %2847 = vmatprep.subr.mxu0 0.0
        %2848 = vmatpush2.msra.mxu0 0.0
        %2849 = vmatprep.subr.mxu0 0.0
        %2850 = vmatpush2.msra.mxu0 0.0
        %2851 = vmatprep.mubr.f32.mxu0 0.0
        %2852 = vmatmul.mubr.f32.gmra.mxu0 %v2782
        %v2853 = vpop.f32.mrf.mxu0
        %v2854 = vadd.f32 0.0, %v2853
        %v2855 = vpop.f32.mrf.mxu0
        %2856 = vmatprep.mubr.f32.mxu0 0.0
        %2857 = vmatmul.mubr.f32.gmra.mxu0 %v2785
        %v2858 = vpop.f32.mrf.mxu0
        %v2859 = vadd.f32 0.0, %v2858
        %v2860 = vpop.f32.mrf.mxu0
        %2861 = vdwg.mxu0
        %2862 = vmatprep.subr.mxu0 0.0
        %2863 = vmatpush1.msra.mxu0 0.0
        %2864 = vmatprep.subr.mxu0 0.0
        %2865 = vmatpush1.msra.mxu0 0.0
        %2866 = vmatprep.subr.mxu0 0.0
        %2867 = vmatpush1.msra.mxu0 0.0
        %2868 = vmatprep.subr.mxu0 0.0
        %2869 = vmatpush1.msra.mxu0 0.0
        %2870 = vmatprep.subr.mxu0 0.0
        %2871 = vmatpush1.msra.mxu0 0.0
        %2872 = vmatprep.subr.mxu0 0.0
        %2873 = vmatpush1.msra.mxu0 0.0
        %2874 = vmatprep.subr.mxu0 0.0
        %2875 = vmatpush1.msra.mxu0 0.0
        %2876 = vmatprep.subr.mxu0 0.0
        %2877 = vmatpush1.msra.mxu0 0.0
        %2878 = vmatprep.subr.mxu0 0.0
        %2879 = vmatpush1.msra.mxu0 0.0
        %2880 = vmatprep.subr.mxu0 0.0
        %2881 = vmatpush1.msra.mxu0 0.0
        %2882 = vmatprep.subr.mxu0 0.0
        %2883 = vmatpush1.msra.mxu0 0.0
        %2884 = vmatprep.subr.mxu0 0.0
        %2885 = vmatpush1.msra.mxu0 0.0
        %2886 = vmatprep.subr.mxu0 0.0
        %2887 = vmatpush1.msra.mxu0 0.0
        %2888 = vmatprep.subr.mxu0 0.0
        %2889 = vmatpush1.msra.mxu0 0.0
        %2890 = vmatprep.subr.mxu0 0.0
        %2891 = vmatpush1.msra.mxu0 %v375
        %2892 = vmatprep.subr.mxu0 0.0
        %2893 = vmatpush1.msra.mxu0 %v374
        %2894 = vmatprep.subr.mxu0 0.0
        %2895 = vmatpush2.msra.mxu0 0.0
        %2896 = vmatprep.subr.mxu0 0.0
        %2897 = vmatpush2.msra.mxu0 0.0
        %2898 = vmatprep.subr.mxu0 0.0
        %2899 = vmatpush2.msra.mxu0 0.0
        %2900 = vmatprep.subr.mxu0 0.0
        %2901 = vmatpush2.msra.mxu0 0.0
        %2902 = vmatprep.subr.mxu0 0.0
        %2903 = vmatpush2.msra.mxu0 0.0
        %2904 = vmatprep.subr.mxu0 0.0
        %2905 = vmatpush2.msra.mxu0 0.0
        %2906 = vmatprep.subr.mxu0 0.0
        %2907 = vmatpush2.msra.mxu0 0.0
        %2908 = vmatprep.subr.mxu0 0.0
        %2909 = vmatpush2.msra.mxu0 0.0
        %2910 = vmatprep.subr.mxu0 0.0
        %2911 = vmatpush2.msra.mxu0 0.0
        %2912 = vmatprep.subr.mxu0 0.0
        %2913 = vmatpush2.msra.mxu0 0.0
        %2914 = vmatprep.subr.mxu0 0.0
        %2915 = vmatpush2.msra.mxu0 0.0
        %2916 = vmatprep.subr.mxu0 0.0
        %2917 = vmatpush2.msra.mxu0 0.0
        %2918 = vmatprep.subr.mxu0 0.0
        %2919 = vmatpush2.msra.mxu0 0.0
        %2920 = vmatprep.subr.mxu0 0.0
        %2921 = vmatpush2.msra.mxu0 0.0
        %2922 = vmatprep.subr.mxu0 0.0
        %2923 = vmatpush2.msra.mxu0 0.0
        %2924 = vmatprep.subr.mxu0 0.0
        %2925 = vmatpush2.msra.mxu0 0.0
        %2926 = vmatprep.mubr.f32.mxu0 0.0
        %2927 = vmatmul.mubr.f32.gmra.mxu0 %v2782
        %v2928 = vpop.f32.mrf.mxu0
        %v2929 = vadd.f32 0.0, %v2928
        %v2930 = vpop.f32.mrf.mxu0
        %2931 = vmatprep.mubr.f32.mxu0 0.0
        %2932 = vmatmul.mubr.f32.gmra.mxu0 %v2785
        %v2933 = vpop.f32.mrf.mxu0
        %v2934 = vadd.f32 0.0, %v2933
        %v2935 = vpop.f32.mrf.mxu0
        %2936 = vdwg.mxu0
        %2937 = vmatprep.subr.mxu0 0.0
        %2938 = vmatpush1.msra.mxu0 0.0
        %2939 = vmatprep.subr.mxu0 0.0
        %2940 = vmatpush1.msra.mxu0 0.0
        %2941 = vmatprep.subr.mxu0 0.0
        %2942 = vmatpush1.msra.mxu0 0.0
        %2943 = vmatprep.subr.mxu0 0.0
        %2944 = vmatpush1.msra.mxu0 0.0
        %2945 = vmatprep.subr.mxu0 0.0
        %2946 = vmatpush1.msra.mxu0 0.0
        %2947 = vmatprep.subr.mxu0 0.0
        %2948 = vmatpush1.msra.mxu0 0.0
        %2949 = vmatprep.subr.mxu0 0.0
        %2950 = vmatpush1.msra.mxu0 0.0
        %2951 = vmatprep.subr.mxu0 0.0
        %2952 = vmatpush1.msra.mxu0 0.0
        %2953 = vmatprep.subr.mxu0 0.0
        %2954 = vmatpush1.msra.mxu0 0.0
        %2955 = vmatprep.subr.mxu0 0.0
        %2956 = vmatpush1.msra.mxu0 0.0
        %2957 = vmatprep.subr.mxu0 0.0
        %2958 = vmatpush1.msra.mxu0 0.0
        %2959 = vmatprep.subr.mxu0 0.0
        %2960 = vmatpush1.msra.mxu0 0.0
        %2961 = vmatprep.subr.mxu0 0.0
        %2962 = vmatpush1.msra.mxu0 0.0
        %2963 = vmatprep.subr.mxu0 0.0
        %2964 = vmatpush1.msra.mxu0 0.0
        %2965 = vmatprep.subr.mxu0 0.0
        %2966 = vmatpush1.msra.mxu0 %v2703
        %2967 = vmatprep.subr.mxu0 0.0
        %2968 = vmatpush1.msra.mxu0 %v2698
        %2969 = vmatprep.subr.mxu0 0.0
        %2970 = vmatpush2.msra.mxu0 0.0
        %2971 = vmatprep.subr.mxu0 0.0
        %2972 = vmatpush2.msra.mxu0 0.0
        %2973 = vmatprep.subr.mxu0 0.0
        %2974 = vmatpush2.msra.mxu0 0.0
        %2975 = vmatprep.subr.mxu0 0.0
        %2976 = vmatpush2.msra.mxu0 0.0
        %2977 = vmatprep.subr.mxu0 0.0
        %2978 = vmatpush2.msra.mxu0 0.0
        %2979 = vmatprep.subr.mxu0 0.0
        %2980 = vmatpush2.msra.mxu0 0.0
        %2981 = vmatprep.subr.mxu0 0.0
        %2982 = vmatpush2.msra.mxu0 0.0
        %2983 = vmatprep.subr.mxu0 0.0
        %2984 = vmatpush2.msra.mxu0 0.0
        %2985 = vmatprep.subr.mxu0 0.0
        %2986 = vmatpush2.msra.mxu0 0.0
        %2987 = vmatprep.subr.mxu0 0.0
        %2988 = vmatpush2.msra.mxu0 0.0
        %2989 = vmatprep.subr.mxu0 0.0
        %2990 = vmatpush2.msra.mxu0 0.0
        %2991 = vmatprep.subr.mxu0 0.0
        %2992 = vmatpush2.msra.mxu0 0.0
        %2993 = vmatprep.subr.mxu0 0.0
        %2994 = vmatpush2.msra.mxu0 0.0
        %2995 = vmatprep.subr.mxu0 0.0
        %2996 = vmatpush2.msra.mxu0 0.0
        %2997 = vmatprep.subr.mxu0 0.0
        %2998 = vmatpush2.msra.mxu0 0.0
        %2999 = vmatprep.subr.mxu0 0.0
        %3000 = vmatpush2.msra.mxu0 0.0
        %3001 = vmatprep.mubr.f32.mxu0 0.0
        %3002 = vmatmul.mubr.f32.gmra.mxu0 %v698
        %v3003 = vpop.f32.mrf.mxu0
        %v3004 = vadd.f32 0.0, %v3003
        %v3005 = vpop.f32.mrf.mxu0
        %3006 = vmatprep.mubr.f32.mxu0 0.0
        %3007 = vmatmul.mubr.f32.gmra.mxu0 %v701
        %v3008 = vpop.f32.mrf.mxu0
        %v3009 = vadd.f32 0.0, %v3008
        %v3010 = vpop.f32.mrf.mxu0
        %3011 = vdwg.mxu0
        %3012 = vmatprep.subr.mxu0 0.0
        %3013 = vmatpush1.msra.mxu0 0.0
        %3014 = vmatprep.subr.mxu0 0.0
        %3015 = vmatpush1.msra.mxu0 0.0
        %3016 = vmatprep.subr.mxu0 0.0
        %3017 = vmatpush1.msra.mxu0 0.0
        %3018 = vmatprep.subr.mxu0 0.0
        %3019 = vmatpush1.msra.mxu0 0.0
        %3020 = vmatprep.subr.mxu0 0.0
        %3021 = vmatpush1.msra.mxu0 0.0
        %3022 = vmatprep.subr.mxu0 0.0
        %3023 = vmatpush1.msra.mxu0 0.0
        %3024 = vmatprep.subr.mxu0 0.0
        %3025 = vmatpush1.msra.mxu0 0.0
        %3026 = vmatprep.subr.mxu0 0.0
        %3027 = vmatpush1.msra.mxu0 0.0
        %3028 = vmatprep.subr.mxu0 0.0
        %3029 = vmatpush1.msra.mxu0 0.0
        %3030 = vmatprep.subr.mxu0 0.0
        %3031 = vmatpush1.msra.mxu0 0.0
        %3032 = vmatprep.subr.mxu0 0.0
        %3033 = vmatpush1.msra.mxu0 0.0
        %3034 = vmatprep.subr.mxu0 0.0
        %3035 = vmatpush1.msra.mxu0 0.0
        %3036 = vmatprep.subr.mxu0 0.0
        %3037 = vmatpush1.msra.mxu0 0.0
        %3038 = vmatprep.subr.mxu0 0.0
        %3039 = vmatpush1.msra.mxu0 0.0
        %3040 = vmatprep.subr.mxu0 0.0
        %3041 = vmatpush1.msra.mxu0 %v2778
        %3042 = vmatprep.subr.mxu0 0.0
        %3043 = vmatpush1.msra.mxu0 %v2773
        %3044 = vmatprep.subr.mxu0 0.0
        %3045 = vmatpush2.msra.mxu0 0.0
        %3046 = vmatprep.subr.mxu0 0.0
        %3047 = vmatpush2.msra.mxu0 0.0
        %3048 = vmatprep.subr.mxu0 0.0
        %3049 = vmatpush2.msra.mxu0 0.0
        %3050 = vmatprep.subr.mxu0 0.0
        %3051 = vmatpush2.msra.mxu0 0.0
        %3052 = vmatprep.subr.mxu0 0.0
        %3053 = vmatpush2.msra.mxu0 0.0
        %3054 = vmatprep.subr.mxu0 0.0
        %3055 = vmatpush2.msra.mxu0 0.0
        %3056 = vmatprep.subr.mxu0 0.0
        %3057 = vmatpush2.msra.mxu0 0.0
        %3058 = vmatprep.subr.mxu0 0.0
        %3059 = vmatpush2.msra.mxu0 0.0
        %3060 = vmatprep.subr.mxu0 0.0
        %3061 = vmatpush2.msra.mxu0 0.0
        %3062 = vmatprep.subr.mxu0 0.0
        %3063 = vmatpush2.msra.mxu0 0.0
        %3064 = vmatprep.subr.mxu0 0.0
        %3065 = vmatpush2.msra.mxu0 0.0
        %3066 = vmatprep.subr.mxu0 0.0
        %3067 = vmatpush2.msra.mxu0 0.0
        %3068 = vmatprep.subr.mxu0 0.0
        %3069 = vmatpush2.msra.mxu0 0.0
        %3070 = vmatprep.subr.mxu0 0.0
        %3071 = vmatpush2.msra.mxu0 0.0
        %3072 = vmatprep.subr.mxu0 0.0
        %3073 = vmatpush2.msra.mxu0 0.0
        %3074 = vmatprep.subr.mxu0 0.0
        %3075 = vmatpush2.msra.mxu0 0.0
        %3076 = vmatprep.mubr.f32.mxu0 0.0
        %3077 = vmatmul.mubr.f32.gmra.mxu0 %v779
        %v3078 = vpop.f32.mrf.mxu0
        %v3079 = vadd.f32 0.0, %v3078
        %v3080 = vpop.f32.mrf.mxu0
        %3081 = vmatprep.mubr.f32.mxu0 0.0
        %3082 = vmatmul.mubr.f32.gmra.mxu0 %v782
        %v3083 = vpop.f32.mrf.mxu0
        %v3084 = vadd.f32 0.0, %v3083
        %v3085 = vpop.f32.mrf.mxu0
        %3086 = vdwg.mxu0
        %v3087 = vsub.f32 %v3004, %v3079
        %v3088 = vsub.f32 %v3009, %v3084
        %3089 = vmatprep.subr.mxu0 0.0
        %3090 = vmatpush1.msra.mxu0 0.0
        %3091 = vmatprep.subr.mxu0 0.0
        %3092 = vmatpush1.msra.mxu0 0.0
        %3093 = vmatprep.subr.mxu0 0.0
        %3094 = vmatpush1.msra.mxu0 0.0
        %3095 = vmatprep.subr.mxu0 0.0
        %3096 = vmatpush1.msra.mxu0 0.0
        %3097 = vmatprep.subr.mxu0 0.0
        %3098 = vmatpush1.msra.mxu0 0.0
        %3099 = vmatprep.subr.mxu0 0.0
        %3100 = vmatpush1.msra.mxu0 0.0
        %3101 = vmatprep.subr.mxu0 0.0
        %3102 = vmatpush1.msra.mxu0 0.0
        %3103 = vmatprep.subr.mxu0 0.0
        %3104 = vmatpush1.msra.mxu0 0.0
        %3105 = vmatprep.subr.mxu0 0.0
        %3106 = vmatpush1.msra.mxu0 0.0
        %3107 = vmatprep.subr.mxu0 0.0
        %3108 = vmatpush1.msra.mxu0 0.0
        %3109 = vmatprep.subr.mxu0 0.0
        %3110 = vmatpush1.msra.mxu0 0.0
        %3111 = vmatprep.subr.mxu0 0.0
        %3112 = vmatpush1.msra.mxu0 0.0
        %3113 = vmatprep.subr.mxu0 0.0
        %3114 = vmatpush1.msra.mxu0 0.0
        %3115 = vmatprep.subr.mxu0 0.0
        %3116 = vmatpush1.msra.mxu0 0.0
        %3117 = vmatprep.subr.mxu0 0.0
        %3118 = vmatpush1.msra.mxu0 %v2703
        %3119 = vmatprep.subr.mxu0 0.0
        %3120 = vmatpush1.msra.mxu0 %v2698
        %3121 = vmatprep.subr.mxu0 0.0
        %3122 = vmatpush2.msra.mxu0 0.0
        %3123 = vmatprep.subr.mxu0 0.0
        %3124 = vmatpush2.msra.mxu0 0.0
        %3125 = vmatprep.subr.mxu0 0.0
        %3126 = vmatpush2.msra.mxu0 0.0
        %3127 = vmatprep.subr.mxu0 0.0
        %3128 = vmatpush2.msra.mxu0 0.0
        %3129 = vmatprep.subr.mxu0 0.0
        %3130 = vmatpush2.msra.mxu0 0.0
        %3131 = vmatprep.subr.mxu0 0.0
        %3132 = vmatpush2.msra.mxu0 0.0
        %3133 = vmatprep.subr.mxu0 0.0
        %3134 = vmatpush2.msra.mxu0 0.0
        %3135 = vmatprep.subr.mxu0 0.0
        %3136 = vmatpush2.msra.mxu0 0.0
        %3137 = vmatprep.subr.mxu0 0.0
        %3138 = vmatpush2.msra.mxu0 0.0
        %3139 = vmatprep.subr.mxu0 0.0
        %3140 = vmatpush2.msra.mxu0 0.0
        %3141 = vmatprep.subr.mxu0 0.0
        %3142 = vmatpush2.msra.mxu0 0.0
        %3143 = vmatprep.subr.mxu0 0.0
        %3144 = vmatpush2.msra.mxu0 0.0
        %3145 = vmatprep.subr.mxu0 0.0
        %3146 = vmatpush2.msra.mxu0 0.0
        %3147 = vmatprep.subr.mxu0 0.0
        %3148 = vmatpush2.msra.mxu0 0.0
        %3149 = vmatprep.subr.mxu0 0.0
        %3150 = vmatpush2.msra.mxu0 0.0
        %3151 = vmatprep.subr.mxu0 0.0
        %3152 = vmatpush2.msra.mxu0 0.0
        %3153 = vmatprep.mubr.f32.mxu0 0.0
        %3154 = vmatmul.mubr.f32.gmra.mxu0 %v779
        %v3155 = vpop.f32.mrf.mxu0
        %v3156 = vadd.f32 0.0, %v3155
        %v3157 = vpop.f32.mrf.mxu0
        %3158 = vmatprep.mubr.f32.mxu0 0.0
        %3159 = vmatmul.mubr.f32.gmra.mxu0 %v782
        %v3160 = vpop.f32.mrf.mxu0
        %v3161 = vadd.f32 0.0, %v3160
        %v3162 = vpop.f32.mrf.mxu0
        %3163 = vdwg.mxu0
        %3164 = vmatprep.subr.mxu0 0.0
        %3165 = vmatpush1.msra.mxu0 0.0
        %3166 = vmatprep.subr.mxu0 0.0
        %3167 = vmatpush1.msra.mxu0 0.0
        %3168 = vmatprep.subr.mxu0 0.0
        %3169 = vmatpush1.msra.mxu0 0.0
        %3170 = vmatprep.subr.mxu0 0.0
        %3171 = vmatpush1.msra.mxu0 0.0
        %3172 = vmatprep.subr.mxu0 0.0
        %3173 = vmatpush1.msra.mxu0 0.0
        %3174 = vmatprep.subr.mxu0 0.0
        %3175 = vmatpush1.msra.mxu0 0.0
        %3176 = vmatprep.subr.mxu0 0.0
        %3177 = vmatpush1.msra.mxu0 0.0
        %3178 = vmatprep.subr.mxu0 0.0
        %3179 = vmatpush1.msra.mxu0 0.0
        %3180 = vmatprep.subr.mxu0 0.0
        %3181 = vmatpush1.msra.mxu0 0.0
        %3182 = vmatprep.subr.mxu0 0.0
        %3183 = vmatpush1.msra.mxu0 0.0
        %3184 = vmatprep.subr.mxu0 0.0
        %3185 = vmatpush1.msra.mxu0 0.0
        %3186 = vmatprep.subr.mxu0 0.0
        %3187 = vmatpush1.msra.mxu0 0.0
        %3188 = vmatprep.subr.mxu0 0.0
        %3189 = vmatpush1.msra.mxu0 0.0
        %3190 = vmatprep.subr.mxu0 0.0
        %3191 = vmatpush1.msra.mxu0 0.0
        %3192 = vmatprep.subr.mxu0 0.0
        %3193 = vmatpush1.msra.mxu0 %v2778
        %3194 = vmatprep.subr.mxu0 0.0
        %3195 = vmatpush1.msra.mxu0 %v2773
        %3196 = vmatprep.subr.mxu0 0.0
        %3197 = vmatpush2.msra.mxu0 0.0
        %3198 = vmatprep.subr.mxu0 0.0
        %3199 = vmatpush2.msra.mxu0 0.0
        %3200 = vmatprep.subr.mxu0 0.0
        %3201 = vmatpush2.msra.mxu0 0.0
        %3202 = vmatprep.subr.mxu0 0.0
        %3203 = vmatpush2.msra.mxu0 0.0
        %3204 = vmatprep.subr.mxu0 0.0
        %3205 = vmatpush2.msra.mxu0 0.0
        %3206 = vmatprep.subr.mxu0 0.0
        %3207 = vmatpush2.msra.mxu0 0.0
        %3208 = vmatprep.subr.mxu0 0.0
        %3209 = vmatpush2.msra.mxu0 0.0
        %3210 = vmatprep.subr.mxu0 0.0
        %3211 = vmatpush2.msra.mxu0 0.0
        %3212 = vmatprep.subr.mxu0 0.0
        %3213 = vmatpush2.msra.mxu0 0.0
        %3214 = vmatprep.subr.mxu0 0.0
        %3215 = vmatpush2.msra.mxu0 0.0
        %3216 = vmatprep.subr.mxu0 0.0
        %3217 = vmatpush2.msra.mxu0 0.0
        %3218 = vmatprep.subr.mxu0 0.0
        %3219 = vmatpush2.msra.mxu0 0.0
        %3220 = vmatprep.subr.mxu0 0.0
        %3221 = vmatpush2.msra.mxu0 0.0
        %3222 = vmatprep.subr.mxu0 0.0
        %3223 = vmatpush2.msra.mxu0 0.0
        %3224 = vmatprep.subr.mxu0 0.0
        %3225 = vmatpush2.msra.mxu0 0.0
        %3226 = vmatprep.subr.mxu0 0.0
        %3227 = vmatpush2.msra.mxu0 0.0
        %3228 = vmatprep.mubr.f32.mxu0 0.0
        %3229 = vmatmul.mubr.f32.gmra.mxu0 %v698
        %v3230 = vpop.f32.mrf.mxu0
        %v3231 = vadd.f32 %v3156, %v3230
        %v3232 = vpop.f32.mrf.mxu0
        %3233 = vmatprep.mubr.f32.mxu0 0.0
        %3234 = vmatmul.mubr.f32.gmra.mxu0 %v701
        %v3235 = vpop.f32.mrf.mxu0
        %v3236 = vadd.f32 %v3161, %v3235
        %v3237 = vpop.f32.mrf.mxu0
        %3238 = vdwg.mxu0
        %3239 = vmatprep.subr.mxu0 0.0
        %3240 = vmatpush1.msra.mxu0 0.0
        %3241 = vmatprep.subr.mxu0 0.0
        %3242 = vmatpush1.msra.mxu0 0.0
        %3243 = vmatprep.subr.mxu0 0.0
        %3244 = vmatpush1.msra.mxu0 0.0
        %3245 = vmatprep.subr.mxu0 0.0
        %3246 = vmatpush1.msra.mxu0 0.0
        %3247 = vmatprep.subr.mxu0 0.0
        %3248 = vmatpush1.msra.mxu0 0.0
        %3249 = vmatprep.subr.mxu0 0.0
        %3250 = vmatpush1.msra.mxu0 0.0
        %3251 = vmatprep.subr.mxu0 0.0
        %3252 = vmatpush1.msra.mxu0 0.0
        %3253 = vmatprep.subr.mxu0 0.0
        %3254 = vmatpush1.msra.mxu0 0.0
        %3255 = vmatprep.subr.mxu0 0.0
        %3256 = vmatpush1.msra.mxu0 0.0
        %3257 = vmatprep.subr.mxu0 0.0
        %3258 = vmatpush1.msra.mxu0 0.0
        %3259 = vmatprep.subr.mxu0 0.0
        %3260 = vmatpush1.msra.mxu0 0.0
        %3261 = vmatprep.subr.mxu0 0.0
        %3262 = vmatpush1.msra.mxu0 0.0
        %3263 = vmatprep.subr.mxu0 0.0
        %3264 = vmatpush1.msra.mxu0 0.0
        %3265 = vmatprep.subr.mxu0 0.0
        %3266 = vmatpush1.msra.mxu0 0.0
        %3267 = vmatprep.subr.mxu0 0.0
        %3268 = vmatpush1.msra.mxu0 %v2859
        %3269 = vmatprep.subr.mxu0 0.0
        %3270 = vmatpush1.msra.mxu0 %v2854
        %3271 = vmatprep.subr.mxu0 0.0
        %3272 = vmatpush2.msra.mxu0 0.0
        %3273 = vmatprep.subr.mxu0 0.0
        %3274 = vmatpush2.msra.mxu0 0.0
        %3275 = vmatprep.subr.mxu0 0.0
        %3276 = vmatpush2.msra.mxu0 0.0
        %3277 = vmatprep.subr.mxu0 0.0
        %3278 = vmatpush2.msra.mxu0 0.0
        %3279 = vmatprep.subr.mxu0 0.0
        %3280 = vmatpush2.msra.mxu0 0.0
        %3281 = vmatprep.subr.mxu0 0.0
        %3282 = vmatpush2.msra.mxu0 0.0
        %3283 = vmatprep.subr.mxu0 0.0
        %3284 = vmatpush2.msra.mxu0 0.0
        %3285 = vmatprep.subr.mxu0 0.0
        %3286 = vmatpush2.msra.mxu0 0.0
        %3287 = vmatprep.subr.mxu0 0.0
        %3288 = vmatpush2.msra.mxu0 0.0
        %3289 = vmatprep.subr.mxu0 0.0
        %3290 = vmatpush2.msra.mxu0 0.0
        %3291 = vmatprep.subr.mxu0 0.0
        %3292 = vmatpush2.msra.mxu0 0.0
        %3293 = vmatprep.subr.mxu0 0.0
        %3294 = vmatpush2.msra.mxu0 0.0
        %3295 = vmatprep.subr.mxu0 0.0
        %3296 = vmatpush2.msra.mxu0 0.0
        %3297 = vmatprep.subr.mxu0 0.0
        %3298 = vmatpush2.msra.mxu0 0.0
        %3299 = vmatprep.subr.mxu0 0.0
        %3300 = vmatpush2.msra.mxu0 0.0
        %3301 = vmatprep.subr.mxu0 0.0
        %3302 = vmatpush2.msra.mxu0 0.0
        %3303 = vmatprep.mubr.f32.mxu0 0.0
        %3304 = vmatmul.mubr.f32.gmra.mxu0 %v698
        %v3305 = vpop.f32.mrf.mxu0
        %v3306 = vadd.f32 0.0, %v3305
        %v3307 = vpop.f32.mrf.mxu0
        %3308 = vmatprep.mubr.f32.mxu0 0.0
        %3309 = vmatmul.mubr.f32.gmra.mxu0 %v701
        %v3310 = vpop.f32.mrf.mxu0
        %v3311 = vadd.f32 0.0, %v3310
        %v3312 = vpop.f32.mrf.mxu0
        %3313 = vdwg.mxu0
        %3314 = vmatprep.subr.mxu0 0.0
        %3315 = vmatpush1.msra.mxu0 0.0
        %3316 = vmatprep.subr.mxu0 0.0
        %3317 = vmatpush1.msra.mxu0 0.0
        %3318 = vmatprep.subr.mxu0 0.0
        %3319 = vmatpush1.msra.mxu0 0.0
        %3320 = vmatprep.subr.mxu0 0.0
        %3321 = vmatpush1.msra.mxu0 0.0
        %3322 = vmatprep.subr.mxu0 0.0
        %3323 = vmatpush1.msra.mxu0 0.0
        %3324 = vmatprep.subr.mxu0 0.0
        %3325 = vmatpush1.msra.mxu0 0.0
        %3326 = vmatprep.subr.mxu0 0.0
        %3327 = vmatpush1.msra.mxu0 0.0
        %3328 = vmatprep.subr.mxu0 0.0
        %3329 = vmatpush1.msra.mxu0 0.0
        %3330 = vmatprep.subr.mxu0 0.0
        %3331 = vmatpush1.msra.mxu0 0.0
        %3332 = vmatprep.subr.mxu0 0.0
        %3333 = vmatpush1.msra.mxu0 0.0
        %3334 = vmatprep.subr.mxu0 0.0
        %3335 = vmatpush1.msra.mxu0 0.0
        %3336 = vmatprep.subr.mxu0 0.0
        %3337 = vmatpush1.msra.mxu0 0.0
        %3338 = vmatprep.subr.mxu0 0.0
        %3339 = vmatpush1.msra.mxu0 0.0
        %3340 = vmatprep.subr.mxu0 0.0
        %3341 = vmatpush1.msra.mxu0 0.0
        %3342 = vmatprep.subr.mxu0 0.0
        %3343 = vmatpush1.msra.mxu0 %v2934
        %3344 = vmatprep.subr.mxu0 0.0
        %3345 = vmatpush1.msra.mxu0 %v2929
        %3346 = vmatprep.subr.mxu0 0.0
        %3347 = vmatpush2.msra.mxu0 0.0
        %3348 = vmatprep.subr.mxu0 0.0
        %3349 = vmatpush2.msra.mxu0 0.0
        %3350 = vmatprep.subr.mxu0 0.0
        %3351 = vmatpush2.msra.mxu0 0.0
        %3352 = vmatprep.subr.mxu0 0.0
        %3353 = vmatpush2.msra.mxu0 0.0
        %3354 = vmatprep.subr.mxu0 0.0
        %3355 = vmatpush2.msra.mxu0 0.0
        %3356 = vmatprep.subr.mxu0 0.0
        %3357 = vmatpush2.msra.mxu0 0.0
        %3358 = vmatprep.subr.mxu0 0.0
        %3359 = vmatpush2.msra.mxu0 0.0
        %3360 = vmatprep.subr.mxu0 0.0
        %3361 = vmatpush2.msra.mxu0 0.0
        %3362 = vmatprep.subr.mxu0 0.0
        %3363 = vmatpush2.msra.mxu0 0.0
        %3364 = vmatprep.subr.mxu0 0.0
        %3365 = vmatpush2.msra.mxu0 0.0
        %3366 = vmatprep.subr.mxu0 0.0
        %3367 = vmatpush2.msra.mxu0 0.0
        %3368 = vmatprep.subr.mxu0 0.0
        %3369 = vmatpush2.msra.mxu0 0.0
        %3370 = vmatprep.subr.mxu0 0.0
        %3371 = vmatpush2.msra.mxu0 0.0
        %3372 = vmatprep.subr.mxu0 0.0
        %3373 = vmatpush2.msra.mxu0 0.0
        %3374 = vmatprep.subr.mxu0 0.0
        %3375 = vmatpush2.msra.mxu0 0.0
        %3376 = vmatprep.subr.mxu0 0.0
        %3377 = vmatpush2.msra.mxu0 0.0
        %3378 = vmatprep.mubr.f32.mxu0 0.0
        %3379 = vmatmul.mubr.f32.gmra.mxu0 %v779
        %v3380 = vpop.f32.mrf.mxu0
        %v3381 = vadd.f32 0.0, %v3380
        %v3382 = vpop.f32.mrf.mxu0
        %3383 = vmatprep.mubr.f32.mxu0 0.0
        %3384 = vmatmul.mubr.f32.gmra.mxu0 %v782
        %v3385 = vpop.f32.mrf.mxu0
        %v3386 = vadd.f32 0.0, %v3385
        %v3387 = vpop.f32.mrf.mxu0
        %3388 = vdwg.mxu0
        %v3389 = vsub.f32 %v3306, %v3381
        %v3390 = vsub.f32 %v3311, %v3386
        %3391 = vmatprep.subr.mxu0 0.0
        %3392 = vmatpush1.msra.mxu0 0.0
        %3393 = vmatprep.subr.mxu0 0.0
        %3394 = vmatpush1.msra.mxu0 0.0
        %3395 = vmatprep.subr.mxu0 0.0
        %3396 = vmatpush1.msra.mxu0 0.0
        %3397 = vmatprep.subr.mxu0 0.0
        %3398 = vmatpush1.msra.mxu0 0.0
        %3399 = vmatprep.subr.mxu0 0.0
        %3400 = vmatpush1.msra.mxu0 0.0
        %3401 = vmatprep.subr.mxu0 0.0
        %3402 = vmatpush1.msra.mxu0 0.0
        %3403 = vmatprep.subr.mxu0 0.0
        %3404 = vmatpush1.msra.mxu0 0.0
        %3405 = vmatprep.subr.mxu0 0.0
        %3406 = vmatpush1.msra.mxu0 0.0
        %3407 = vmatprep.subr.mxu0 0.0
        %3408 = vmatpush1.msra.mxu0 0.0
        %3409 = vmatprep.subr.mxu0 0.0
        %3410 = vmatpush1.msra.mxu0 0.0
        %3411 = vmatprep.subr.mxu0 0.0
        %3412 = vmatpush1.msra.mxu0 0.0
        %3413 = vmatprep.subr.mxu0 0.0
        %3414 = vmatpush1.msra.mxu0 0.0
        %3415 = vmatprep.subr.mxu0 0.0
        %3416 = vmatpush1.msra.mxu0 0.0
        %3417 = vmatprep.subr.mxu0 0.0
        %3418 = vmatpush1.msra.mxu0 0.0
        %3419 = vmatprep.subr.mxu0 0.0
        %3420 = vmatpush1.msra.mxu0 %v2859
        %3421 = vmatprep.subr.mxu0 0.0
        %3422 = vmatpush1.msra.mxu0 %v2854
        %3423 = vmatprep.subr.mxu0 0.0
        %3424 = vmatpush2.msra.mxu0 0.0
        %3425 = vmatprep.subr.mxu0 0.0
        %3426 = vmatpush2.msra.mxu0 0.0
        %3427 = vmatprep.subr.mxu0 0.0
        %3428 = vmatpush2.msra.mxu0 0.0
        %3429 = vmatprep.subr.mxu0 0.0
        %3430 = vmatpush2.msra.mxu0 0.0
        %3431 = vmatprep.subr.mxu0 0.0
        %3432 = vmatpush2.msra.mxu0 0.0
        %3433 = vmatprep.subr.mxu0 0.0
        %3434 = vmatpush2.msra.mxu0 0.0
        %3435 = vmatprep.subr.mxu0 0.0
        %3436 = vmatpush2.msra.mxu0 0.0
        %3437 = vmatprep.subr.mxu0 0.0
        %3438 = vmatpush2.msra.mxu0 0.0
        %3439 = vmatprep.subr.mxu0 0.0
        %3440 = vmatpush2.msra.mxu0 0.0
        %3441 = vmatprep.subr.mxu0 0.0
        %3442 = vmatpush2.msra.mxu0 0.0
        %3443 = vmatprep.subr.mxu0 0.0
        %3444 = vmatpush2.msra.mxu0 0.0
        %3445 = vmatprep.subr.mxu0 0.0
        %3446 = vmatpush2.msra.mxu0 0.0
        %3447 = vmatprep.subr.mxu0 0.0
        %3448 = vmatpush2.msra.mxu0 0.0
        %3449 = vmatprep.subr.mxu0 0.0
        %3450 = vmatpush2.msra.mxu0 0.0
        %3451 = vmatprep.subr.mxu0 0.0
        %3452 = vmatpush2.msra.mxu0 0.0
        %3453 = vmatprep.subr.mxu0 0.0
        %3454 = vmatpush2.msra.mxu0 0.0
        %3455 = vmatprep.mubr.f32.mxu0 0.0
        %3456 = vmatmul.mubr.f32.gmra.mxu0 %v779
        %v3457 = vpop.f32.mrf.mxu0
        %v3458 = vadd.f32 0.0, %v3457
        %v3459 = vpop.f32.mrf.mxu0
        %3460 = vmatprep.mubr.f32.mxu0 0.0
        %3461 = vmatmul.mubr.f32.gmra.mxu0 %v782
        %v3462 = vpop.f32.mrf.mxu0
        %v3463 = vadd.f32 0.0, %v3462
        %v3464 = vpop.f32.mrf.mxu0
        %3465 = vdwg.mxu0
        %3466 = vmatprep.subr.mxu0 0.0
        %3467 = vmatpush1.msra.mxu0 0.0
        %3468 = vmatprep.subr.mxu0 0.0
        %3469 = vmatpush1.msra.mxu0 0.0
        %3470 = vmatprep.subr.mxu0 0.0
        %3471 = vmatpush1.msra.mxu0 0.0
        %3472 = vmatprep.subr.mxu0 0.0
        %3473 = vmatpush1.msra.mxu0 0.0
        %3474 = vmatprep.subr.mxu0 0.0
        %3475 = vmatpush1.msra.mxu0 0.0
        %3476 = vmatprep.subr.mxu0 0.0
        %3477 = vmatpush1.msra.mxu0 0.0
        %3478 = vmatprep.subr.mxu0 0.0
        %3479 = vmatpush1.msra.mxu0 0.0
        %3480 = vmatprep.subr.mxu0 0.0
        %3481 = vmatpush1.msra.mxu0 0.0
        %3482 = vmatprep.subr.mxu0 0.0
        %3483 = vmatpush1.msra.mxu0 0.0
        %3484 = vmatprep.subr.mxu0 0.0
        %3485 = vmatpush1.msra.mxu0 0.0
        %3486 = vmatprep.subr.mxu0 0.0
        %3487 = vmatpush1.msra.mxu0 0.0
        %3488 = vmatprep.subr.mxu0 0.0
        %3489 = vmatpush1.msra.mxu0 0.0
        %3490 = vmatprep.subr.mxu0 0.0
        %3491 = vmatpush1.msra.mxu0 0.0
        %3492 = vmatprep.subr.mxu0 0.0
        %3493 = vmatpush1.msra.mxu0 0.0
        %3494 = vmatprep.subr.mxu0 0.0
        %3495 = vmatpush1.msra.mxu0 %v2934
        %3496 = vmatprep.subr.mxu0 0.0
        %3497 = vmatpush1.msra.mxu0 %v2929
        %3498 = vmatprep.subr.mxu0 0.0
        %3499 = vmatpush2.msra.mxu0 0.0
        %3500 = vmatprep.subr.mxu0 0.0
        %3501 = vmatpush2.msra.mxu0 0.0
        %3502 = vmatprep.subr.mxu0 0.0
        %3503 = vmatpush2.msra.mxu0 0.0
        %3504 = vmatprep.subr.mxu0 0.0
        %3505 = vmatpush2.msra.mxu0 0.0
        %3506 = vmatprep.subr.mxu0 0.0
        %3507 = vmatpush2.msra.mxu0 0.0
        %3508 = vmatprep.subr.mxu0 0.0
        %3509 = vmatpush2.msra.mxu0 0.0
        %3510 = vmatprep.subr.mxu0 0.0
        %3511 = vmatpush2.msra.mxu0 0.0
        %3512 = vmatprep.subr.mxu0 0.0
        %3513 = vmatpush2.msra.mxu0 0.0
        %3514 = vmatprep.subr.mxu0 0.0
        %3515 = vmatpush2.msra.mxu0 0.0
        %3516 = vmatprep.subr.mxu0 0.0
        %3517 = vmatpush2.msra.mxu0 0.0
        %3518 = vmatprep.subr.mxu0 0.0
        %3519 = vmatpush2.msra.mxu0 0.0
        %3520 = vmatprep.subr.mxu0 0.0
        %3521 = vmatpush2.msra.mxu0 0.0
        %3522 = vmatprep.subr.mxu0 0.0
        %3523 = vmatpush2.msra.mxu0 0.0
        %3524 = vmatprep.subr.mxu0 0.0
        %3525 = vmatpush2.msra.mxu0 0.0
        %3526 = vmatprep.subr.mxu0 0.0
        %3527 = vmatpush2.msra.mxu0 0.0
        %3528 = vmatprep.subr.mxu0 0.0
        %3529 = vmatpush2.msra.mxu0 0.0
        %3530 = vmatprep.mubr.f32.mxu0 0.0
        %3531 = vmatmul.mubr.f32.gmra.mxu0 %v698
        %v3532 = vpop.f32.mrf.mxu0
        %v3533 = vadd.f32 %v3458, %v3532
        %v3534 = vpop.f32.mrf.mxu0
        %3535 = vmatprep.mubr.f32.mxu0 0.0
        %3536 = vmatmul.mubr.f32.gmra.mxu0 %v701
        %v3537 = vpop.f32.mrf.mxu0
        %v3538 = vadd.f32 %v3463, %v3537
        %v3539 = vpop.f32.mrf.mxu0
        %3540 = vdwg.mxu0
        %v3541 = vmul.f32 %v3087, %v3087
        %v3542 = vmul.f32 %v3088, %v3088
        %v3543 = vmul.f32 %v3231, %v3231
        %v3544 = vmul.f32 %v3236, %v3236
        %v3545 = vadd.f32 %v3541, %v3543
        %v3546 = vadd.f32 %v3542, %v3544
        %v3547 = vrsqrt.pop %v3545
        %v3548 = vmul.f32 %v3545, %v3547
        %vm3549 = vcmp.eq.f32.partialorder %v3545, inf
        %v3550 = vsel %vm3549, %v3545, %v3548
        %vm3551 = vcmp.eq.f32.partialorder %v3545, 0.0
        %v3552 = vand.u32 %v3545, 2147483648
        %v3553 = vsel %vm3551, %v3552, %v3550
        %v3554 = vrsqrt.pop %v3546
        %v3555 = vmul.f32 %v3546, %v3554
        %vm3556 = vcmp.eq.f32.partialorder %v3546, inf
        %v3557 = vsel %vm3556, %v3546, %v3555
        %vm3558 = vcmp.eq.f32.partialorder %v3546, 0.0
        %v3559 = vand.u32 %v3546, 2147483648
        %v3560 = vsel %vm3558, %v3559, %v3557
        %v3561 = vmul.f32 %v3389, %v3389
        %v3562 = vmul.f32 %v3390, %v3390
        %v3563 = vmul.f32 %v3533, %v3533
        %v3564 = vmul.f32 %v3538, %v3538
        %v3565 = vadd.f32 %v3561, %v3563
        %v3566 = vadd.f32 %v3562, %v3564
        %v3567 = vrsqrt.pop %v3565
        %v3568 = vmul.f32 %v3565, %v3567
        %vm3569 = vcmp.eq.f32.partialorder %v3565, inf
        %v3570 = vsel %vm3569, %v3565, %v3568
        %vm3571 = vcmp.eq.f32.partialorder %v3565, 0.0
        %v3572 = vand.u32 %v3565, 2147483648
        %v3573 = vsel %vm3571, %v3572, %v3570
        %v3574 = vrsqrt.pop %v3566
        %v3575 = vmul.f32 %v3566, %v3574
        %vm3576 = vcmp.eq.f32.partialorder %v3566, inf
        %v3577 = vsel %vm3576, %v3566, %v3575
        %vm3578 = vcmp.eq.f32.partialorder %v3566, 0.0
        %v3579 = vand.u32 %v3566, 2147483648
        %v3580 = vsel %vm3578, %v3579, %v3577
        %v3581 = vand.u32 2147483647, %v3231
        %v3582 = vand.u32 2147483647, %v3236
        %v3583 = vand.u32 2147483647, %v3087
        %v3584 = vand.u32 2147483647, %v3088
        %v3585 = vmin.f32 %v3583, %v3581
        %v3586 = vmin.f32 %v3584, %v3582
        %v3587 = vmax.f32 %v3583, %v3581
        %v3588 = vmax.f32 %v3584, %v3582
        %vm3589 = vcmp.gt.f32.partialorder %v3587, 0.0
        %vm3590 = vcmp.gt.f32.partialorder %v3588, 0.0
        %v3591 = vsel %vm3589, %v3587, 1.0
        %v3592 = vsel %vm3590, %v3588, 1.0
        %v3593 = vrcp.pop %v3591
        %v3594 = vmul.f32 %v3585, %v3593
        %v3595 = vrcp.pop %v3592
        %v3596 = vmul.f32 %v3586, %v3595
        %vm3597 = vcmp.gt.f32.partialorder %v3594, 0.41421357
        %vm3598 = vcmp.gt.f32.partialorder %v3596, 0.41421357
        %v3599 = vsub.f32 %v3594, 1.0
        %v3600 = vsub.f32 %v3596, 1.0
        %v3601 = vadd.f32 %v3594, 1.0
        %v3602 = vadd.f32 %v3596, 1.0
        %v3603 = vrcp.pop %v3601
        %v3604 = vmul.f32 %v3599, %v3603
        %v3605 = vrcp.pop %v3602
        %v3606 = vmul.f32 %v3600, %v3605
        %v3607 = vsel %vm3597, %v3604, %v3594
        %v3608 = vsel %vm3598, %v3606, %v3596
        %v3609 = vmul.f32 %v3607, %v3607
        %v3610 = vmul.f32 %v3608, %v3608
        %v3611 = vmul.f32 %v3609, 0.080537446
        %v3612 = vmul.f32 %v3610, 0.080537446
        %v3613 = vadd.f32 %v3611, -0.13877685
        %v3614 = vadd.f32 %v3612, -0.13877685
        %v3615 = vmul.f32 %v3613, %v3609
        %v3616 = vmul.f32 %v3614, %v3610
        %v3617 = vadd.f32 %v3615, 0.19977711
        %v3618 = vadd.f32 %v3616, 0.19977711
        %v3619 = vmul.f32 %v3617, %v3609
        %v3620 = vmul.f32 %v3618, %v3610
        %v3621 = vadd.f32 %v3619, -0.3333295
        %v3622 = vadd.f32 %v3620, -0.3333295
        %v3623 = vmul.f32 %v3621, %v3609
        %v3624 = vmul.f32 %v3622, %v3610
        %v3625 = vmul.f32 %v3623, %v3607
        %v3626 = vmul.f32 %v3624, %v3608
        %v3627 = vadd.f32 %v3625, %v3607
        %v3628 = vadd.f32 %v3626, %v3608
        %v3629 = vadd.f32 %v3627, 0.7853982
        %v3630 = vadd.f32 %v3628, 0.7853982
        %v3631 = vsel %vm3597, %v3629, %v3627
        %v3632 = vsel %vm3598, %v3630, %v3628
        %vm3633 = vcmp.gt.f32.partialorder %v3581, %v3583
        %vm3634 = vcmp.gt.f32.partialorder %v3582, %v3584
        %v3635 = vsub.f32 1.5707964, %v3631
        %v3636 = vsub.f32 1.5707964, %v3632
        %v3637 = vsel %vm3633, %v3635, %v3631
        %v3638 = vsel %vm3634, %v3636, %v3632
        %vm3639 = vcmp.lt.f32.partialorder %v3087, 0.0
        %vm3640 = vcmp.lt.f32.partialorder %v3088, 0.0
        %v3641 = vsub.f32 3.1415927, %v3637
        %v3642 = vsub.f32 3.1415927, %v3638
        %v3643 = vsel %vm3639, %v3641, %v3637
        %v3644 = vsel %vm3640, %v3642, %v3638
        %vm3645 = vcmp.lt.f32.partialorder %v3231, 0.0
        %vm3646 = vcmp.lt.f32.partialorder %v3236, 0.0
        %v3647 = vsub.f32 0.0, %v3643
        %v3648 = vsub.f32 0.0, %v3644
        %v3649 = vsel %vm3645, %v3647, %v3643
        %v3650 = vsel %vm3646, %v3648, %v3644
        %v3651 = vand.u32 2147483647, %v3533
        %v3652 = vand.u32 2147483647, %v3538
        %v3653 = vand.u32 2147483647, %v3389
        %v3654 = vand.u32 2147483647, %v3390
        %v3655 = vmin.f32 %v3653, %v3651
        %v3656 = vmin.f32 %v3654, %v3652
        %v3657 = vmax.f32 %v3653, %v3651
        %v3658 = vmax.f32 %v3654, %v3652
        %vm3659 = vcmp.gt.f32.partialorder %v3657, 0.0
        %vm3660 = vcmp.gt.f32.partialorder %v3658, 0.0
        %v3661 = vsel %vm3659, %v3657, 1.0
        %v3662 = vsel %vm3660, %v3658, 1.0
        %v3663 = vrcp.pop %v3661
        %v3664 = vmul.f32 %v3655, %v3663
        %v3665 = vrcp.pop %v3662
        %v3666 = vmul.f32 %v3656, %v3665
        %vm3667 = vcmp.gt.f32.partialorder %v3664, 0.41421357
        %vm3668 = vcmp.gt.f32.partialorder %v3666, 0.41421357
        %v3669 = vsub.f32 %v3664, 1.0
        %v3670 = vsub.f32 %v3666, 1.0
        %v3671 = vadd.f32 %v3664, 1.0
        %v3672 = vadd.f32 %v3666, 1.0
        %v3673 = vrcp.pop %v3671
        %v3674 = vmul.f32 %v3669, %v3673
        %v3675 = vrcp.pop %v3672
        %v3676 = vmul.f32 %v3670, %v3675
        %v3677 = vsel %vm3667, %v3674, %v3664
        %v3678 = vsel %vm3668, %v3676, %v3666
        %v3679 = vmul.f32 %v3677, %v3677
        %v3680 = vmul.f32 %v3678, %v3678
        %v3681 = vmul.f32 %v3679, 0.080537446
        %v3682 = vmul.f32 %v3680, 0.080537446
        %v3683 = vadd.f32 %v3681, -0.13877685
        %v3684 = vadd.f32 %v3682, -0.13877685
        %v3685 = vmul.f32 %v3683, %v3679
        %v3686 = vmul.f32 %v3684, %v3680
        %v3687 = vadd.f32 %v3685, 0.19977711
        %v3688 = vadd.f32 %v3686, 0.19977711
        %v3689 = vmul.f32 %v3687, %v3679
        %v3690 = vmul.f32 %v3688, %v3680
        %v3691 = vadd.f32 %v3689, -0.3333295
        %v3692 = vadd.f32 %v3690, -0.3333295
        %v3693 = vmul.f32 %v3691, %v3679
        %v3694 = vmul.f32 %v3692, %v3680
        %v3695 = vmul.f32 %v3693, %v3677
        %v3696 = vmul.f32 %v3694, %v3678
        %v3697 = vadd.f32 %v3695, %v3677
        %v3698 = vadd.f32 %v3696, %v3678
        %v3699 = vadd.f32 %v3697, 0.7853982
        %v3700 = vadd.f32 %v3698, 0.7853982
        %v3701 = vsel %vm3667, %v3699, %v3697
        %v3702 = vsel %vm3668, %v3700, %v3698
        %vm3703 = vcmp.gt.f32.partialorder %v3651, %v3653
        %vm3704 = vcmp.gt.f32.partialorder %v3652, %v3654
        %v3705 = vsub.f32 1.5707964, %v3701
        %v3706 = vsub.f32 1.5707964, %v3702
        %v3707 = vsel %vm3703, %v3705, %v3701
        %v3708 = vsel %vm3704, %v3706, %v3702
        %vm3709 = vcmp.lt.f32.partialorder %v3389, 0.0
        %vm3710 = vcmp.lt.f32.partialorder %v3390, 0.0
        %v3711 = vsub.f32 3.1415927, %v3707
        %v3712 = vsub.f32 3.1415927, %v3708
        %v3713 = vsel %vm3709, %v3711, %v3707
        %v3714 = vsel %vm3710, %v3712, %v3708
        %vm3715 = vcmp.lt.f32.partialorder %v3533, 0.0
        %vm3716 = vcmp.lt.f32.partialorder %v3538, 0.0
        %v3717 = vsub.f32 0.0, %v3713
        %v3718 = vsub.f32 0.0, %v3714
        %v3719 = vsel %vm3715, %v3717, %v3713
        %v3720 = vsel %vm3716, %v3718, %v3714
        %v3721 = vsub.f32 %v3553, %v3573
        %v3722 = vsub.f32 %v3560, %v3580
        %v3723 = vsub.f32 %v3649, %v3719
        %v3724 = vsub.f32 %v3650, %v3720
        %v3725 = vand.u32 2147483647, %v3721
        %v3726 = vand.u32 2147483647, %v3722
        %v3727 = vadd.f32 %v2617, %v3725
        %v3728 = vadd.f32 %v2618, %v3726
        %v3729 = vand.u32 2147483647, %v3723
        %v3730 = vand.u32 2147483647, %v3724
        %v3731 = vadd.f32 %v3727, %v3729
        %v3732 = vadd.f32 %v3728, %v3730
        %s3733 = scalar_lea.vmem %s311, 48 [#allocation2]
        %v3734 = vld [vmem:[%s3733] sm:$0xff]
        %v3735 = vld [vmem:[%s3733 + $0x8] sm:$0xff]
        %s3736 = scalar_lea.vmem %s320, 48 [#allocation5]
        %v3737 = vld [vmem:[%s3736] sm:$0xff]
        %v3738 = vld [vmem:[%s3736 + $0x8] sm:$0xff]
        %v3740 = vsel %vm384, %v3734, 0
        %v3743 = vsel %vm384, %v3735, 0
        %3745 = vmatprep.subr.mxu0 0.0
        %3746 = vmatpush1.msra.mxu0 0.0
        %3747 = vmatprep.subr.mxu0 0.0
        %3748 = vmatpush1.msra.mxu0 0.0
        %3749 = vmatprep.subr.mxu0 0.0
        %3750 = vmatpush1.msra.mxu0 0.0
        %3751 = vmatprep.subr.mxu0 0.0
        %3752 = vmatpush1.msra.mxu0 0.0
        %3753 = vmatprep.subr.mxu0 0.0
        %3754 = vmatpush1.msra.mxu0 0.0
        %3755 = vmatprep.subr.mxu0 0.0
        %3756 = vmatpush1.msra.mxu0 0.0
        %3757 = vmatprep.subr.mxu0 0.0
        %3758 = vmatpush1.msra.mxu0 0.0
        %3759 = vmatprep.subr.mxu0 0.0
        %3760 = vmatpush1.msra.mxu0 0.0
        %3761 = vmatprep.subr.mxu0 0.0
        %3762 = vmatpush1.msra.mxu0 0.0
        %3763 = vmatprep.subr.mxu0 0.0
        %3764 = vmatpush1.msra.mxu0 0.0
        %3765 = vmatprep.subr.mxu0 0.0
        %3766 = vmatpush1.msra.mxu0 0.0
        %3767 = vmatprep.subr.mxu0 0.0
        %3768 = vmatpush1.msra.mxu0 0.0
        %3769 = vmatprep.subr.mxu0 0.0
        %3770 = vmatpush1.msra.mxu0 0.0
        %3771 = vmatprep.subr.mxu0 0.0
        %3772 = vmatpush1.msra.mxu0 0.0
        %3773 = vmatprep.subr.mxu0 0.0
        %3774 = vmatpush1.msra.mxu0 %v373
        %3775 = vmatprep.subr.mxu0 0.0
        %3776 = vmatpush1.msra.mxu0 %v372
        %3777 = vmatprep.subr.mxu0 0.0
        %3778 = vmatpush2.msra.mxu0 0.0
        %3779 = vmatprep.subr.mxu0 0.0
        %3780 = vmatpush2.msra.mxu0 0.0
        %3781 = vmatprep.subr.mxu0 0.0
        %3782 = vmatpush2.msra.mxu0 0.0
        %3783 = vmatprep.subr.mxu0 0.0
        %3784 = vmatpush2.msra.mxu0 0.0
        %3785 = vmatprep.subr.mxu0 0.0
        %3786 = vmatpush2.msra.mxu0 0.0
        %3787 = vmatprep.subr.mxu0 0.0
        %3788 = vmatpush2.msra.mxu0 0.0
        %3789 = vmatprep.subr.mxu0 0.0
        %3790 = vmatpush2.msra.mxu0 0.0
        %3791 = vmatprep.subr.mxu0 0.0
        %3792 = vmatpush2.msra.mxu0 0.0
        %3793 = vmatprep.subr.mxu0 0.0
        %3794 = vmatpush2.msra.mxu0 0.0
        %3795 = vmatprep.subr.mxu0 0.0
        %3796 = vmatpush2.msra.mxu0 0.0
        %3797 = vmatprep.subr.mxu0 0.0
        %3798 = vmatpush2.msra.mxu0 0.0
        %3799 = vmatprep.subr.mxu0 0.0
        %3800 = vmatpush2.msra.mxu0 0.0
        %3801 = vmatprep.subr.mxu0 0.0
        %3802 = vmatpush2.msra.mxu0 0.0
        %3803 = vmatprep.subr.mxu0 0.0
        %3804 = vmatpush2.msra.mxu0 0.0
        %3805 = vmatprep.subr.mxu0 0.0
        %3806 = vmatpush2.msra.mxu0 0.0
        %3807 = vmatprep.subr.mxu0 0.0
        %3808 = vmatpush2.msra.mxu0 0.0
        %3809 = vmatprep.mubr.f32.mxu0 0.0
        %3810 = vmatmul.mubr.f32.gmra.mxu0 %v3740
        %v3811 = vpop.f32.mrf.mxu0
        %v3812 = vadd.f32 0.0, %v3811
        %v3813 = vpop.f32.mrf.mxu0
        %3814 = vmatprep.mubr.f32.mxu0 0.0
        %3815 = vmatmul.mubr.f32.gmra.mxu0 %v3743
        %v3816 = vpop.f32.mrf.mxu0
        %v3817 = vadd.f32 0.0, %v3816
        %v3818 = vpop.f32.mrf.mxu0
        %3819 = vdwg.mxu0
        %3820 = vmatprep.subr.mxu0 0.0
        %3821 = vmatpush1.msra.mxu0 0.0
        %3822 = vmatprep.subr.mxu0 0.0
        %3823 = vmatpush1.msra.mxu0 0.0
        %3824 = vmatprep.subr.mxu0 0.0
        %3825 = vmatpush1.msra.mxu0 0.0
        %3826 = vmatprep.subr.mxu0 0.0
        %3827 = vmatpush1.msra.mxu0 0.0
        %3828 = vmatprep.subr.mxu0 0.0
        %3829 = vmatpush1.msra.mxu0 0.0
        %3830 = vmatprep.subr.mxu0 0.0
        %3831 = vmatpush1.msra.mxu0 0.0
        %3832 = vmatprep.subr.mxu0 0.0
        %3833 = vmatpush1.msra.mxu0 0.0
        %3834 = vmatprep.subr.mxu0 0.0
        %3835 = vmatpush1.msra.mxu0 0.0
        %3836 = vmatprep.subr.mxu0 0.0
        %3837 = vmatpush1.msra.mxu0 0.0
        %3838 = vmatprep.subr.mxu0 0.0
        %3839 = vmatpush1.msra.mxu0 0.0
        %3840 = vmatprep.subr.mxu0 0.0
        %3841 = vmatpush1.msra.mxu0 0.0
        %3842 = vmatprep.subr.mxu0 0.0
        %3843 = vmatpush1.msra.mxu0 0.0
        %3844 = vmatprep.subr.mxu0 0.0
        %3845 = vmatpush1.msra.mxu0 0.0
        %3846 = vmatprep.subr.mxu0 0.0
        %3847 = vmatpush1.msra.mxu0 0.0
        %3848 = vmatprep.subr.mxu0 0.0
        %3849 = vmatpush1.msra.mxu0 %v375
        %3850 = vmatprep.subr.mxu0 0.0
        %3851 = vmatpush1.msra.mxu0 %v374
        %3852 = vmatprep.subr.mxu0 0.0
        %3853 = vmatpush2.msra.mxu0 0.0
        %3854 = vmatprep.subr.mxu0 0.0
        %3855 = vmatpush2.msra.mxu0 0.0
        %3856 = vmatprep.subr.mxu0 0.0
        %3857 = vmatpush2.msra.mxu0 0.0
        %3858 = vmatprep.subr.mxu0 0.0
        %3859 = vmatpush2.msra.mxu0 0.0
        %3860 = vmatprep.subr.mxu0 0.0
        %3861 = vmatpush2.msra.mxu0 0.0
        %3862 = vmatprep.subr.mxu0 0.0
        %3863 = vmatpush2.msra.mxu0 0.0
        %3864 = vmatprep.subr.mxu0 0.0
        %3865 = vmatpush2.msra.mxu0 0.0
        %3866 = vmatprep.subr.mxu0 0.0
        %3867 = vmatpush2.msra.mxu0 0.0
        %3868 = vmatprep.subr.mxu0 0.0
        %3869 = vmatpush2.msra.mxu0 0.0
        %3870 = vmatprep.subr.mxu0 0.0
        %3871 = vmatpush2.msra.mxu0 0.0
        %3872 = vmatprep.subr.mxu0 0.0
        %3873 = vmatpush2.msra.mxu0 0.0
        %3874 = vmatprep.subr.mxu0 0.0
        %3875 = vmatpush2.msra.mxu0 0.0
        %3876 = vmatprep.subr.mxu0 0.0
        %3877 = vmatpush2.msra.mxu0 0.0
        %3878 = vmatprep.subr.mxu0 0.0
        %3879 = vmatpush2.msra.mxu0 0.0
        %3880 = vmatprep.subr.mxu0 0.0
        %3881 = vmatpush2.msra.mxu0 0.0
        %3882 = vmatprep.subr.mxu0 0.0
        %3883 = vmatpush2.msra.mxu0 0.0
        %3884 = vmatprep.mubr.f32.mxu0 0.0
        %3885 = vmatmul.mubr.f32.gmra.mxu0 %v3740
        %v3886 = vpop.f32.mrf.mxu0
        %v3887 = vadd.f32 0.0, %v3886
        %v3888 = vpop.f32.mrf.mxu0
        %3889 = vmatprep.mubr.f32.mxu0 0.0
        %3890 = vmatmul.mubr.f32.gmra.mxu0 %v3743
        %v3891 = vpop.f32.mrf.mxu0
        %v3892 = vadd.f32 0.0, %v3891
        %v3893 = vpop.f32.mrf.mxu0
        %3894 = vdwg.mxu0
        %v3896 = vsel %vm384, %v3737, 0
        %v3899 = vsel %vm384, %v3738, 0
        %3901 = vmatprep.subr.mxu0 0.0
        %3902 = vmatpush1.msra.mxu0 0.0
        %3903 = vmatprep.subr.mxu0 0.0
        %3904 = vmatpush1.msra.mxu0 0.0
        %3905 = vmatprep.subr.mxu0 0.0
        %3906 = vmatpush1.msra.mxu0 0.0
        %3907 = vmatprep.subr.mxu0 0.0
        %3908 = vmatpush1.msra.mxu0 0.0
        %3909 = vmatprep.subr.mxu0 0.0
        %3910 = vmatpush1.msra.mxu0 0.0
        %3911 = vmatprep.subr.mxu0 0.0
        %3912 = vmatpush1.msra.mxu0 0.0
        %3913 = vmatprep.subr.mxu0 0.0
        %3914 = vmatpush1.msra.mxu0 0.0
        %3915 = vmatprep.subr.mxu0 0.0
        %3916 = vmatpush1.msra.mxu0 0.0
        %3917 = vmatprep.subr.mxu0 0.0
        %3918 = vmatpush1.msra.mxu0 0.0
        %3919 = vmatprep.subr.mxu0 0.0
        %3920 = vmatpush1.msra.mxu0 0.0
        %3921 = vmatprep.subr.mxu0 0.0
        %3922 = vmatpush1.msra.mxu0 0.0
        %3923 = vmatprep.subr.mxu0 0.0
        %3924 = vmatpush1.msra.mxu0 0.0
        %3925 = vmatprep.subr.mxu0 0.0
        %3926 = vmatpush1.msra.mxu0 0.0
        %3927 = vmatprep.subr.mxu0 0.0
        %3928 = vmatpush1.msra.mxu0 0.0
        %3929 = vmatprep.subr.mxu0 0.0
        %3930 = vmatpush1.msra.mxu0 %v373
        %3931 = vmatprep.subr.mxu0 0.0
        %3932 = vmatpush1.msra.mxu0 %v372
        %3933 = vmatprep.subr.mxu0 0.0
        %3934 = vmatpush2.msra.mxu0 0.0
        %3935 = vmatprep.subr.mxu0 0.0
        %3936 = vmatpush2.msra.mxu0 0.0
        %3937 = vmatprep.subr.mxu0 0.0
        %3938 = vmatpush2.msra.mxu0 0.0
        %3939 = vmatprep.subr.mxu0 0.0
        %3940 = vmatpush2.msra.mxu0 0.0
        %3941 = vmatprep.subr.mxu0 0.0
        %3942 = vmatpush2.msra.mxu0 0.0
        %3943 = vmatprep.subr.mxu0 0.0
        %3944 = vmatpush2.msra.mxu0 0.0
        %3945 = vmatprep.subr.mxu0 0.0
        %3946 = vmatpush2.msra.mxu0 0.0
        %3947 = vmatprep.subr.mxu0 0.0
        %3948 = vmatpush2.msra.mxu0 0.0
        %3949 = vmatprep.subr.mxu0 0.0
        %3950 = vmatpush2.msra.mxu0 0.0
        %3951 = vmatprep.subr.mxu0 0.0
        %3952 = vmatpush2.msra.mxu0 0.0
        %3953 = vmatprep.subr.mxu0 0.0
        %3954 = vmatpush2.msra.mxu0 0.0
        %3955 = vmatprep.subr.mxu0 0.0
        %3956 = vmatpush2.msra.mxu0 0.0
        %3957 = vmatprep.subr.mxu0 0.0
        %3958 = vmatpush2.msra.mxu0 0.0
        %3959 = vmatprep.subr.mxu0 0.0
        %3960 = vmatpush2.msra.mxu0 0.0
        %3961 = vmatprep.subr.mxu0 0.0
        %3962 = vmatpush2.msra.mxu0 0.0
        %3963 = vmatprep.subr.mxu0 0.0
        %3964 = vmatpush2.msra.mxu0 0.0
        %3965 = vmatprep.mubr.f32.mxu0 0.0
        %3966 = vmatmul.mubr.f32.gmra.mxu0 %v3896
        %v3967 = vpop.f32.mrf.mxu0
        %v3968 = vadd.f32 0.0, %v3967
        %v3969 = vpop.f32.mrf.mxu0
        %3970 = vmatprep.mubr.f32.mxu0 0.0
        %3971 = vmatmul.mubr.f32.gmra.mxu0 %v3899
        %v3972 = vpop.f32.mrf.mxu0
        %v3973 = vadd.f32 0.0, %v3972
        %v3974 = vpop.f32.mrf.mxu0
        %3975 = vdwg.mxu0
        %3976 = vmatprep.subr.mxu0 0.0
        %3977 = vmatpush1.msra.mxu0 0.0
        %3978 = vmatprep.subr.mxu0 0.0
        %3979 = vmatpush1.msra.mxu0 0.0
        %3980 = vmatprep.subr.mxu0 0.0
        %3981 = vmatpush1.msra.mxu0 0.0
        %3982 = vmatprep.subr.mxu0 0.0
        %3983 = vmatpush1.msra.mxu0 0.0
        %3984 = vmatprep.subr.mxu0 0.0
        %3985 = vmatpush1.msra.mxu0 0.0
        %3986 = vmatprep.subr.mxu0 0.0
        %3987 = vmatpush1.msra.mxu0 0.0
        %3988 = vmatprep.subr.mxu0 0.0
        %3989 = vmatpush1.msra.mxu0 0.0
        %3990 = vmatprep.subr.mxu0 0.0
        %3991 = vmatpush1.msra.mxu0 0.0
        %3992 = vmatprep.subr.mxu0 0.0
        %3993 = vmatpush1.msra.mxu0 0.0
        %3994 = vmatprep.subr.mxu0 0.0
        %3995 = vmatpush1.msra.mxu0 0.0
        %3996 = vmatprep.subr.mxu0 0.0
        %3997 = vmatpush1.msra.mxu0 0.0
        %3998 = vmatprep.subr.mxu0 0.0
        %3999 = vmatpush1.msra.mxu0 0.0
        %4000 = vmatprep.subr.mxu0 0.0
        %4001 = vmatpush1.msra.mxu0 0.0
        %4002 = vmatprep.subr.mxu0 0.0
        %4003 = vmatpush1.msra.mxu0 0.0
        %4004 = vmatprep.subr.mxu0 0.0
        %4005 = vmatpush1.msra.mxu0 %v375
        %4006 = vmatprep.subr.mxu0 0.0
        %4007 = vmatpush1.msra.mxu0 %v374
        %4008 = vmatprep.subr.mxu0 0.0
        %4009 = vmatpush2.msra.mxu0 0.0
        %4010 = vmatprep.subr.mxu0 0.0
        %4011 = vmatpush2.msra.mxu0 0.0
        %4012 = vmatprep.subr.mxu0 0.0
        %4013 = vmatpush2.msra.mxu0 0.0
        %4014 = vmatprep.subr.mxu0 0.0
        %4015 = vmatpush2.msra.mxu0 0.0
        %4016 = vmatprep.subr.mxu0 0.0
        %4017 = vmatpush2.msra.mxu0 0.0
        %4018 = vmatprep.subr.mxu0 0.0
        %4019 = vmatpush2.msra.mxu0 0.0
        %4020 = vmatprep.subr.mxu0 0.0
        %4021 = vmatpush2.msra.mxu0 0.0
        %4022 = vmatprep.subr.mxu0 0.0
        %4023 = vmatpush2.msra.mxu0 0.0
        %4024 = vmatprep.subr.mxu0 0.0
        %4025 = vmatpush2.msra.mxu0 0.0
        %4026 = vmatprep.subr.mxu0 0.0
        %4027 = vmatpush2.msra.mxu0 0.0
        %4028 = vmatprep.subr.mxu0 0.0
        %4029 = vmatpush2.msra.mxu0 0.0
        %4030 = vmatprep.subr.mxu0 0.0
        %4031 = vmatpush2.msra.mxu0 0.0
        %4032 = vmatprep.subr.mxu0 0.0
        %4033 = vmatpush2.msra.mxu0 0.0
        %4034 = vmatprep.subr.mxu0 0.0
        %4035 = vmatpush2.msra.mxu0 0.0
        %4036 = vmatprep.subr.mxu0 0.0
        %4037 = vmatpush2.msra.mxu0 0.0
        %4038 = vmatprep.subr.mxu0 0.0
        %4039 = vmatpush2.msra.mxu0 0.0
        %4040 = vmatprep.mubr.f32.mxu0 0.0
        %4041 = vmatmul.mubr.f32.gmra.mxu0 %v3896
        %v4042 = vpop.f32.mrf.mxu0
        %v4043 = vadd.f32 0.0, %v4042
        %v4044 = vpop.f32.mrf.mxu0
        %4045 = vmatprep.mubr.f32.mxu0 0.0
        %4046 = vmatmul.mubr.f32.gmra.mxu0 %v3899
        %v4047 = vpop.f32.mrf.mxu0
        %v4048 = vadd.f32 0.0, %v4047
        %v4049 = vpop.f32.mrf.mxu0
        %4050 = vdwg.mxu0
        %4051 = vmatprep.subr.mxu0 0.0
        %4052 = vmatpush1.msra.mxu0 0.0
        %4053 = vmatprep.subr.mxu0 0.0
        %4054 = vmatpush1.msra.mxu0 0.0
        %4055 = vmatprep.subr.mxu0 0.0
        %4056 = vmatpush1.msra.mxu0 0.0
        %4057 = vmatprep.subr.mxu0 0.0
        %4058 = vmatpush1.msra.mxu0 0.0
        %4059 = vmatprep.subr.mxu0 0.0
        %4060 = vmatpush1.msra.mxu0 0.0
        %4061 = vmatprep.subr.mxu0 0.0
        %4062 = vmatpush1.msra.mxu0 0.0
        %4063 = vmatprep.subr.mxu0 0.0
        %4064 = vmatpush1.msra.mxu0 0.0
        %4065 = vmatprep.subr.mxu0 0.0
        %4066 = vmatpush1.msra.mxu0 0.0
        %4067 = vmatprep.subr.mxu0 0.0
        %4068 = vmatpush1.msra.mxu0 0.0
        %4069 = vmatprep.subr.mxu0 0.0
        %4070 = vmatpush1.msra.mxu0 0.0
        %4071 = vmatprep.subr.mxu0 0.0
        %4072 = vmatpush1.msra.mxu0 0.0
        %4073 = vmatprep.subr.mxu0 0.0
        %4074 = vmatpush1.msra.mxu0 0.0
        %4075 = vmatprep.subr.mxu0 0.0
        %4076 = vmatpush1.msra.mxu0 0.0
        %4077 = vmatprep.subr.mxu0 0.0
        %4078 = vmatpush1.msra.mxu0 0.0
        %4079 = vmatprep.subr.mxu0 0.0
        %4080 = vmatpush1.msra.mxu0 %v3817
        %4081 = vmatprep.subr.mxu0 0.0
        %4082 = vmatpush1.msra.mxu0 %v3812
        %4083 = vmatprep.subr.mxu0 0.0
        %4084 = vmatpush2.msra.mxu0 0.0
        %4085 = vmatprep.subr.mxu0 0.0
        %4086 = vmatpush2.msra.mxu0 0.0
        %4087 = vmatprep.subr.mxu0 0.0
        %4088 = vmatpush2.msra.mxu0 0.0
        %4089 = vmatprep.subr.mxu0 0.0
        %4090 = vmatpush2.msra.mxu0 0.0
        %4091 = vmatprep.subr.mxu0 0.0
        %4092 = vmatpush2.msra.mxu0 0.0
        %4093 = vmatprep.subr.mxu0 0.0
        %4094 = vmatpush2.msra.mxu0 0.0
        %4095 = vmatprep.subr.mxu0 0.0
        %4096 = vmatpush2.msra.mxu0 0.0
        %4097 = vmatprep.subr.mxu0 0.0
        %4098 = vmatpush2.msra.mxu0 0.0
        %4099 = vmatprep.subr.mxu0 0.0
        %4100 = vmatpush2.msra.mxu0 0.0
        %4101 = vmatprep.subr.mxu0 0.0
        %4102 = vmatpush2.msra.mxu0 0.0
        %4103 = vmatprep.subr.mxu0 0.0
        %4104 = vmatpush2.msra.mxu0 0.0
        %4105 = vmatprep.subr.mxu0 0.0
        %4106 = vmatpush2.msra.mxu0 0.0
        %4107 = vmatprep.subr.mxu0 0.0
        %4108 = vmatpush2.msra.mxu0 0.0
        %4109 = vmatprep.subr.mxu0 0.0
        %4110 = vmatpush2.msra.mxu0 0.0
        %4111 = vmatprep.subr.mxu0 0.0
        %4112 = vmatpush2.msra.mxu0 0.0
        %4113 = vmatprep.subr.mxu0 0.0
        %4114 = vmatpush2.msra.mxu0 0.0
        %4115 = vmatprep.mubr.f32.mxu0 0.0
        %4116 = vmatmul.mubr.f32.gmra.mxu0 %v698
        %v4117 = vpop.f32.mrf.mxu0
        %v4118 = vadd.f32 0.0, %v4117
        %v4119 = vpop.f32.mrf.mxu0
        %4120 = vmatprep.mubr.f32.mxu0 0.0
        %4121 = vmatmul.mubr.f32.gmra.mxu0 %v701
        %v4122 = vpop.f32.mrf.mxu0
        %v4123 = vadd.f32 0.0, %v4122
        %v4124 = vpop.f32.mrf.mxu0
        %4125 = vdwg.mxu0
        %4126 = vmatprep.subr.mxu0 0.0
        %4127 = vmatpush1.msra.mxu0 0.0
        %4128 = vmatprep.subr.mxu0 0.0
        %4129 = vmatpush1.msra.mxu0 0.0
        %4130 = vmatprep.subr.mxu0 0.0
        %4131 = vmatpush1.msra.mxu0 0.0
        %4132 = vmatprep.subr.mxu0 0.0
        %4133 = vmatpush1.msra.mxu0 0.0
        %4134 = vmatprep.subr.mxu0 0.0
        %4135 = vmatpush1.msra.mxu0 0.0
        %4136 = vmatprep.subr.mxu0 0.0
        %4137 = vmatpush1.msra.mxu0 0.0
        %4138 = vmatprep.subr.mxu0 0.0
        %4139 = vmatpush1.msra.mxu0 0.0
        %4140 = vmatprep.subr.mxu0 0.0
        %4141 = vmatpush1.msra.mxu0 0.0
        %4142 = vmatprep.subr.mxu0 0.0
        %4143 = vmatpush1.msra.mxu0 0.0
        %4144 = vmatprep.subr.mxu0 0.0
        %4145 = vmatpush1.msra.mxu0 0.0
        %4146 = vmatprep.subr.mxu0 0.0
        %4147 = vmatpush1.msra.mxu0 0.0
        %4148 = vmatprep.subr.mxu0 0.0
        %4149 = vmatpush1.msra.mxu0 0.0
        %4150 = vmatprep.subr.mxu0 0.0
        %4151 = vmatpush1.msra.mxu0 0.0
        %4152 = vmatprep.subr.mxu0 0.0
        %4153 = vmatpush1.msra.mxu0 0.0
        %4154 = vmatprep.subr.mxu0 0.0
        %4155 = vmatpush1.msra.mxu0 %v3892
        %4156 = vmatprep.subr.mxu0 0.0
        %4157 = vmatpush1.msra.mxu0 %v3887
        %4158 = vmatprep.subr.mxu0 0.0
        %4159 = vmatpush2.msra.mxu0 0.0
        %4160 = vmatprep.subr.mxu0 0.0
        %4161 = vmatpush2.msra.mxu0 0.0
        %4162 = vmatprep.subr.mxu0 0.0
        %4163 = vmatpush2.msra.mxu0 0.0
        %4164 = vmatprep.subr.mxu0 0.0
        %4165 = vmatpush2.msra.mxu0 0.0
        %4166 = vmatprep.subr.mxu0 0.0
        %4167 = vmatpush2.msra.mxu0 0.0
        %4168 = vmatprep.subr.mxu0 0.0
        %4169 = vmatpush2.msra.mxu0 0.0
        %4170 = vmatprep.subr.mxu0 0.0
        %4171 = vmatpush2.msra.mxu0 0.0
        %4172 = vmatprep.subr.mxu0 0.0
        %4173 = vmatpush2.msra.mxu0 0.0
        %4174 = vmatprep.subr.mxu0 0.0
        %4175 = vmatpush2.msra.mxu0 0.0
        %4176 = vmatprep.subr.mxu0 0.0
        %4177 = vmatpush2.msra.mxu0 0.0
        %4178 = vmatprep.subr.mxu0 0.0
        %4179 = vmatpush2.msra.mxu0 0.0
        %4180 = vmatprep.subr.mxu0 0.0
        %4181 = vmatpush2.msra.mxu0 0.0
        %4182 = vmatprep.subr.mxu0 0.0
        %4183 = vmatpush2.msra.mxu0 0.0
        %4184 = vmatprep.subr.mxu0 0.0
        %4185 = vmatpush2.msra.mxu0 0.0
        %4186 = vmatprep.subr.mxu0 0.0
        %4187 = vmatpush2.msra.mxu0 0.0
        %4188 = vmatprep.subr.mxu0 0.0
        %4189 = vmatpush2.msra.mxu0 0.0
        %4190 = vmatprep.mubr.f32.mxu0 0.0
        %4191 = vmatmul.mubr.f32.gmra.mxu0 %v779
        %v4192 = vpop.f32.mrf.mxu0
        %v4193 = vadd.f32 0.0, %v4192
        %v4194 = vpop.f32.mrf.mxu0
        %4195 = vmatprep.mubr.f32.mxu0 0.0
        %4196 = vmatmul.mubr.f32.gmra.mxu0 %v782
        %v4197 = vpop.f32.mrf.mxu0
        %v4198 = vadd.f32 0.0, %v4197
        %v4199 = vpop.f32.mrf.mxu0
        %4200 = vdwg.mxu0
        %v4201 = vsub.f32 %v4118, %v4193
        %v4202 = vsub.f32 %v4123, %v4198
        %4203 = vmatprep.subr.mxu0 0.0
        %4204 = vmatpush1.msra.mxu0 0.0
        %4205 = vmatprep.subr.mxu0 0.0
        %4206 = vmatpush1.msra.mxu0 0.0
        %4207 = vmatprep.subr.mxu0 0.0
        %4208 = vmatpush1.msra.mxu0 0.0
        %4209 = vmatprep.subr.mxu0 0.0
        %4210 = vmatpush1.msra.mxu0 0.0
        %4211 = vmatprep.subr.mxu0 0.0
        %4212 = vmatpush1.msra.mxu0 0.0
        %4213 = vmatprep.subr.mxu0 0.0
        %4214 = vmatpush1.msra.mxu0 0.0
        %4215 = vmatprep.subr.mxu0 0.0
        %4216 = vmatpush1.msra.mxu0 0.0
        %4217 = vmatprep.subr.mxu0 0.0
        %4218 = vmatpush1.msra.mxu0 0.0
        %4219 = vmatprep.subr.mxu0 0.0
        %4220 = vmatpush1.msra.mxu0 0.0
        %4221 = vmatprep.subr.mxu0 0.0
        %4222 = vmatpush1.msra.mxu0 0.0
        %4223 = vmatprep.subr.mxu0 0.0
        %4224 = vmatpush1.msra.mxu0 0.0
        %4225 = vmatprep.subr.mxu0 0.0
        %4226 = vmatpush1.msra.mxu0 0.0
        %4227 = vmatprep.subr.mxu0 0.0
        %4228 = vmatpush1.msra.mxu0 0.0
        %4229 = vmatprep.subr.mxu0 0.0
        %4230 = vmatpush1.msra.mxu0 0.0
        %4231 = vmatprep.subr.mxu0 0.0
        %4232 = vmatpush1.msra.mxu0 %v3817
        %4233 = vmatprep.subr.mxu0 0.0
        %4234 = vmatpush1.msra.mxu0 %v3812
        %4235 = vmatprep.subr.mxu0 0.0
        %4236 = vmatpush2.msra.mxu0 0.0
        %4237 = vmatprep.subr.mxu0 0.0
        %4238 = vmatpush2.msra.mxu0 0.0
        %4239 = vmatprep.subr.mxu0 0.0
        %4240 = vmatpush2.msra.mxu0 0.0
        %4241 = vmatprep.subr.mxu0 0.0
        %4242 = vmatpush2.msra.mxu0 0.0
        %4243 = vmatprep.subr.mxu0 0.0
        %4244 = vmatpush2.msra.mxu0 0.0
        %4245 = vmatprep.subr.mxu0 0.0
        %4246 = vmatpush2.msra.mxu0 0.0
        %4247 = vmatprep.subr.mxu0 0.0
        %4248 = vmatpush2.msra.mxu0 0.0
        %4249 = vmatprep.subr.mxu0 0.0
        %4250 = vmatpush2.msra.mxu0 0.0
        %4251 = vmatprep.subr.mxu0 0.0
        %4252 = vmatpush2.msra.mxu0 0.0
        %4253 = vmatprep.subr.mxu0 0.0
        %4254 = vmatpush2.msra.mxu0 0.0
        %4255 = vmatprep.subr.mxu0 0.0
        %4256 = vmatpush2.msra.mxu0 0.0
        %4257 = vmatprep.subr.mxu0 0.0
        %4258 = vmatpush2.msra.mxu0 0.0
        %4259 = vmatprep.subr.mxu0 0.0
        %4260 = vmatpush2.msra.mxu0 0.0
        %4261 = vmatprep.subr.mxu0 0.0
        %4262 = vmatpush2.msra.mxu0 0.0
        %4263 = vmatprep.subr.mxu0 0.0
        %4264 = vmatpush2.msra.mxu0 0.0
        %4265 = vmatprep.subr.mxu0 0.0
        %4266 = vmatpush2.msra.mxu0 0.0
        %4267 = vmatprep.mubr.f32.mxu0 0.0
        %4268 = vmatmul.mubr.f32.gmra.mxu0 %v779
        %v4269 = vpop.f32.mrf.mxu0
        %v4270 = vadd.f32 0.0, %v4269
        %v4271 = vpop.f32.mrf.mxu0
        %4272 = vmatprep.mubr.f32.mxu0 0.0
        %4273 = vmatmul.mubr.f32.gmra.mxu0 %v782
        %v4274 = vpop.f32.mrf.mxu0
        %v4275 = vadd.f32 0.0, %v4274
        %v4276 = vpop.f32.mrf.mxu0
        %4277 = vdwg.mxu0
        %4278 = vmatprep.subr.mxu0 0.0
        %4279 = vmatpush1.msra.mxu0 0.0
        %4280 = vmatprep.subr.mxu0 0.0
        %4281 = vmatpush1.msra.mxu0 0.0
        %4282 = vmatprep.subr.mxu0 0.0
        %4283 = vmatpush1.msra.mxu0 0.0
        %4284 = vmatprep.subr.mxu0 0.0
        %4285 = vmatpush1.msra.mxu0 0.0
        %4286 = vmatprep.subr.mxu0 0.0
        %4287 = vmatpush1.msra.mxu0 0.0
        %4288 = vmatprep.subr.mxu0 0.0
        %4289 = vmatpush1.msra.mxu0 0.0
        %4290 = vmatprep.subr.mxu0 0.0
        %4291 = vmatpush1.msra.mxu0 0.0
        %4292 = vmatprep.subr.mxu0 0.0
        %4293 = vmatpush1.msra.mxu0 0.0
        %4294 = vmatprep.subr.mxu0 0.0
        %4295 = vmatpush1.msra.mxu0 0.0
        %4296 = vmatprep.subr.mxu0 0.0
        %4297 = vmatpush1.msra.mxu0 0.0
        %4298 = vmatprep.subr.mxu0 0.0
        %4299 = vmatpush1.msra.mxu0 0.0
        %4300 = vmatprep.subr.mxu0 0.0
        %4301 = vmatpush1.msra.mxu0 0.0
        %4302 = vmatprep.subr.mxu0 0.0
        %4303 = vmatpush1.msra.mxu0 0.0
        %4304 = vmatprep.subr.mxu0 0.0
        %4305 = vmatpush1.msra.mxu0 0.0
        %4306 = vmatprep.subr.mxu0 0.0
        %4307 = vmatpush1.msra.mxu0 %v3892
        %4308 = vmatprep.subr.mxu0 0.0
        %4309 = vmatpush1.msra.mxu0 %v3887
        %4310 = vmatprep.subr.mxu0 0.0
        %4311 = vmatpush2.msra.mxu0 0.0
        %4312 = vmatprep.subr.mxu0 0.0
        %4313 = vmatpush2.msra.mxu0 0.0
        %4314 = vmatprep.subr.mxu0 0.0
        %4315 = vmatpush2.msra.mxu0 0.0
        %4316 = vmatprep.subr.mxu0 0.0
        %4317 = vmatpush2.msra.mxu0 0.0
        %4318 = vmatprep.subr.mxu0 0.0
        %4319 = vmatpush2.msra.mxu0 0.0
        %4320 = vmatprep.subr.mxu0 0.0
        %4321 = vmatpush2.msra.mxu0 0.0
        %4322 = vmatprep.subr.mxu0 0.0
        %4323 = vmatpush2.msra.mxu0 0.0
        %4324 = vmatprep.subr.mxu0 0.0
        %4325 = vmatpush2.msra.mxu0 0.0
        %4326 = vmatprep.subr.mxu0 0.0
        %4327 = vmatpush2.msra.mxu0 0.0
        %4328 = vmatprep.subr.mxu0 0.0
        %4329 = vmatpush2.msra.mxu0 0.0
        %4330 = vmatprep.subr.mxu0 0.0
        %4331 = vmatpush2.msra.mxu0 0.0
        %4332 = vmatprep.subr.mxu0 0.0
        %4333 = vmatpush2.msra.mxu0 0.0
        %4334 = vmatprep.subr.mxu0 0.0
        %4335 = vmatpush2.msra.mxu0 0.0
        %4336 = vmatprep.subr.mxu0 0.0
        %4337 = vmatpush2.msra.mxu0 0.0
        %4338 = vmatprep.subr.mxu0 0.0
        %4339 = vmatpush2.msra.mxu0 0.0
        %4340 = vmatprep.subr.mxu0 0.0
        %4341 = vmatpush2.msra.mxu0 0.0
        %4342 = vmatprep.mubr.f32.mxu0 0.0
        %4343 = vmatmul.mubr.f32.gmra.mxu0 %v698
        %v4344 = vpop.f32.mrf.mxu0
        %v4345 = vadd.f32 %v4270, %v4344
        %v4346 = vpop.f32.mrf.mxu0
        %4347 = vmatprep.mubr.f32.mxu0 0.0
        %4348 = vmatmul.mubr.f32.gmra.mxu0 %v701
        %v4349 = vpop.f32.mrf.mxu0
        %v4350 = vadd.f32 %v4275, %v4349
        %v4351 = vpop.f32.mrf.mxu0
        %4352 = vdwg.mxu0
        %4353 = vmatprep.subr.mxu0 0.0
        %4354 = vmatpush1.msra.mxu0 0.0
        %4355 = vmatprep.subr.mxu0 0.0
        %4356 = vmatpush1.msra.mxu0 0.0
        %4357 = vmatprep.subr.mxu0 0.0
        %4358 = vmatpush1.msra.mxu0 0.0
        %4359 = vmatprep.subr.mxu0 0.0
        %4360 = vmatpush1.msra.mxu0 0.0
        %4361 = vmatprep.subr.mxu0 0.0
        %4362 = vmatpush1.msra.mxu0 0.0
        %4363 = vmatprep.subr.mxu0 0.0
        %4364 = vmatpush1.msra.mxu0 0.0
        %4365 = vmatprep.subr.mxu0 0.0
        %4366 = vmatpush1.msra.mxu0 0.0
        %4367 = vmatprep.subr.mxu0 0.0
        %4368 = vmatpush1.msra.mxu0 0.0
        %4369 = vmatprep.subr.mxu0 0.0
        %4370 = vmatpush1.msra.mxu0 0.0
        %4371 = vmatprep.subr.mxu0 0.0
        %4372 = vmatpush1.msra.mxu0 0.0
        %4373 = vmatprep.subr.mxu0 0.0
        %4374 = vmatpush1.msra.mxu0 0.0
        %4375 = vmatprep.subr.mxu0 0.0
        %4376 = vmatpush1.msra.mxu0 0.0
        %4377 = vmatprep.subr.mxu0 0.0
        %4378 = vmatpush1.msra.mxu0 0.0
        %4379 = vmatprep.subr.mxu0 0.0
        %4380 = vmatpush1.msra.mxu0 0.0
        %4381 = vmatprep.subr.mxu0 0.0
        %4382 = vmatpush1.msra.mxu0 %v3973
        %4383 = vmatprep.subr.mxu0 0.0
        %4384 = vmatpush1.msra.mxu0 %v3968
        %4385 = vmatprep.subr.mxu0 0.0
        %4386 = vmatpush2.msra.mxu0 0.0
        %4387 = vmatprep.subr.mxu0 0.0
        %4388 = vmatpush2.msra.mxu0 0.0
        %4389 = vmatprep.subr.mxu0 0.0
        %4390 = vmatpush2.msra.mxu0 0.0
        %4391 = vmatprep.subr.mxu0 0.0
        %4392 = vmatpush2.msra.mxu0 0.0
        %4393 = vmatprep.subr.mxu0 0.0
        %4394 = vmatpush2.msra.mxu0 0.0
        %4395 = vmatprep.subr.mxu0 0.0
        %4396 = vmatpush2.msra.mxu0 0.0
        %4397 = vmatprep.subr.mxu0 0.0
        %4398 = vmatpush2.msra.mxu0 0.0
        %4399 = vmatprep.subr.mxu0 0.0
        %4400 = vmatpush2.msra.mxu0 0.0
        %4401 = vmatprep.subr.mxu0 0.0
        %4402 = vmatpush2.msra.mxu0 0.0
        %4403 = vmatprep.subr.mxu0 0.0
        %4404 = vmatpush2.msra.mxu0 0.0
        %4405 = vmatprep.subr.mxu0 0.0
        %4406 = vmatpush2.msra.mxu0 0.0
        %4407 = vmatprep.subr.mxu0 0.0
        %4408 = vmatpush2.msra.mxu0 0.0
        %4409 = vmatprep.subr.mxu0 0.0
        %4410 = vmatpush2.msra.mxu0 0.0
        %4411 = vmatprep.subr.mxu0 0.0
        %4412 = vmatpush2.msra.mxu0 0.0
        %4413 = vmatprep.subr.mxu0 0.0
        %4414 = vmatpush2.msra.mxu0 0.0
        %4415 = vmatprep.subr.mxu0 0.0
        %4416 = vmatpush2.msra.mxu0 0.0
        %4417 = vmatprep.mubr.f32.mxu0 0.0
        %4418 = vmatmul.mubr.f32.gmra.mxu0 %v698
        %v4419 = vpop.f32.mrf.mxu0
        %v4420 = vadd.f32 0.0, %v4419
        %v4421 = vpop.f32.mrf.mxu0
        %4422 = vmatprep.mubr.f32.mxu0 0.0
        %4423 = vmatmul.mubr.f32.gmra.mxu0 %v701
        %v4424 = vpop.f32.mrf.mxu0
        %v4425 = vadd.f32 0.0, %v4424
        %v4426 = vpop.f32.mrf.mxu0
        %4427 = vdwg.mxu0
        %4428 = vmatprep.subr.mxu0 0.0
        %4429 = vmatpush1.msra.mxu0 0.0
        %4430 = vmatprep.subr.mxu0 0.0
        %4431 = vmatpush1.msra.mxu0 0.0
        %4432 = vmatprep.subr.mxu0 0.0
        %4433 = vmatpush1.msra.mxu0 0.0
        %4434 = vmatprep.subr.mxu0 0.0
        %4435 = vmatpush1.msra.mxu0 0.0
        %4436 = vmatprep.subr.mxu0 0.0
        %4437 = vmatpush1.msra.mxu0 0.0
        %4438 = vmatprep.subr.mxu0 0.0
        %4439 = vmatpush1.msra.mxu0 0.0
        %4440 = vmatprep.subr.mxu0 0.0
        %4441 = vmatpush1.msra.mxu0 0.0
        %4442 = vmatprep.subr.mxu0 0.0
        %4443 = vmatpush1.msra.mxu0 0.0
        %4444 = vmatprep.subr.mxu0 0.0
        %4445 = vmatpush1.msra.mxu0 0.0
        %4446 = vmatprep.subr.mxu0 0.0
        %4447 = vmatpush1.msra.mxu0 0.0
        %4448 = vmatprep.subr.mxu0 0.0
        %4449 = vmatpush1.msra.mxu0 0.0
        %4450 = vmatprep.subr.mxu0 0.0
        %4451 = vmatpush1.msra.mxu0 0.0
        %4452 = vmatprep.subr.mxu0 0.0
        %4453 = vmatpush1.msra.mxu0 0.0
        %4454 = vmatprep.subr.mxu0 0.0
        %4455 = vmatpush1.msra.mxu0 0.0
        %4456 = vmatprep.subr.mxu0 0.0
        %4457 = vmatpush1.msra.mxu0 %v4048
        %4458 = vmatprep.subr.mxu0 0.0
        %4459 = vmatpush1.msra.mxu0 %v4043
        %4460 = vmatprep.subr.mxu0 0.0
        %4461 = vmatpush2.msra.mxu0 0.0
        %4462 = vmatprep.subr.mxu0 0.0
        %4463 = vmatpush2.msra.mxu0 0.0
        %4464 = vmatprep.subr.mxu0 0.0
        %4465 = vmatpush2.msra.mxu0 0.0
        %4466 = vmatprep.subr.mxu0 0.0
        %4467 = vmatpush2.msra.mxu0 0.0
        %4468 = vmatprep.subr.mxu0 0.0
        %4469 = vmatpush2.msra.mxu0 0.0
        %4470 = vmatprep.subr.mxu0 0.0
        %4471 = vmatpush2.msra.mxu0 0.0
        %4472 = vmatprep.subr.mxu0 0.0
        %4473 = vmatpush2.msra.mxu0 0.0
        %4474 = vmatprep.subr.mxu0 0.0
        %4475 = vmatpush2.msra.mxu0 0.0
        %4476 = vmatprep.subr.mxu0 0.0
        %4477 = vmatpush2.msra.mxu0 0.0
        %4478 = vmatprep.subr.mxu0 0.0
        %4479 = vmatpush2.msra.mxu0 0.0
        %4480 = vmatprep.subr.mxu0 0.0
        %4481 = vmatpush2.msra.mxu0 0.0
        %4482 = vmatprep.subr.mxu0 0.0
        %4483 = vmatpush2.msra.mxu0 0.0
        %4484 = vmatprep.subr.mxu0 0.0
        %4485 = vmatpush2.msra.mxu0 0.0
        %4486 = vmatprep.subr.mxu0 0.0
        %4487 = vmatpush2.msra.mxu0 0.0
        %4488 = vmatprep.subr.mxu0 0.0
        %4489 = vmatpush2.msra.mxu0 0.0
        %4490 = vmatprep.subr.mxu0 0.0
        %4491 = vmatpush2.msra.mxu0 0.0
        %4492 = vmatprep.mubr.f32.mxu0 0.0
        %4493 = vmatmul.mubr.f32.gmra.mxu0 %v779
        %v4494 = vpop.f32.mrf.mxu0
        %v4495 = vadd.f32 0.0, %v4494
        %v4496 = vpop.f32.mrf.mxu0
        %4497 = vmatprep.mubr.f32.mxu0 0.0
        %4498 = vmatmul.mubr.f32.gmra.mxu0 %v782
        %v4499 = vpop.f32.mrf.mxu0
        %v4500 = vadd.f32 0.0, %v4499
        %v4501 = vpop.f32.mrf.mxu0
        %4502 = vdwg.mxu0
        %v4503 = vsub.f32 %v4420, %v4495
        %v4504 = vsub.f32 %v4425, %v4500
        %4505 = vmatprep.subr.mxu0 0.0
        %4506 = vmatpush1.msra.mxu0 0.0
        %4507 = vmatprep.subr.mxu0 0.0
        %4508 = vmatpush1.msra.mxu0 0.0
        %4509 = vmatprep.subr.mxu0 0.0
        %4510 = vmatpush1.msra.mxu0 0.0
        %4511 = vmatprep.subr.mxu0 0.0
        %4512 = vmatpush1.msra.mxu0 0.0
        %4513 = vmatprep.subr.mxu0 0.0
        %4514 = vmatpush1.msra.mxu0 0.0
        %4515 = vmatprep.subr.mxu0 0.0
        %4516 = vmatpush1.msra.mxu0 0.0
        %4517 = vmatprep.subr.mxu0 0.0
        %4518 = vmatpush1.msra.mxu0 0.0
        %4519 = vmatprep.subr.mxu0 0.0
        %4520 = vmatpush1.msra.mxu0 0.0
        %4521 = vmatprep.subr.mxu0 0.0
        %4522 = vmatpush1.msra.mxu0 0.0
        %4523 = vmatprep.subr.mxu0 0.0
        %4524 = vmatpush1.msra.mxu0 0.0
        %4525 = vmatprep.subr.mxu0 0.0
        %4526 = vmatpush1.msra.mxu0 0.0
        %4527 = vmatprep.subr.mxu0 0.0
        %4528 = vmatpush1.msra.mxu0 0.0
        %4529 = vmatprep.subr.mxu0 0.0
        %4530 = vmatpush1.msra.mxu0 0.0
        %4531 = vmatprep.subr.mxu0 0.0
        %4532 = vmatpush1.msra.mxu0 0.0
        %4533 = vmatprep.subr.mxu0 0.0
        %4534 = vmatpush1.msra.mxu0 %v3973
        %4535 = vmatprep.subr.mxu0 0.0
        %4536 = vmatpush1.msra.mxu0 %v3968
        %4537 = vmatprep.subr.mxu0 0.0
        %4538 = vmatpush2.msra.mxu0 0.0
        %4539 = vmatprep.subr.mxu0 0.0
        %4540 = vmatpush2.msra.mxu0 0.0
        %4541 = vmatprep.subr.mxu0 0.0
        %4542 = vmatpush2.msra.mxu0 0.0
        %4543 = vmatprep.subr.mxu0 0.0
        %4544 = vmatpush2.msra.mxu0 0.0
        %4545 = vmatprep.subr.mxu0 0.0
        %4546 = vmatpush2.msra.mxu0 0.0
        %4547 = vmatprep.subr.mxu0 0.0
        %4548 = vmatpush2.msra.mxu0 0.0
        %4549 = vmatprep.subr.mxu0 0.0
        %4550 = vmatpush2.msra.mxu0 0.0
        %4551 = vmatprep.subr.mxu0 0.0
        %4552 = vmatpush2.msra.mxu0 0.0
        %4553 = vmatprep.subr.mxu0 0.0
        %4554 = vmatpush2.msra.mxu0 0.0
        %4555 = vmatprep.subr.mxu0 0.0
        %4556 = vmatpush2.msra.mxu0 0.0
        %4557 = vmatprep.subr.mxu0 0.0
        %4558 = vmatpush2.msra.mxu0 0.0
        %4559 = vmatprep.subr.mxu0 0.0
        %4560 = vmatpush2.msra.mxu0 0.0
        %4561 = vmatprep.subr.mxu0 0.0
        %4562 = vmatpush2.msra.mxu0 0.0
        %4563 = vmatprep.subr.mxu0 0.0
        %4564 = vmatpush2.msra.mxu0 0.0
        %4565 = vmatprep.subr.mxu0 0.0
        %4566 = vmatpush2.msra.mxu0 0.0
        %4567 = vmatprep.subr.mxu0 0.0
        %4568 = vmatpush2.msra.mxu0 0.0
        %4569 = vmatprep.mubr.f32.mxu0 0.0
        %4570 = vmatmul.mubr.f32.gmra.mxu0 %v779
        %v4571 = vpop.f32.mrf.mxu0
        %v4572 = vadd.f32 0.0, %v4571
        %v4573 = vpop.f32.mrf.mxu0
        %4574 = vmatprep.mubr.f32.mxu0 0.0
        %4575 = vmatmul.mubr.f32.gmra.mxu0 %v782
        %v4576 = vpop.f32.mrf.mxu0
        %v4577 = vadd.f32 0.0, %v4576
        %v4578 = vpop.f32.mrf.mxu0
        %4579 = vdwg.mxu0
        %4580 = vmatprep.subr.mxu0 0.0
        %4581 = vmatpush1.msra.mxu0 0.0
        %4582 = vmatprep.subr.mxu0 0.0
        %4583 = vmatpush1.msra.mxu0 0.0
        %4584 = vmatprep.subr.mxu0 0.0
        %4585 = vmatpush1.msra.mxu0 0.0
        %4586 = vmatprep.subr.mxu0 0.0
        %4587 = vmatpush1.msra.mxu0 0.0
        %4588 = vmatprep.subr.mxu0 0.0
        %4589 = vmatpush1.msra.mxu0 0.0
        %4590 = vmatprep.subr.mxu0 0.0
        %4591 = vmatpush1.msra.mxu0 0.0
        %4592 = vmatprep.subr.mxu0 0.0
        %4593 = vmatpush1.msra.mxu0 0.0
        %4594 = vmatprep.subr.mxu0 0.0
        %4595 = vmatpush1.msra.mxu0 0.0
        %4596 = vmatprep.subr.mxu0 0.0
        %4597 = vmatpush1.msra.mxu0 0.0
        %4598 = vmatprep.subr.mxu0 0.0
        %4599 = vmatpush1.msra.mxu0 0.0
        %4600 = vmatprep.subr.mxu0 0.0
        %4601 = vmatpush1.msra.mxu0 0.0
        %4602 = vmatprep.subr.mxu0 0.0
        %4603 = vmatpush1.msra.mxu0 0.0
        %4604 = vmatprep.subr.mxu0 0.0
        %4605 = vmatpush1.msra.mxu0 0.0
        %4606 = vmatprep.subr.mxu0 0.0
        %4607 = vmatpush1.msra.mxu0 0.0
        %4608 = vmatprep.subr.mxu0 0.0
        %4609 = vmatpush1.msra.mxu0 %v4048
        %4610 = vmatprep.subr.mxu0 0.0
        %4611 = vmatpush1.msra.mxu0 %v4043
        %4612 = vmatprep.subr.mxu0 0.0
        %4613 = vmatpush2.msra.mxu0 0.0
        %4614 = vmatprep.subr.mxu0 0.0
        %4615 = vmatpush2.msra.mxu0 0.0
        %4616 = vmatprep.subr.mxu0 0.0
        %4617 = vmatpush2.msra.mxu0 0.0
        %4618 = vmatprep.subr.mxu0 0.0
        %4619 = vmatpush2.msra.mxu0 0.0
        %4620 = vmatprep.subr.mxu0 0.0
        %4621 = vmatpush2.msra.mxu0 0.0
        %4622 = vmatprep.subr.mxu0 0.0
        %4623 = vmatpush2.msra.mxu0 0.0
        %4624 = vmatprep.subr.mxu0 0.0
        %4625 = vmatpush2.msra.mxu0 0.0
        %4626 = vmatprep.subr.mxu0 0.0
        %4627 = vmatpush2.msra.mxu0 0.0
        %4628 = vmatprep.subr.mxu0 0.0
        %4629 = vmatpush2.msra.mxu0 0.0
        %4630 = vmatprep.subr.mxu0 0.0
        %4631 = vmatpush2.msra.mxu0 0.0
        %4632 = vmatprep.subr.mxu0 0.0
        %4633 = vmatpush2.msra.mxu0 0.0
        %4634 = vmatprep.subr.mxu0 0.0
        %4635 = vmatpush2.msra.mxu0 0.0
        %4636 = vmatprep.subr.mxu0 0.0
        %4637 = vmatpush2.msra.mxu0 0.0
        %4638 = vmatprep.subr.mxu0 0.0
        %4639 = vmatpush2.msra.mxu0 0.0
        %4640 = vmatprep.subr.mxu0 0.0
        %4641 = vmatpush2.msra.mxu0 0.0
        %4642 = vmatprep.subr.mxu0 0.0
        %4643 = vmatpush2.msra.mxu0 0.0
        %4644 = vmatprep.mubr.f32.mxu0 0.0
        %4645 = vmatmul.mubr.f32.gmra.mxu0 %v698
        %v4646 = vpop.f32.mrf.mxu0
        %v4647 = vadd.f32 %v4572, %v4646
        %v4648 = vpop.f32.mrf.mxu0
        %4649 = vmatprep.mubr.f32.mxu0 0.0
        %4650 = vmatmul.mubr.f32.gmra.mxu0 %v701
        %v4651 = vpop.f32.mrf.mxu0
        %v4652 = vadd.f32 %v4577, %v4651
        %v4653 = vpop.f32.mrf.mxu0
        %4654 = vdwg.mxu0
        %v4655 = vmul.f32 %v4201, %v4201
        %v4656 = vmul.f32 %v4202, %v4202
        %v4657 = vmul.f32 %v4345, %v4345
        %v4658 = vmul.f32 %v4350, %v4350
        %v4659 = vadd.f32 %v4655, %v4657
        %v4660 = vadd.f32 %v4656, %v4658
        %v4661 = vrsqrt.pop %v4659
        %v4662 = vmul.f32 %v4659, %v4661
        %vm4663 = vcmp.eq.f32.partialorder %v4659, inf
        %v4664 = vsel %vm4663, %v4659, %v4662
        %vm4665 = vcmp.eq.f32.partialorder %v4659, 0.0
        %v4666 = vand.u32 %v4659, 2147483648
        %v4667 = vsel %vm4665, %v4666, %v4664
        %v4668 = vrsqrt.pop %v4660
        %v4669 = vmul.f32 %v4660, %v4668
        %vm4670 = vcmp.eq.f32.partialorder %v4660, inf
        %v4671 = vsel %vm4670, %v4660, %v4669
        %vm4672 = vcmp.eq.f32.partialorder %v4660, 0.0
        %v4673 = vand.u32 %v4660, 2147483648
        %v4674 = vsel %vm4672, %v4673, %v4671
        %v4675 = vmul.f32 %v4503, %v4503
        %v4676 = vmul.f32 %v4504, %v4504
        %v4677 = vmul.f32 %v4647, %v4647
        %v4678 = vmul.f32 %v4652, %v4652
        %v4679 = vadd.f32 %v4675, %v4677
        %v4680 = vadd.f32 %v4676, %v4678
        %v4681 = vrsqrt.pop %v4679
        %v4682 = vmul.f32 %v4679, %v4681
        %vm4683 = vcmp.eq.f32.partialorder %v4679, inf
        %v4684 = vsel %vm4683, %v4679, %v4682
        %vm4685 = vcmp.eq.f32.partialorder %v4679, 0.0
        %v4686 = vand.u32 %v4679, 2147483648
        %v4687 = vsel %vm4685, %v4686, %v4684
        %v4688 = vrsqrt.pop %v4680
        %v4689 = vmul.f32 %v4680, %v4688
        %vm4690 = vcmp.eq.f32.partialorder %v4680, inf
        %v4691 = vsel %vm4690, %v4680, %v4689
        %vm4692 = vcmp.eq.f32.partialorder %v4680, 0.0
        %v4693 = vand.u32 %v4680, 2147483648
        %v4694 = vsel %vm4692, %v4693, %v4691
        %v4695 = vand.u32 2147483647, %v4345
        %v4696 = vand.u32 2147483647, %v4350
        %v4697 = vand.u32 2147483647, %v4201
        %v4698 = vand.u32 2147483647, %v4202
        %v4699 = vmin.f32 %v4697, %v4695
        %v4700 = vmin.f32 %v4698, %v4696
        %v4701 = vmax.f32 %v4697, %v4695
        %v4702 = vmax.f32 %v4698, %v4696
        %vm4703 = vcmp.gt.f32.partialorder %v4701, 0.0
        %vm4704 = vcmp.gt.f32.partialorder %v4702, 0.0
        %v4705 = vsel %vm4703, %v4701, 1.0
        %v4706 = vsel %vm4704, %v4702, 1.0
        %v4707 = vrcp.pop %v4705
        %v4708 = vmul.f32 %v4699, %v4707
        %v4709 = vrcp.pop %v4706
        %v4710 = vmul.f32 %v4700, %v4709
        %vm4711 = vcmp.gt.f32.partialorder %v4708, 0.41421357
        %vm4712 = vcmp.gt.f32.partialorder %v4710, 0.41421357
        %v4713 = vsub.f32 %v4708, 1.0
        %v4714 = vsub.f32 %v4710, 1.0
        %v4715 = vadd.f32 %v4708, 1.0
        %v4716 = vadd.f32 %v4710, 1.0
        %v4717 = vrcp.pop %v4715
        %v4718 = vmul.f32 %v4713, %v4717
        %v4719 = vrcp.pop %v4716
        %v4720 = vmul.f32 %v4714, %v4719
        %v4721 = vsel %vm4711, %v4718, %v4708
        %v4722 = vsel %vm4712, %v4720, %v4710
        %v4723 = vmul.f32 %v4721, %v4721
        %v4724 = vmul.f32 %v4722, %v4722
        %v4725 = vmul.f32 %v4723, 0.080537446
        %v4726 = vmul.f32 %v4724, 0.080537446
        %v4727 = vadd.f32 %v4725, -0.13877685
        %v4728 = vadd.f32 %v4726, -0.13877685
        %v4729 = vmul.f32 %v4727, %v4723
        %v4730 = vmul.f32 %v4728, %v4724
        %v4731 = vadd.f32 %v4729, 0.19977711
        %v4732 = vadd.f32 %v4730, 0.19977711
        %v4733 = vmul.f32 %v4731, %v4723
        %v4734 = vmul.f32 %v4732, %v4724
        %v4735 = vadd.f32 %v4733, -0.3333295
        %v4736 = vadd.f32 %v4734, -0.3333295
        %v4737 = vmul.f32 %v4735, %v4723
        %v4738 = vmul.f32 %v4736, %v4724
        %v4739 = vmul.f32 %v4737, %v4721
        %v4740 = vmul.f32 %v4738, %v4722
        %v4741 = vadd.f32 %v4739, %v4721
        %v4742 = vadd.f32 %v4740, %v4722
        %v4743 = vadd.f32 %v4741, 0.7853982
        %v4744 = vadd.f32 %v4742, 0.7853982
        %v4745 = vsel %vm4711, %v4743, %v4741
        %v4746 = vsel %vm4712, %v4744, %v4742
        %vm4747 = vcmp.gt.f32.partialorder %v4695, %v4697
        %vm4748 = vcmp.gt.f32.partialorder %v4696, %v4698
        %v4749 = vsub.f32 1.5707964, %v4745
        %v4750 = vsub.f32 1.5707964, %v4746
        %v4751 = vsel %vm4747, %v4749, %v4745
        %v4752 = vsel %vm4748, %v4750, %v4746
        %vm4753 = vcmp.lt.f32.partialorder %v4201, 0.0
        %vm4754 = vcmp.lt.f32.partialorder %v4202, 0.0
        %v4755 = vsub.f32 3.1415927, %v4751
        %v4756 = vsub.f32 3.1415927, %v4752
        %v4757 = vsel %vm4753, %v4755, %v4751
        %v4758 = vsel %vm4754, %v4756, %v4752
        %vm4759 = vcmp.lt.f32.partialorder %v4345, 0.0
        %vm4760 = vcmp.lt.f32.partialorder %v4350, 0.0
        %v4761 = vsub.f32 0.0, %v4757
        %v4762 = vsub.f32 0.0, %v4758
        %v4763 = vsel %vm4759, %v4761, %v4757
        %v4764 = vsel %vm4760, %v4762, %v4758
        %v4765 = vand.u32 2147483647, %v4647
        %v4766 = vand.u32 2147483647, %v4652
        %v4767 = vand.u32 2147483647, %v4503
        %v4768 = vand.u32 2147483647, %v4504
        %v4769 = vmin.f32 %v4767, %v4765
        %v4770 = vmin.f32 %v4768, %v4766
        %v4771 = vmax.f32 %v4767, %v4765
        %v4772 = vmax.f32 %v4768, %v4766
        %vm4773 = vcmp.gt.f32.partialorder %v4771, 0.0
        %vm4774 = vcmp.gt.f32.partialorder %v4772, 0.0
        %v4775 = vsel %vm4773, %v4771, 1.0
        %v4776 = vsel %vm4774, %v4772, 1.0
        %v4777 = vrcp.pop %v4775
        %v4778 = vmul.f32 %v4769, %v4777
        %v4779 = vrcp.pop %v4776
        %v4780 = vmul.f32 %v4770, %v4779
        %vm4781 = vcmp.gt.f32.partialorder %v4778, 0.41421357
        %vm4782 = vcmp.gt.f32.partialorder %v4780, 0.41421357
        %v4783 = vsub.f32 %v4778, 1.0
        %v4784 = vsub.f32 %v4780, 1.0
        %v4785 = vadd.f32 %v4778, 1.0
        %v4786 = vadd.f32 %v4780, 1.0
        %v4787 = vrcp.pop %v4785
        %v4788 = vmul.f32 %v4783, %v4787
        %v4789 = vrcp.pop %v4786
        %v4790 = vmul.f32 %v4784, %v4789
        %v4791 = vsel %vm4781, %v4788, %v4778
        %v4792 = vsel %vm4782, %v4790, %v4780
        %v4793 = vmul.f32 %v4791, %v4791
        %v4794 = vmul.f32 %v4792, %v4792
        %v4795 = vmul.f32 %v4793, 0.080537446
        %v4796 = vmul.f32 %v4794, 0.080537446
        %v4797 = vadd.f32 %v4795, -0.13877685
        %v4798 = vadd.f32 %v4796, -0.13877685
        %v4799 = vmul.f32 %v4797, %v4793
        %v4800 = vmul.f32 %v4798, %v4794
        %v4801 = vadd.f32 %v4799, 0.19977711
        %v4802 = vadd.f32 %v4800, 0.19977711
        %v4803 = vmul.f32 %v4801, %v4793
        %v4804 = vmul.f32 %v4802, %v4794
        %v4805 = vadd.f32 %v4803, -0.3333295
        %v4806 = vadd.f32 %v4804, -0.3333295
        %v4807 = vmul.f32 %v4805, %v4793
        %v4808 = vmul.f32 %v4806, %v4794
        %v4809 = vmul.f32 %v4807, %v4791
        %v4810 = vmul.f32 %v4808, %v4792
        %v4811 = vadd.f32 %v4809, %v4791
        %v4812 = vadd.f32 %v4810, %v4792
        %v4813 = vadd.f32 %v4811, 0.7853982
        %v4814 = vadd.f32 %v4812, 0.7853982
        %v4815 = vsel %vm4781, %v4813, %v4811
        %v4816 = vsel %vm4782, %v4814, %v4812
        %vm4817 = vcmp.gt.f32.partialorder %v4765, %v4767
        %vm4818 = vcmp.gt.f32.partialorder %v4766, %v4768
        %v4819 = vsub.f32 1.5707964, %v4815
        %v4820 = vsub.f32 1.5707964, %v4816
        %v4821 = vsel %vm4817, %v4819, %v4815
        %v4822 = vsel %vm4818, %v4820, %v4816
        %vm4823 = vcmp.lt.f32.partialorder %v4503, 0.0
        %vm4824 = vcmp.lt.f32.partialorder %v4504, 0.0
        %v4825 = vsub.f32 3.1415927, %v4821
        %v4826 = vsub.f32 3.1415927, %v4822
        %v4827 = vsel %vm4823, %v4825, %v4821
        %v4828 = vsel %vm4824, %v4826, %v4822
        %vm4829 = vcmp.lt.f32.partialorder %v4647, 0.0
        %vm4830 = vcmp.lt.f32.partialorder %v4652, 0.0
        %v4831 = vsub.f32 0.0, %v4827
        %v4832 = vsub.f32 0.0, %v4828
        %v4833 = vsel %vm4829, %v4831, %v4827
        %v4834 = vsel %vm4830, %v4832, %v4828
        %v4835 = vsub.f32 %v4667, %v4687
        %v4836 = vsub.f32 %v4674, %v4694
        %v4837 = vsub.f32 %v4763, %v4833
        %v4838 = vsub.f32 %v4764, %v4834
        %v4839 = vand.u32 2147483647, %v4835
        %v4840 = vand.u32 2147483647, %v4836
        %v4841 = vadd.f32 %v3731, %v4839
        %v4842 = vadd.f32 %v3732, %v4840
        %v4843 = vand.u32 2147483647, %v4837
        %v4844 = vand.u32 2147483647, %v4838
        %v4845 = vadd.f32 %v4841, %v4843
        %v4846 = vadd.f32 %v4842, %v4844
        %vm4847 = vcmask 72704
        %v4848 = vsel %vm4847, %v4845, 0.0
        %v4849 = vsel %vm4847, %v4846, 0.0
        %v4850 = vadd.f32 %v4848, %v4849
        %4851 = vadd.xlane.f32.xlu0 %v4850
        %v4852 = vpop.xlane.xlu0 %4851
        %v4853 = vrot.slane %v4852, 4
        %v4854 = vadd.f32 %v4852, %v4853
        %v4855 = vrot.slane %v4854, 2
        %v4856 = vadd.f32 %v4854, %v4855
        %v4857 = vrot.slane %v4856, 1
        %v4858 = vadd.f32 %v4856, %v4857
        %s4859 = vtos %v4858
        %v4860 = vstv %s4859
        %4861 = vst [vmem:[%s369] sm:$0xff] %v4860
        %s4862 = sand.u32 %s172, 1
        %s4863 = scalar_lea.sflag [#allocation4], %s4862
        %s4864 = sand.u32 %s172, 1
        %s4865 = smul.addr %s4864, 8
        %s4866 = scalar_lea.vmem [#allocation13], %s4865
        // Predicated region
        $region69: #{tpu_custom_call.1} parent=43 // pred_check
          %p4867 = pneg %p182
        $region70: #{tpu_custom_call.1} parent=43 // pred_check_branch
          %4869 = sbr.rel (%p4867) target = $region72
        $region71: #{tpu_custom_call.1} parent=43 // pred_region
          %s4871 = ssub.s32 128, 128
          %4872 = vsyncadd %s4863, %s4871
          %s4873 = smul.addr %s28, 128
          %s4874 = scalar_lea.hbm %s6, %s4873
          %s4876 = sshll.u32 %s4866, 4
          %s4877 = int_to_ptr.vmem [resolvable:$true] %s4876
          %4879 = dma.vmem_to_hbm [thread:$0]  %s4877, 128, %s4874, %s4863
        $region72: #{tpu_custom_call.1} parent=43 // pred_fallthru
          _
      $region44: #{tpu_custom_call.1} parent=5 // pred_fallthru
        _
      %p4880 = scmp.le.s32.totalorder 2, %s23
      // Predicated region
      $region73: #{tpu_custom_call.1} parent=5 // pred_check
        %p4881 = pneg %p4880
      $region74: #{tpu_custom_call.1} parent=5 // pred_check_branch
        %4883 = sbr.rel (%p4881) target = $region76
      $region75: #{tpu_custom_call.1} parent=5 // pred_region
        %s4884 = ssub.s32 %s23, 2
        // Predicated region
        $region77: #{tpu_custom_call.1} parent=75 // pred_check
          %p4885 = pneg %p188
        $region78: #{tpu_custom_call.1} parent=75 // pred_check_branch
          %4887 = sbr.rel (%p4885) target = $region80
        $region79: #{tpu_custom_call.1} parent=75 // pred_region
          %s4888 = sand.u32 %s173, 1
          %s4889 = scalar_lea.sflag [#allocation4], %s4888
          %s4890 = sand.u32 %s173, 1
          %s4891 = smul.addr %s4890, 8
          %s4892 = scalar_lea.vmem [#allocation13], %s4891
          %4893 = dma.done %s4889, 128
        $region80: #{tpu_custom_call.1} parent=75 // pred_fallthru
          _
      $region76: #{tpu_custom_call.1} parent=5 // pred_fallthru
        _
    $region6: #{tpu_custom_call.1} parent=1 // loop_footer
      %s27 = sadd.s32 1, %s23
    $region7: #{tpu_custom_call.1} parent=1 // loop_footer_branch
      %22 = sbr.rel target = $region3
    $region8: #{tpu_custom_call.1} parent=1 // loop_exit
      _
    %4894 = vsyncpa [#allocation3], 1
    %s4895 = scalar_lea.sflag [#allocation3], 1
    %4896 = vsyncpa %s4895, 1
    %4897 = vsyncpa [#allocation6], 1
    %s4898 = scalar_lea.sflag [#allocation6], 1
    %4899 = vsyncpa %s4898, 1
    %4900 = vsyncpa [#allocation9], 1
    %4901 = vsyncpa [#allocation12], 1
    %4902 = vsyncpa [#allocation4], 1
    %s4903 = scalar_lea.sflag [#allocation4], 1
    %4904 = vsyncpa %s4903, 1

</llo_original>
